<compile_context>
chip_gen: v7x
topology: tpu7x:2x2x1
jax: 0.10.0
libtpu: 0.0.40
codegen_flags: <defaults>
</compile_context>

<pallas_src>
import jax
import jax.numpy as jnp
from jax.experimental import pallas as pl
from jax.experimental.pallas import tpu as pltpu


# ----------------------------------------------------------------------------
# Kernel: one batch tile of TILE_B rows.
# ----------------------------------------------------------------------------
def detector_kernel(x_ref,                     # (2, TILE_B, H) bf16 (stacked word1/word2)
                    W1_ref, b1_ref,            # (H, H) bf16, (1, H) f32
                    W2_ref, b2_ref,            # (H, H) bf16, (1, H) f32
                    w3a_ref, w3b_ref,          # (1, H) f32 each (split rows of W3)
                    b3_ref,                    # (1,)   f32 in SMEM
                    out_ref):                  # (TILE_B, 1) f32
    # --- word1 path: fold its contribution into the output before touching
    # word2, so only one (TILE_B, H) f32 intermediate is live at a time. ---
    h1 = jnp.dot(x_ref[0], W1_ref[...], preferred_element_type=jnp.float32)
    h1 = jnp.maximum(h1 + b1_ref[...], 0.0)
    # N=1 "matmul" as VPU multiply + XLU cross-lane reduce (keeps the MXU free).
    o = jnp.sum(h1 * w3a_ref[...], axis=-1, keepdims=True)        # (TILE_B, 1)

    # --- word2 path ---
    h2 = jnp.dot(x_ref[1], W2_ref[...], preferred_element_type=jnp.float32)
    h2 = jnp.maximum(h2 + b2_ref[...], 0.0)
    o = o + jnp.sum(h2 * w3b_ref[...], axis=-1, keepdims=True)

    o = o + b3_ref[0]
    out_ref[...] = jnp.maximum(o, 0.0).astype(out_ref.dtype)


# ----------------------------------------------------------------------------
# Helpers.
# ----------------------------------------------------------------------------
def _round_up(x, m):
    return ((x + m - 1) // m) * m


def _pad2(x, rows, cols):
    return jnp.pad(x, ((0, rows - x.shape[0]), (0, cols - x.shape[1])))


def _auto_tile_b(batch):
    """>=4 grid steps when the batch allows, capped at 512, floored at 128."""
    tb = _round_up(batch, 128) // 4
    tb = max(128, min(512, tb))
    return _round_up(tb, 128)


def _vmem_limit_bytes():
    """Half of physical VMEM, capped at 64 MiB (v5e/v6e -> 64 MiB, v7x -> 32 MiB)."""
    cap = 128 * 1024 * 1024
    try:
        cap = int(getattr(pltpu.get_tpu_info(), "vmem_capacity_bytes", cap))
    except Exception:
        pass
    return max(32 * 1024 * 1024, min(64 * 1024 * 1024, cap // 2))


def _single_buffer_resident_kwargs():
    """Request a single VMEM buffer for never-refetched (constant index_map)
    operands; falls back to default buffering if the API is unavailable."""
    try:
        kw = {"pipeline_mode": pl.Buffered(1)}
        pl.BlockSpec((8, 128), lambda i: (0, 0), **kw)   # probe kwarg support
        return kw
    except Exception:
        return {}


def prepare_params(params, h_pad):
    """Pad to h_pad lanes, cast big weights to bf16, split W3 into row vectors.

    NOTE: expects weights already in [in_features, out_features] layout.
    Real PyTorch nn.Linear stores .weight as [out, in]; transpose when
    importing actual checkpoint parameters.
    """
    H = params["W1"].shape[0]
    W1 = _pad2(params["W1"], h_pad, h_pad).astype(jnp.bfloat16)
    W2 = _pad2(params["W2"], h_pad, h_pad).astype(jnp.bfloat16)
    b1 = _pad2(params["b1"], 1, h_pad).astype(jnp.float32)
    b2 = _pad2(params["b2"], 1, h_pad).astype(jnp.float32)
    w3 = params["W3"]                                    # (2H, 1)
    w3a = _pad2(w3[:H].reshape(1, H), 1, h_pad).astype(jnp.float32)
    w3b = _pad2(w3[H:].reshape(1, H), 1, h_pad).astype(jnp.float32)
    b3 = params["b3"].reshape(1).astype(jnp.float32)     # (1,) -> SMEM
    return W1, b1, W2, b2, w3a, w3b, b3


def _build_call(H, tile_b, num_tiles, B_pad, resident_kwargs):
    # Streamed: one stacked bf16 activation block per grid step.
    act_spec = pl.BlockSpec((2, tile_b, H), lambda i: (0, i, 0))
    # VMEM-resident (constant index_map), single-buffered when supported.
    wgt_spec = pl.BlockSpec((H, H), lambda i: (0, 0), **resident_kwargs)
    row_spec = pl.BlockSpec((1, H), lambda i: (0, 0), **resident_kwargs)
    b3_spec = pl.BlockSpec(memory_space=pltpu.MemorySpace.SMEM)

    return pl.pallas_call(
        detector_kernel,
        out_shape=jax.ShapeDtypeStruct((B_pad, 1), jnp.float32),
        grid=(num_tiles,),
        in_specs=[act_spec,
                  wgt_spec, row_spec,
                  wgt_spec, row_spec,
                  row_spec, row_spec, b3_spec],
        out_specs=pl.BlockSpec((tile_b, 1), lambda i: (i, 0)),
        compiler_params=pltpu.CompilerParams(
            dimension_semantics=("parallel",),
            vmem_limit_bytes=_vmem_limit_bytes()),
    )


# ----------------------------------------------------------------------------
# Wrapper: pads hidden to a multiple of 128, batch to a multiple of tile_b,
# streams stacked bf16 activations, keeps weights VMEM-resident.
# ----------------------------------------------------------------------------
def detector_forward(word1, word2, params, *, tile_b=None):
    B, H_in = word1.shape
    H = _round_up(H_in, 128)
    if tile_b is None:
        tile_b = _auto_tile_b(B)
    B_pad = _round_up(B, tile_b)
    num_tiles = B_pad // tile_b

    # Single stacked bf16 activation tensor: one DMA per grid step, half the
    # bytes of the previous f32 streaming.
    x = jnp.stack([_pad2(word1, B_pad, H),
                   _pad2(word2, B_pad, H)]).astype(jnp.bfloat16)
    W1, b1, W2, b2, w3a, w3b, b3 = prepare_params(params, H)
    args = (x, W1, b1, W2, b2, w3a, w3b, b3)

    try:
        out = _build_call(H, tile_b, num_tiles, B_pad,
                          _single_buffer_resident_kwargs())(*args)
    except Exception:
        # Fallback: default double-buffering if Buffered(1) is rejected.
        out = _build_call(H, tile_b, num_tiles, B_pad, {})(*args)

    return out[:B]


# ----------------------------------------------------------------------------
# Pure-JAX reference (f32, matches the PyTorch module semantics).
# ----------------------------------------------------------------------------
def detector_reference(word1, word2, params):
    H = params["W1"].shape[0]
    h1 = jnp.maximum(word1 @ params["W1"] + params["b1"], 0.0)
    h2 = jnp.maximum(word2 @ params["W2"] + params["b2"], 0.0)
    o = h1 @ params["W3"][:H] + h2 @ params["W3"][H:] + params["b3"]
    return jnp.maximum(o, 0.0)


def init_params(key, hidden):
    """Deterministic synthetic init; weights pre-transposed to [in, out]."""
    k1, k2, k3, k4, k5, k6 = jax.random.split(key, 6)
    scale = 1.0 / jnp.sqrt(hidden)
    W1 = jax.random.uniform(k1, (hidden, hidden), jnp.float32, -scale, scale)
    b1 = jax.random.uniform(k2, (1, hidden), jnp.float32, -scale, scale)
    W2 = jax.random.uniform(k3, (hidden, hidden), jnp.float32, -scale, scale)
    b2 = jax.random.uniform(k4, (1, hidden), jnp.float32, -scale, scale)
    scale3 = 1.0 / jnp.sqrt(2.0 * hidden)
    W3 = jax.random.uniform(k5, (2 * hidden, 1), jnp.float32, -scale3, scale3)
    b3 = jax.random.uniform(k6, (1, 1), jnp.float32, -scale3, scale3)
    return {"W1": W1, "b1": b1, "W2": W2, "b2": b2, "W3": W3, "b3": b3}


if __name__ == "__main__":
    HIDDEN = 256     # small, lane-aligned stand-in for hidden_size=1000 (->1024)
    BATCH = 512      # enough rows for 4 grid steps with the auto-chosen tile

    key = jax.random.PRNGKey(0)
    kp, kx1, kx2 = jax.random.split(key, 3)
    params = init_params(kp, HIDDEN)
    word1 = jax.random.normal(kx1, (BATCH, HIDDEN), jnp.float32)
    word2 = jax.random.normal(kx2, (BATCH, HIDDEN), jnp.float32)

    out = detector_forward(word1, word2, params)
    out = jax.block_until_ready(out)

    ref = detector_reference(word1, word2, params)
    assert out.shape == (BATCH, 1)
    # bf16 weights/activations on the MXU vs f32 reference -> loose tolerance.
    assert jnp.allclose(out, ref, atol=3e-2, rtol=3e-2), "mismatch vs reference"

    # TODO(synk): self.gru (nn.GRU) is declared in __init__ but never used in
    # forward(), so it is intentionally not implemented here.
    print("KERNEL_OK")
</pallas_src>

<mosaic_0001>
module attributes {stable_mosaic.version = 11 : i64} {
  func.func @detector_kernel(%arg0: i32, %arg1: memref<2x128x256xbf16, #tpu.memory_space<vmem>>, %arg2: memref<256x256xbf16, #tpu.memory_space<vmem>>, %arg3: memref<1x256xf32, #tpu.memory_space<vmem>>, %arg4: memref<256x256xbf16, #tpu.memory_space<vmem>>, %arg5: memref<1x256xf32, #tpu.memory_space<vmem>>, %arg6: memref<1x256xf32, #tpu.memory_space<vmem>>, %arg7: memref<1x256xf32, #tpu.memory_space<vmem>>, %arg8: memref<1xf32, #tpu.memory_space<smem>>, %arg9: memref<128x1xf32, #tpu.memory_space<vmem>>) attributes {dimension_semantics = [#tpu.dimension_semantics<parallel>], iteration_bounds = array<i64: 4>, scalar_prefetch = 0 : i64, scratch_operands = 0 : i64, tpu.core_type = #tpu.core_type<tc>, window_params = [{transform_indices = @transform_0, window_bounds = array<i64: 2, 128, 256>}, {pipeline_mode = #tpu.pipeline_mode<synchronous>, transform_indices = @transform_1, window_bounds = array<i64: 256, 256>}, {pipeline_mode = #tpu.pipeline_mode<synchronous>, transform_indices = @transform_2, window_bounds = array<i64: 1, 256>}, {pipeline_mode = #tpu.pipeline_mode<synchronous>, transform_indices = @transform_3, window_bounds = array<i64: 256, 256>}, {pipeline_mode = #tpu.pipeline_mode<synchronous>, transform_indices = @transform_4, window_bounds = array<i64: 1, 256>}, {pipeline_mode = #tpu.pipeline_mode<synchronous>, transform_indices = @transform_5, window_bounds = array<i64: 1, 256>}, {pipeline_mode = #tpu.pipeline_mode<synchronous>, transform_indices = @transform_6, window_bounds = array<i64: 1, 256>}, {transform_indices = @transform_7, window_bounds = array<i64: 1>}, {transform_indices = @transform_8, window_bounds = array<i64: 128, 1>}]} {
    %c0 = arith.constant 0 : index
    %c0_0 = arith.constant 0 : index
    %c0_1 = arith.constant 0 : index
    %0 = vector.load %arg1[%c0, %c0_0, %c0_1] : memref<2x128x256xbf16, #tpu.memory_space<vmem>>, vector<1x128x256xbf16>
    %1 = vector.shape_cast %0 : vector<1x128x256xbf16> to vector<128x256xbf16>
    %c0_2 = arith.constant 0 : index
    %c0_3 = arith.constant 0 : index
    %2 = vector.load %arg2[%c0_2, %c0_3] : memref<256x256xbf16, #tpu.memory_space<vmem>>, vector<256x256xbf16>
    %cst = arith.constant dense<0.000000e+00> : vector<128x256xf32>
    %3 = tpu.matmul %1, %2, %cst {dimension_numbers = #tpu.dot_dimension_numbers<[1], [0], [0], [1], [0, 0, 1, 1], [], []>} : vector<128x256xbf16>, vector<256x256xbf16>, vector<128x256xf32> -> vector<128x256xf32>
    %c0_4 = arith.constant 0 : index
    %c0_5 = arith.constant 0 : index
    %4 = vector.load %arg3[%c0_4, %c0_5] : memref<1x256xf32, #tpu.memory_space<vmem>>, vector<1x256xf32>
    %5 = vector.broadcast %4 : vector<1x256xf32> to vector<128x256xf32>
    %6 = arith.addf %3, %5 : vector<128x256xf32>
    %cst_6 = arith.constant 0.000000e+00 : f32
    %7 = vector.broadcast %cst_6 : f32 to vector<128x256xf32>
    %8 = arith.maximumf %6, %7 : vector<128x256xf32>
    %c0_7 = arith.constant 0 : index
    %c0_8 = arith.constant 0 : index
    %9 = vector.load %arg6[%c0_7, %c0_8] : memref<1x256xf32, #tpu.memory_space<vmem>>, vector<1x256xf32>
    %10 = vector.broadcast %9 : vector<1x256xf32> to vector<128x256xf32>
    %11 = arith.mulf %8, %10 : vector<128x256xf32>
    %cst_9 = arith.constant dense<0.000000e+00> : vector<128xf32>
    %12 = vector.multi_reduction <add>, %11, %cst_9 [1] : vector<128x256xf32> to vector<128xf32>
    %13 = vector.shape_cast %12 : vector<128xf32> to vector<128x1xf32>
    %c1 = arith.constant 1 : index
    %c0_10 = arith.constant 0 : index
    %c0_11 = arith.constant 0 : index
    %14 = vector.load %arg1[%c1, %c0_10, %c0_11] : memref<2x128x256xbf16, #tpu.memory_space<vmem>>, vector<1x128x256xbf16>
    %15 = vector.shape_cast %14 : vector<1x128x256xbf16> to vector<128x256xbf16>
    %c0_12 = arith.constant 0 : index
    %c0_13 = arith.constant 0 : index
    %16 = vector.load %arg4[%c0_12, %c0_13] : memref<256x256xbf16, #tpu.memory_space<vmem>>, vector<256x256xbf16>
    %cst_14 = arith.constant dense<0.000000e+00> : vector<128x256xf32>
    %17 = tpu.matmul %15, %16, %cst_14 {dimension_numbers = #tpu.dot_dimension_numbers<[1], [0], [0], [1], [0, 0, 1, 1], [], []>} : vector<128x256xbf16>, vector<256x256xbf16>, vector<128x256xf32> -> vector<128x256xf32>
    %c0_15 = arith.constant 0 : index
    %c0_16 = arith.constant 0 : index
    %18 = vector.load %arg5[%c0_15, %c0_16] : memref<1x256xf32, #tpu.memory_space<vmem>>, vector<1x256xf32>
    %19 = vector.broadcast %18 : vector<1x256xf32> to vector<128x256xf32>
    %20 = arith.addf %17, %19 : vector<128x256xf32>
    %cst_17 = arith.constant 0.000000e+00 : f32
    %21 = vector.broadcast %cst_17 : f32 to vector<128x256xf32>
    %22 = arith.maximumf %20, %21 : vector<128x256xf32>
    %c0_18 = arith.constant 0 : index
    %c0_19 = arith.constant 0 : index
    %23 = vector.load %arg7[%c0_18, %c0_19] : memref<1x256xf32, #tpu.memory_space<vmem>>, vector<1x256xf32>
    %24 = vector.broadcast %23 : vector<1x256xf32> to vector<128x256xf32>
    %25 = arith.mulf %22, %24 : vector<128x256xf32>
    %cst_20 = arith.constant dense<0.000000e+00> : vector<128xf32>
    %26 = vector.multi_reduction <add>, %25, %cst_20 [1] : vector<128x256xf32> to vector<128xf32>
    %27 = vector.shape_cast %26 : vector<128xf32> to vector<128x1xf32>
    %28 = arith.addf %13, %27 : vector<128x1xf32>
    %c0_21 = arith.constant 0 : index
    %29 = memref.load %arg8[%c0_21] : memref<1xf32, #tpu.memory_space<smem>>
    %30 = vector.broadcast %29 : f32 to vector<128x1xf32>
    %31 = arith.addf %28, %30 : vector<128x1xf32>
    %cst_22 = arith.constant 0.000000e+00 : f32
    %32 = vector.broadcast %cst_22 : f32 to vector<128x1xf32>
    %33 = arith.maximumf %31, %32 : vector<128x1xf32>
    %c0_23 = arith.constant 0 : index
    %c0_24 = arith.constant 0 : index
    %34 = vector.load %arg9[%c0_23, %c0_24] : memref<128x1xf32, #tpu.memory_space<vmem>>, vector<128x1xf32>
    tpu.vector_store %arg9[%c0_23, %c0_24], %33 {strides = array<i32>} : memref<128x1xf32, #tpu.memory_space<vmem>>, vector<128x1xf32>,
    return
  }
  func.func @transform_0(%arg0: i32) -> (i32, i32, i32) {
    %c0_i32 = arith.constant 0 : i32
    %c0_i32_0 = arith.constant 0 : i32
    %c0_i32_1 = arith.constant 0 : i32
    return %c0_i32, %arg0, %c0_i32_0 : i32, i32, i32
  }
  func.func @transform_1(%arg0: i32) -> (i32, i32) {
    %c0_i32 = arith.constant 0 : i32
    %c0_i32_0 = arith.constant 0 : i32
    %c0_i32_1 = arith.constant 0 : i32
    return %c0_i32, %c0_i32_0 : i32, i32
  }
  func.func @transform_2(%arg0: i32) -> (i32, i32) {
    %c0_i32 = arith.constant 0 : i32
    %c0_i32_0 = arith.constant 0 : i32
    %c0_i32_1 = arith.constant 0 : i32
    return %c0_i32, %c0_i32_0 : i32, i32
  }
  func.func @transform_3(%arg0: i32) -> (i32, i32) {
    %c0_i32 = arith.constant 0 : i32
    %c0_i32_0 = arith.constant 0 : i32
    %c0_i32_1 = arith.constant 0 : i32
    return %c0_i32, %c0_i32_0 : i32, i32
  }
  func.func @transform_4(%arg0: i32) -> (i32, i32) {
    %c0_i32 = arith.constant 0 : i32
    %c0_i32_0 = arith.constant 0 : i32
    %c0_i32_1 = arith.constant 0 : i32
    return %c0_i32, %c0_i32_0 : i32, i32
  }
  func.func @transform_5(%arg0: i32) -> (i32, i32) {
    %c0_i32 = arith.constant 0 : i32
    %c0_i32_0 = arith.constant 0 : i32
    %c0_i32_1 = arith.constant 0 : i32
    return %c0_i32, %c0_i32_0 : i32, i32
  }
  func.func @transform_6(%arg0: i32) -> (i32, i32) {
    %c0_i32 = arith.constant 0 : i32
    %c0_i32_0 = arith.constant 0 : i32
    %c0_i32_1 = arith.constant 0 : i32
    return %c0_i32, %c0_i32_0 : i32, i32
  }
  func.func @transform_7(%arg0: i32) -> i32 {
    %c0_i32 = arith.constant 0 : i32
    %c0_i32_0 = arith.constant 0 : i32
    return %c0_i32 : i32
  }
  func.func @transform_8(%arg0: i32) -> (i32, i32) {
    %c0_i32 = arith.constant 0 : i32
    %c0_i32_0 = arith.constant 0 : i32
    return %arg0, %c0_i32 : i32, i32
  }
}

module attributes {stable_mosaic.version = 11 : i64} {
  func.func @detector_kernel(%arg0: i32, %arg1: memref<2x128x256xbf16, #tpu.memory_space<vmem>>, %arg2: memref<256x256xbf16, #tpu.memory_space<vmem>>, %arg3: memref<1x256xf32, #tpu.memory_space<vmem>>, %arg4: memref<256x256xbf16, #tpu.memory_space<vmem>>, %arg5: memref<1x256xf32, #tpu.memory_space<vmem>>, %arg6: memref<1x256xf32, #tpu.memory_space<vmem>>, %arg7: memref<1x256xf32, #tpu.memory_space<vmem>>, %arg8: memref<1xf32, #tpu.memory_space<smem>>, %arg9: memref<128x1xf32, #tpu.memory_space<vmem>>) attributes {dimension_semantics = [#tpu.dimension_semantics<parallel>], iteration_bounds = array<i64: 4>, scalar_prefetch = 0 : i64, scratch_operands = 0 : i64, tpu.core_type = #tpu.core_type<tc>, window_params = [{transform_indices = @transform_0, window_bounds = array<i64: 2, 128, 256>}, {pipeline_mode = #tpu.pipeline_mode<synchronous>, transform_indices = @transform_1, window_bounds = array<i64: 256, 256>}, {pipeline_mode = #tpu.pipeline_mode<synchronous>, transform_indices = @transform_2, window_bounds = array<i64: 1, 256>}, {pipeline_mode = #tpu.pipeline_mode<synchronous>, transform_indices = @transform_3, window_bounds = array<i64: 256, 256>}, {pipeline_mode = #tpu.pipeline_mode<synchronous>, transform_indices = @transform_4, window_bounds = array<i64: 1, 256>}, {pipeline_mode = #tpu.pipeline_mode<synchronous>, transform_indices = @transform_5, window_bounds = array<i64: 1, 256>}, {pipeline_mode = #tpu.pipeline_mode<synchronous>, transform_indices = @transform_6, window_bounds = array<i64: 1, 256>}, {transform_indices = @transform_7, window_bounds = array<i64: 1>}, {transform_indices = @transform_8, window_bounds = array<i64: 128, 1>}]} {
    %c0 = arith.constant 0 : index
    %c0_0 = arith.constant 0 : index
    %c0_1 = arith.constant 0 : index
    %0 = vector.load %arg1[%c0, %c0_0, %c0_1] : memref<2x128x256xbf16, #tpu.memory_space<vmem>>, vector<1x128x256xbf16>
    %1 = vector.shape_cast %0 : vector<1x128x256xbf16> to vector<128x256xbf16>
    %c0_2 = arith.constant 0 : index
    %c0_3 = arith.constant 0 : index
    %2 = vector.load %arg2[%c0_2, %c0_3] : memref<256x256xbf16, #tpu.memory_space<vmem>>, vector<256x256xbf16>
    %cst = arith.constant dense<0.000000e+00> : vector<128x256xf32>
    %3 = tpu.matmul %1, %2, %cst {dimension_numbers = #tpu.dot_dimension_numbers<[1], [0], [0], [1], [0, 0, 1, 1], [], []>} : vector<128x256xbf16>, vector<256x256xbf16>, vector<128x256xf32> -> vector<128x256xf32>
    %c0_4 = arith.constant 0 : index
    %c0_5 = arith.constant 0 : index
    %4 = vector.load %arg3[%c0_4, %c0_5] : memref<1x256xf32, #tpu.memory_space<vmem>>, vector<1x256xf32>
    %5 = vector.broadcast %4 : vector<1x256xf32> to vector<128x256xf32>
    %6 = arith.addf %3, %5 : vector<128x256xf32>
    %cst_6 = arith.constant 0.000000e+00 : f32
    %7 = vector.broadcast %cst_6 : f32 to vector<128x256xf32>
    %8 = arith.maximumf %6, %7 : vector<128x256xf32>
    %c0_7 = arith.constant 0 : index
    %c0_8 = arith.constant 0 : index
    %9 = vector.load %arg6[%c0_7, %c0_8] : memref<1x256xf32, #tpu.memory_space<vmem>>, vector<1x256xf32>
    %10 = vector.broadcast %9 : vector<1x256xf32> to vector<128x256xf32>
    %11 = arith.mulf %8, %10 : vector<128x256xf32>
    %cst_9 = arith.constant dense<0.000000e+00> : vector<128xf32>
    %12 = vector.multi_reduction <add>, %11, %cst_9 [1] : vector<128x256xf32> to vector<128xf32>
    %13 = vector.shape_cast %12 : vector<128xf32> to vector<128x1xf32>
    %c1 = arith.constant 1 : index
    %c0_10 = arith.constant 0 : index
    %c0_11 = arith.constant 0 : index
    %14 = vector.load %arg1[%c1, %c0_10, %c0_11] : memref<2x128x256xbf16, #tpu.memory_space<vmem>>, vector<1x128x256xbf16>
    %15 = vector.shape_cast %14 : vector<1x128x256xbf16> to vector<128x256xbf16>
    %c0_12 = arith.constant 0 : index
    %c0_13 = arith.constant 0 : index
    %16 = vector.load %arg4[%c0_12, %c0_13] : memref<256x256xbf16, #tpu.memory_space<vmem>>, vector<256x256xbf16>
    %cst_14 = arith.constant dense<0.000000e+00> : vector<128x256xf32>
    %17 = tpu.matmul %15, %16, %cst_14 {dimension_numbers = #tpu.dot_dimension_numbers<[1], [0], [0], [1], [0, 0, 1, 1], [], []>} : vector<128x256xbf16>, vector<256x256xbf16>, vector<128x256xf32> -> vector<128x256xf32>
    %c0_15 = arith.constant 0 : index
    %c0_16 = arith.constant 0 : index
    %18 = vector.load %arg5[%c0_15, %c0_16] : memref<1x256xf32, #tpu.memory_space<vmem>>, vector<1x256xf32>
    %19 = vector.broadcast %18 : vector<1x256xf32> to vector<128x256xf32>
    %20 = arith.addf %17, %19 : vector<128x256xf32>
    %cst_17 = arith.constant 0.000000e+00 : f32
    %21 = vector.broadcast %cst_17 : f32 to vector<128x256xf32>
    %22 = arith.maximumf %20, %21 : vector<128x256xf32>
    %c0_18 = arith.constant 0 : index
    %c0_19 = arith.constant 0 : index
    %23 = vector.load %arg7[%c0_18, %c0_19] : memref<1x256xf32, #tpu.memory_space<vmem>>, vector<1x256xf32>
    %24 = vector.broadcast %23 : vector<1x256xf32> to vector<128x256xf32>
    %25 = arith.mulf %22, %24 : vector<128x256xf32>
    %cst_20 = arith.constant dense<0.000000e+00> : vector<128xf32>
    %26 = vector.multi_reduction <add>, %25, %cst_20 [1] : vector<128x256xf32> to vector<128xf32>
    %27 = vector.shape_cast %26 : vector<128xf32> to vector<128x1xf32>
    %28 = arith.addf %13, %27 : vector<128x1xf32>
    %c0_21 = arith.constant 0 : index
    %29 = memref.load %arg8[%c0_21] : memref<1xf32, #tpu.memory_space<smem>>
    %30 = vector.broadcast %29 : f32 to vector<128x1xf32>
    %31 = arith.addf %28, %30 : vector<128x1xf32>
    %cst_22 = arith.constant 0.000000e+00 : f32
    %32 = vector.broadcast %cst_22 : f32 to vector<128x1xf32>
    %33 = arith.maximumf %31, %32 : vector<128x1xf32>
    %c0_23 = arith.constant 0 : index
    %c0_24 = arith.constant 0 : index
    %34 = vector.load %arg9[%c0_23, %c0_24] : memref<128x1xf32, #tpu.memory_space<vmem>>, vector<128x1xf32>
    tpu.vector_store %arg9[%c0_23, %c0_24], %33 {strides = array<i32>} : memref<128x1xf32, #tpu.memory_space<vmem>>, vector<128x1xf32>,
    return
  }
  func.func @transform_0(%arg0: i32) -> (i32, i32, i32) {
    %c0_i32 = arith.constant 0 : i32
    %c0_i32_0 = arith.constant 0 : i32
    %c0_i32_1 = arith.constant 0 : i32
    return %c0_i32, %arg0, %c0_i32_0 : i32, i32, i32
  }
  func.func @transform_1(%arg0: i32) -> (i32, i32) {
    %c0_i32 = arith.constant 0 : i32
    %c0_i32_0 = arith.constant 0 : i32
    %c0_i32_1 = arith.constant 0 : i32
    return %c0_i32, %c0_i32_0 : i32, i32
  }
  func.func @transform_2(%arg0: i32) -> (i32, i32) {
    %c0_i32 = arith.constant 0 : i32
    %c0_i32_0 = arith.constant 0 : i32
    %c0_i32_1 = arith.constant 0 : i32
    return %c0_i32, %c0_i32_0 : i32, i32
  }
  func.func @transform_3(%arg0: i32) -> (i32, i32) {
    %c0_i32 = arith.constant 0 : i32
    %c0_i32_0 = arith.constant 0 : i32
    %c0_i32_1 = arith.constant 0 : i32
    return %c0_i32, %c0_i32_0 : i32, i32
  }
  func.func @transform_4(%arg0: i32) -> (i32, i32) {
    %c0_i32 = arith.constant 0 : i32
    %c0_i32_0 = arith.constant 0 : i32
    %c0_i32_1 = arith.constant 0 : i32
    return %c0_i32, %c0_i32_0 : i32, i32
  }
  func.func @transform_5(%arg0: i32) -> (i32, i32) {
    %c0_i32 = arith.constant 0 : i32
    %c0_i32_0 = arith.constant 0 : i32
    %c0_i32_1 = arith.constant 0 : i32
    return %c0_i32, %c0_i32_0 : i32, i32
  }
  func.func @transform_6(%arg0: i32) -> (i32, i32) {
    %c0_i32 = arith.constant 0 : i32
    %c0_i32_0 = arith.constant 0 : i32
    %c0_i32_1 = arith.constant 0 : i32
    return %c0_i32, %c0_i32_0 : i32, i32
  }
  func.func @transform_7(%arg0: i32) -> i32 {
    %c0_i32 = arith.constant 0 : i32
    %c0_i32_0 = arith.constant 0 : i32
    return %c0_i32 : i32
  }
  func.func @transform_8(%arg0: i32) -> (i32, i32) {
    %c0_i32 = arith.constant 0 : i32
    %c0_i32_0 = arith.constant 0 : i32
    return %arg0, %c0_i32 : i32, i32
  }
}

</mosaic_0001>

<llo_original>
// kernel: tpu_custom_call.1
$region0: #{tpu_custom_call.1}
  #allocation0 [shape = 'u32[]', space=smem, size = 0x4, offset = 0x4, fixed_abs, tag = 'smem constant byte address 0x4 - core index']
  #allocation1 [shape = 'u32[144,128]{1,0:T(1,128)}', space=vmem, size = 0x12000, scoped, tag = 'internal scratch']
  #allocation2 [shape = 'f32[1]{0:T(128)S(6)}', space=smem, size = 0x200, scoped, tag = 'scoped memory for tpu_custom_call.1']
  #allocation16 [shape = 's32[]', space=sflag, size = 0x4, offset = 0, fixed_abs, tag = 'sflag constant byte address 0x0 - dummy sync flag']
  %s0 = inlined_call_operand.hbm [shape: bf16[2,512,256], index: 0, kind: input, shape index: {}]
  %s1 = inlined_call_operand.hbm [shape: bf16[256,256], index: 1, kind: input, shape index: {}]
  %s2 = inlined_call_operand.hbm [shape: f32[1,256], index: 2, kind: input, shape index: {}]
  %s3 = inlined_call_operand.hbm [shape: bf16[256,256], index: 3, kind: input, shape index: {}]
  %s4 = inlined_call_operand.hbm [shape: f32[1,256], index: 4, kind: input, shape index: {}]
  %s5 = inlined_call_operand.hbm [shape: f32[1,256], index: 5, kind: input, shape index: {}]
  %s6 = inlined_call_operand.hbm [shape: f32[1,256], index: 6, kind: input, shape index: {}]
  %s7 = inlined_call_operand.<no memory space> [shape: f32[1], index: 7, kind: input, shape index: {}]
  %s8 = inlined_call_operand.hbm [shape: f32[512,1], index: 8, kind: output, shape index: {}]
  %s9 = sld [smem:[#allocation0]]
  $region93: #{tpu_custom_call.1} parent=0
    _
  %s11 = ssub.s32 1, %s9
  %s12 = scalar_select 0, %s11, %s9
  %13 = sst [smem:[#allocation2]] %s7
  $region1: #{tpu_custom_call.1} parent=0
    #allocation3 [shape = 'u8[262144]{0}', space=vmem, size = 0x40000, scoped, tag = 'input window, operand 0']
    #allocation4 [shape = 's32[2]{0}', space=sflag, size = 0x8, scoped, tag = 'scoped memory for tpu_custom_call.1']
    #allocation5 [shape = 's32[2]{0}', space=sflag, size = 0x8, scoped, tag = 'scoped memory for tpu_custom_call.1']
    #allocation6 [shape = 'u8[131072]{0}', space=vmem, size = 0x20000, scoped, tag = 'input window, operand 1, single buffered']
    #allocation7 [shape = 's32[1]{0}', space=sflag, size = 0x4, scoped, tag = 'scoped memory for tpu_custom_call.1']
    #allocation8 [shape = 'u8[1024]{0}', space=vmem, size = 0x400, scoped, tag = 'input window, operand 2, single buffered']
    #allocation9 [shape = 'u8[131072]{0}', space=vmem, size = 0x20000, scoped, tag = 'input window, operand 3, single buffered']
    #allocation10 [shape = 's32[1]{0}', space=sflag, size = 0x4, scoped, tag = 'scoped memory for tpu_custom_call.1']
    #allocation11 [shape = 'u8[1024]{0}', space=vmem, size = 0x400, scoped, tag = 'input window, operand 4, single buffered']
    #allocation12 [shape = 'u8[1024]{0}', space=vmem, size = 0x400, scoped, tag = 'input window, operand 5, single buffered']
    #allocation13 [shape = 's32[1]{0}', space=sflag, size = 0x4, scoped, tag = 'scoped memory for tpu_custom_call.1']
    #allocation14 [shape = 'u8[1024]{0}', space=vmem, size = 0x400, scoped, tag = 'input window, operand 6, single buffered']
    #allocation15 [shape = 'u8[131072]{0}', space=vmem, size = 0x20000, scoped, tag = 'output window, operand 0']
    %14 = vsyncpa [#allocation4], 0
    %s15 = scalar_lea.sflag [#allocation4], 1
    %16 = vsyncpa %s15, 0
    %17 = vsyncpa [#allocation7], 0
    %18 = vsyncpa [#allocation10], 0
    %19 = vsyncpa [#allocation13], 0
    %20 = vsyncpa [#allocation5], 0
    %s21 = scalar_lea.sflag [#allocation5], 1
    %22 = vsyncpa %s21, 0
    loop: start=0, step=1, limit=6
    $region2: #{tpu_custom_call.1} parent=1 // loop_pre_header
      _
    $region3: #{tpu_custom_call.1} parent=1 // loop_header
      %s24 = sphi 0, %s28
      %p25 = scmp.ge.s32.totalorder %s24, 6
      %s34 = sphi 0, %s36
      %s37 = sphi 0, %s34
      %s38 = sphi 0, %s37
      %s54 = sphi 0, %s38
      %s58 = sphi 0, %s58
      %s60 = sphi 0, %s58
      %s61 = sphi 0, %s60
      %s75 = sphi 0, %s61
      %s79 = sphi 0, %s79
      %s81 = sphi 0, %s79
      %s82 = sphi 0, %s81
      %s96 = sphi 0, %s82
      %s100 = sphi 0, %s100
      %s102 = sphi 0, %s100
      %s103 = sphi 0, %s102
      %s117 = sphi 0, %s103
      %s121 = sphi 0, %s121
      %s123 = sphi 0, %s121
      %s124 = sphi 0, %s123
      %s138 = sphi 0, %s124
      %s142 = sphi 0, %s142
      %s144 = sphi 0, %s142
      %s145 = sphi 0, %s144
      %s159 = sphi 0, %s145
      %s163 = sphi 0, %s163
      %s165 = sphi 0, %s163
      %s166 = sphi 0, %s165
      %s180 = sphi 0, %s166
      %s184 = sphi 0, %s184
      %s186 = sphi 0, %s184
      %s187 = sphi 0, %s186
      %s201 = sphi 0, %s187
      %s207 = sphi 0, %s209
      %s210 = sphi 0, %s207
      %s211 = sphi 0, %s210
      %s227 = sphi 0, %s211
    $region4: #{tpu_custom_call.1} parent=1 // loop_header_branch
      %27 = sbr.rel (%p25) target = $region8
    $region5: #{tpu_custom_call.1} parent=1 // loop_body
      %s29 = ssub.s32 %s24, 1
      %s30 = ssub.s32 %s24, 2
      %s31 = sadd.s32 %s24, 1
      %s32 = ssub.s32 %s24, %s31
      %p33 = scmp.eq.s32.totalorder %s32, 0
      %s35 = sadd.s32 %s34, 1
      %s36 = scalar_select %p33, %s34, %s35
      %p39 = pneg %p33
      %p40 = scmp.eq.s32.totalorder %s24, 3
      %p41 = por %p39, %p40
      %p42 = scmp.ne.s32.totalorder %s34, %s37
      %p43 = scmp.eq.s32.totalorder %s24, 0
      %p44 = por %p42, %p43
      %p45 = scmp.ne.s32.totalorder %s34, %s37
      %p46 = scmp.eq.s32.totalorder %s29, 3
      %p47 = por %p45, %p46
      %p48 = scmp.ne.s32.totalorder %s37, %s38
      %p49 = scmp.eq.s32.totalorder %s29, 0
      %p50 = por %p48, %p49
      %p51 = scmp.ne.s32.totalorder %s37, %s38
      %p52 = scmp.eq.s32.totalorder %s30, 3
      %p53 = por %p51, %p52
      %p55 = scmp.ne.s32.totalorder %s38, %s54
      %p56 = scmp.eq.s32.totalorder %s30, 0
      %p57 = por %p55, %p56
      %s59 = sadd.s32 %s58, 1
      %p62 = scmp.eq.s32.totalorder %s24, 3
      %p63 = scmp.ne.s32.totalorder %s58, %s60
      %p64 = scmp.eq.s32.totalorder %s24, 0
      %p65 = por %p63, %p64
      %p66 = scmp.ne.s32.totalorder %s58, %s60
      %p67 = scmp.eq.s32.totalorder %s29, 3
      %p68 = por %p66, %p67
      %p69 = scmp.ne.s32.totalorder %s60, %s61
      %p70 = scmp.eq.s32.totalorder %s29, 0
      %p71 = por %p69, %p70
      %p72 = scmp.ne.s32.totalorder %s60, %s61
      %p73 = scmp.eq.s32.totalorder %s30, 3
      %p74 = por %p72, %p73
      %p76 = scmp.ne.s32.totalorder %s61, %s75
      %p77 = scmp.eq.s32.totalorder %s30, 0
      %p78 = por %p76, %p77
      %s80 = sadd.s32 %s79, 1
      %p83 = scmp.eq.s32.totalorder %s24, 3
      %p84 = scmp.ne.s32.totalorder %s79, %s81
      %p85 = scmp.eq.s32.totalorder %s24, 0
      %p86 = por %p84, %p85
      %p87 = scmp.ne.s32.totalorder %s79, %s81
      %p88 = scmp.eq.s32.totalorder %s29, 3
      %p89 = por %p87, %p88
      %p90 = scmp.ne.s32.totalorder %s81, %s82
      %p91 = scmp.eq.s32.totalorder %s29, 0
      %p92 = por %p90, %p91
      %p93 = scmp.ne.s32.totalorder %s81, %s82
      %p94 = scmp.eq.s32.totalorder %s30, 3
      %p95 = por %p93, %p94
      %p97 = scmp.ne.s32.totalorder %s82, %s96
      %p98 = scmp.eq.s32.totalorder %s30, 0
      %p99 = por %p97, %p98
      %s101 = sadd.s32 %s100, 1
      %p104 = scmp.eq.s32.totalorder %s24, 3
      %p105 = scmp.ne.s32.totalorder %s100, %s102
      %p106 = scmp.eq.s32.totalorder %s24, 0
      %p107 = por %p105, %p106
      %p108 = scmp.ne.s32.totalorder %s100, %s102
      %p109 = scmp.eq.s32.totalorder %s29, 3
      %p110 = por %p108, %p109
      %p111 = scmp.ne.s32.totalorder %s102, %s103
      %p112 = scmp.eq.s32.totalorder %s29, 0
      %p113 = por %p111, %p112
      %p114 = scmp.ne.s32.totalorder %s102, %s103
      %p115 = scmp.eq.s32.totalorder %s30, 3
      %p116 = por %p114, %p115
      %p118 = scmp.ne.s32.totalorder %s103, %s117
      %p119 = scmp.eq.s32.totalorder %s30, 0
      %p120 = por %p118, %p119
      %s122 = sadd.s32 %s121, 1
      %p125 = scmp.eq.s32.totalorder %s24, 3
      %p126 = scmp.ne.s32.totalorder %s121, %s123
      %p127 = scmp.eq.s32.totalorder %s24, 0
      %p128 = por %p126, %p127
      %p129 = scmp.ne.s32.totalorder %s121, %s123
      %p130 = scmp.eq.s32.totalorder %s29, 3
      %p131 = por %p129, %p130
      %p132 = scmp.ne.s32.totalorder %s123, %s124
      %p133 = scmp.eq.s32.totalorder %s29, 0
      %p134 = por %p132, %p133
      %p135 = scmp.ne.s32.totalorder %s123, %s124
      %p136 = scmp.eq.s32.totalorder %s30, 3
      %p137 = por %p135, %p136
      %p139 = scmp.ne.s32.totalorder %s124, %s138
      %p140 = scmp.eq.s32.totalorder %s30, 0
      %p141 = por %p139, %p140
      %s143 = sadd.s32 %s142, 1
      %p146 = scmp.eq.s32.totalorder %s24, 3
      %p147 = scmp.ne.s32.totalorder %s142, %s144
      %p148 = scmp.eq.s32.totalorder %s24, 0
      %p149 = por %p147, %p148
      %p150 = scmp.ne.s32.totalorder %s142, %s144
      %p151 = scmp.eq.s32.totalorder %s29, 3
      %p152 = por %p150, %p151
      %p153 = scmp.ne.s32.totalorder %s144, %s145
      %p154 = scmp.eq.s32.totalorder %s29, 0
      %p155 = por %p153, %p154
      %p156 = scmp.ne.s32.totalorder %s144, %s145
      %p157 = scmp.eq.s32.totalorder %s30, 3
      %p158 = por %p156, %p157
      %p160 = scmp.ne.s32.totalorder %s145, %s159
      %p161 = scmp.eq.s32.totalorder %s30, 0
      %p162 = por %p160, %p161
      %s164 = sadd.s32 %s163, 1
      %p167 = scmp.eq.s32.totalorder %s24, 3
      %p168 = scmp.ne.s32.totalorder %s163, %s165
      %p169 = scmp.eq.s32.totalorder %s24, 0
      %p170 = por %p168, %p169
      %p171 = scmp.ne.s32.totalorder %s163, %s165
      %p172 = scmp.eq.s32.totalorder %s29, 3
      %p173 = por %p171, %p172
      %p174 = scmp.ne.s32.totalorder %s165, %s166
      %p175 = scmp.eq.s32.totalorder %s29, 0
      %p176 = por %p174, %p175
      %p177 = scmp.ne.s32.totalorder %s165, %s166
      %p178 = scmp.eq.s32.totalorder %s30, 3
      %p179 = por %p177, %p178
      %p181 = scmp.ne.s32.totalorder %s166, %s180
      %p182 = scmp.eq.s32.totalorder %s30, 0
      %p183 = por %p181, %p182
      %s185 = sadd.s32 %s184, 1
      %p188 = scmp.eq.s32.totalorder %s24, 3
      %p189 = scmp.ne.s32.totalorder %s184, %s186
      %p190 = scmp.eq.s32.totalorder %s24, 0
      %p191 = por %p189, %p190
      %p192 = scmp.ne.s32.totalorder %s184, %s186
      %p193 = scmp.eq.s32.totalorder %s29, 3
      %p194 = por %p192, %p193
      %p195 = scmp.ne.s32.totalorder %s186, %s187
      %p196 = scmp.eq.s32.totalorder %s29, 0
      %p197 = por %p195, %p196
      %p198 = scmp.ne.s32.totalorder %s186, %s187
      %p199 = scmp.eq.s32.totalorder %s30, 3
      %p200 = por %p198, %p199
      %p202 = scmp.ne.s32.totalorder %s187, %s201
      %p203 = scmp.eq.s32.totalorder %s30, 0
      %p204 = por %p202, %p203
      %s205 = ssub.s32 %s24, %s31
      %p206 = scmp.eq.s32.totalorder %s205, 0
      %s208 = sadd.s32 %s207, 1
      %s209 = scalar_select %p206, %s207, %s208
      %p212 = pneg %p206
      %p213 = scmp.eq.s32.totalorder %s24, 3
      %p214 = por %p212, %p213
      %p215 = scmp.ne.s32.totalorder %s207, %s210
      %p216 = scmp.eq.s32.totalorder %s24, 0
      %p217 = por %p215, %p216
      %p218 = scmp.ne.s32.totalorder %s207, %s210
      %p219 = scmp.eq.s32.totalorder %s29, 3
      %p220 = por %p218, %p219
      %p221 = scmp.ne.s32.totalorder %s210, %s211
      %p222 = scmp.eq.s32.totalorder %s29, 0
      %p223 = por %p221, %p222
      %p224 = scmp.ne.s32.totalorder %s210, %s211
      %p225 = scmp.eq.s32.totalorder %s30, 3
      %p226 = por %p224, %p225
      %p228 = scmp.ne.s32.totalorder %s211, %s227
      %p229 = scmp.eq.s32.totalorder %s30, 0
      %p230 = por %p228, %p229
      %p231 = scmp.le.s32.totalorder 1, %s24
      %p232 = scmp.lt.s32.totalorder %s24, 5
      %p233 = pnand %p231, %p232
      %p234 = pneg %p233
      // Predicated region
      $region9: #{tpu_custom_call.1} parent=5 // pred_check
        _
      $region10: #{tpu_custom_call.1} parent=5 // pred_check_branch
        %236 = sbr.rel (%p233) target = $region12
      $region11: #{tpu_custom_call.1} parent=5 // pred_region
        %s237 = ssub.s32 %s24, 1
        // Predicated region
        $region13: #{tpu_custom_call.1} parent=11 // pred_check
          %p238 = pneg %p71
        $region14: #{tpu_custom_call.1} parent=11 // pred_check_branch
          %240 = sbr.rel (%p238) target = $region16
        $region15: #{tpu_custom_call.1} parent=11 // pred_region
          %s242 = ssub.s32 4096, 4096
          %243 = vsyncadd [#allocation7], %s242
          %s244 = sshll.u32 [#allocation6], 4
          %s245 = int_to_ptr.vmem [resolvable:$true] %s244
          %250 = dma.hbm_to_vmem [thread:$0]  %s1, 4096, %s245, [#allocation7], 128, 128, 8
        $region16: #{tpu_custom_call.1} parent=11 // pred_fallthru
          _
        // Predicated region
        $region17: #{tpu_custom_call.1} parent=11 // pred_check
          %p251 = pneg %p92
        $region18: #{tpu_custom_call.1} parent=11 // pred_check_branch
          %253 = sbr.rel (%p251) target = $region20
        $region19: #{tpu_custom_call.1} parent=11 // pred_region
          %s255 = ssub.s32 32, 32
          %256 = vsyncadd [#allocation7], %s255
          %s258 = sshll.u32 [#allocation8], 4
          %s259 = int_to_ptr.vmem [resolvable:$true] %s258
          %261 = dma.hbm_to_vmem [thread:$0]  %s2, 32, %s259, [#allocation7]
        $region20: #{tpu_custom_call.1} parent=11 // pred_fallthru
          _
        // Predicated region
        $region21: #{tpu_custom_call.1} parent=11 // pred_check
          %p262 = pneg %p113
        $region22: #{tpu_custom_call.1} parent=11 // pred_check_branch
          %264 = sbr.rel (%p262) target = $region24
        $region23: #{tpu_custom_call.1} parent=11 // pred_region
          %s266 = ssub.s32 4096, 4096
          %267 = vsyncadd [#allocation10], %s266
          %s268 = sshll.u32 [#allocation9], 4
          %s269 = int_to_ptr.vmem [resolvable:$true] %s268
          %274 = dma.hbm_to_vmem [thread:$0]  %s3, 4096, %s269, [#allocation10], 128, 128, 8
        $region24: #{tpu_custom_call.1} parent=11 // pred_fallthru
          _
        // Predicated region
        $region25: #{tpu_custom_call.1} parent=11 // pred_check
          %p275 = pneg %p134
        $region26: #{tpu_custom_call.1} parent=11 // pred_check_branch
          %277 = sbr.rel (%p275) target = $region28
        $region27: #{tpu_custom_call.1} parent=11 // pred_region
          %s279 = ssub.s32 32, 32
          %280 = vsyncadd [#allocation10], %s279
          %s282 = sshll.u32 [#allocation11], 4
          %s283 = int_to_ptr.vmem [resolvable:$true] %s282
          %285 = dma.hbm_to_vmem [thread:$0]  %s4, 32, %s283, [#allocation10]
        $region28: #{tpu_custom_call.1} parent=11 // pred_fallthru
          _
        // Predicated region
        $region29: #{tpu_custom_call.1} parent=11 // pred_check
          %p286 = pneg %p155
        $region30: #{tpu_custom_call.1} parent=11 // pred_check_branch
          %288 = sbr.rel (%p286) target = $region32
        $region31: #{tpu_custom_call.1} parent=11 // pred_region
          %s290 = ssub.s32 32, 32
          %291 = vsyncadd [#allocation13], %s290
          %s293 = sshll.u32 [#allocation12], 4
          %s294 = int_to_ptr.vmem [resolvable:$true] %s293
          %296 = dma.hbm_to_vmem [thread:$0]  %s5, 32, %s294, [#allocation13]
        $region32: #{tpu_custom_call.1} parent=11 // pred_fallthru
          _
        // Predicated region
        $region33: #{tpu_custom_call.1} parent=11 // pred_check
          %p297 = pneg %p176
        $region34: #{tpu_custom_call.1} parent=11 // pred_check_branch
          %299 = sbr.rel (%p297) target = $region36
        $region35: #{tpu_custom_call.1} parent=11 // pred_region
          %s301 = ssub.s32 32, 32
          %302 = vsyncadd [#allocation13], %s301
          %s304 = sshll.u32 [#allocation14], 4
          %s305 = int_to_ptr.vmem [resolvable:$true] %s304
          %307 = dma.hbm_to_vmem [thread:$0]  %s6, 32, %s305, [#allocation13]
        $region36: #{tpu_custom_call.1} parent=11 // pred_fallthru
          _
        // Predicated region
        $region37: #{tpu_custom_call.1} parent=11 // pred_check
          %p308 = pneg %p197
        $region38: #{tpu_custom_call.1} parent=11 // pred_check_branch
          %310 = sbr.rel (%p308) target = $region40
        $region39: #{tpu_custom_call.1} parent=11 // pred_region
          _
        $region40: #{tpu_custom_call.1} parent=11 // pred_fallthru
          _
      $region12: #{tpu_custom_call.1} parent=5 // pred_fallthru
        _
      %p311 = scmp.lt.s32.totalorder %s24, 4
      // Predicated region
      $region41: #{tpu_custom_call.1} parent=5 // pred_check
        %p312 = pneg %p311
      $region42: #{tpu_custom_call.1} parent=5 // pred_check_branch
        %314 = sbr.rel (%p312) target = $region44
      $region43: #{tpu_custom_call.1} parent=5 // pred_region
        // Predicated region
        $region45: #{tpu_custom_call.1} parent=43 // pred_check
          %p315 = pneg %p44
        $region46: #{tpu_custom_call.1} parent=43 // pred_check_branch
          %317 = sbr.rel (%p315) target = $region48
        $region47: #{tpu_custom_call.1} parent=43 // pred_region
          #allocation17 [shape = 'u32[6]{0}', space=smem, size = 0x18, scoped, tag = 'DMA stride descriptor']
          %s318 = sand.u32 %s34, 1
          %s319 = scalar_lea.sflag [#allocation4], %s318
          %s320 = sand.u32 %s34, 1
          %s321 = smul.addr %s320, 256
          %s322 = scalar_lea.vmem [#allocation3], %s321
          %s323 = smul.u32 16, %s24
          %s325 = ssub.s32 4096, 4096
          %326 = vsyncadd %s319, %s325
          %s327 = smul.addr %s323, 2
          %s328 = smul.addr %s327, 64
          %s329 = scalar_lea.hbm %s0, %s328
          %s331 = sshll.u32 1, 14
          %s332 = sxor.u32 4294967295, %s331
          %s334 = sld [smem:[#allocation0]]
          %s335 = sadd.s32 2, %s334
          %s337 = sshll.u32 7, 26
          %s338 = sxor.u32 4294967295, %s337
          %s339 = sand.u32 0, %s338
          %s340 = sshll.u32 %s335, 26
          %s341 = sor.u32 %s339, %s340
          %s342 = sshll.u32 %s322, 4
          %s343 = int_to_ptr.vmem [resolvable:$true] %s342
          %349 = sst [smem:[#allocation17]] 8192
          %s350 = scalar_lea.smem [#allocation17], 1
          %351 = sst [smem:[%s350]] 2048
          %s352 = scalar_lea.smem [#allocation17], 2
          %353 = sst [smem:[%s352]] 16
          %s354 = scalar_lea.smem [#allocation17], 3
          %355 = sst [smem:[%s354]] 128
          %s356 = scalar_lea.smem [#allocation17], 4
          %357 = sst [smem:[%s356]] 128
          %s358 = scalar_lea.smem [#allocation17], 5
          %359 = sst [smem:[%s358]] 8
          %361 = dma.general %s329, 4096, %s343, %s319, [#allocation16], [#allocation17], %s341, 0
        $region48: #{tpu_custom_call.1} parent=43 // pred_fallthru
          _
      $region44: #{tpu_custom_call.1} parent=5 // pred_fallthru
        _
      %p362 = scmp.le.s32.totalorder 1, %s24
      %p363 = scmp.lt.s32.totalorder %s24, 5
      %p364 = pnand %p362, %p363
      %p365 = pneg %p364
      // Predicated region
      $region49: #{tpu_custom_call.1} parent=5 // pred_check
        _
      $region50: #{tpu_custom_call.1} parent=5 // pred_check_branch
        %367 = sbr.rel (%p364) target = $region52
      $region51: #{tpu_custom_call.1} parent=5 // pred_region
        %s368 = ssub.s32 %s24, 1
        %s369 = sand.u32 %s37, 1
        %s370 = scalar_lea.sflag [#allocation4], %s369
        %s371 = sand.u32 %s37, 1
        %s372 = smul.addr %s371, 256
        %s373 = scalar_lea.vmem [#allocation3], %s372
        // Predicated region
        $region53: #{tpu_custom_call.1} parent=51 // pred_check
          %p374 = pneg %p50
        $region54: #{tpu_custom_call.1} parent=51 // pred_check_branch
          %376 = sbr.rel (%p374) target = $region56
        $region55: #{tpu_custom_call.1} parent=51 // pred_region
          %377 = dma.done %s370, 4096
        $region56: #{tpu_custom_call.1} parent=51 // pred_fallthru
          _
        // Predicated region
        $region57: #{tpu_custom_call.1} parent=51 // pred_check
          %p378 = pneg %p71
        $region58: #{tpu_custom_call.1} parent=51 // pred_check_branch
          %380 = sbr.rel (%p378) target = $region60
        $region59: #{tpu_custom_call.1} parent=51 // pred_region
          %381 = dma.done [#allocation7], 4096
        $region60: #{tpu_custom_call.1} parent=51 // pred_fallthru
          _
        // Predicated region
        $region61: #{tpu_custom_call.1} parent=51 // pred_check
          %p382 = pneg %p92
        $region62: #{tpu_custom_call.1} parent=51 // pred_check_branch
          %384 = sbr.rel (%p382) target = $region64
        $region63: #{tpu_custom_call.1} parent=51 // pred_region
          %385 = dma.done [#allocation7], 32
        $region64: #{tpu_custom_call.1} parent=51 // pred_fallthru
          _
        // Predicated region
        $region65: #{tpu_custom_call.1} parent=51 // pred_check
          %p386 = pneg %p113
        $region66: #{tpu_custom_call.1} parent=51 // pred_check_branch
          %388 = sbr.rel (%p386) target = $region68
        $region67: #{tpu_custom_call.1} parent=51 // pred_region
          %389 = dma.done [#allocation10], 4096
        $region68: #{tpu_custom_call.1} parent=51 // pred_fallthru
          _
        // Predicated region
        $region69: #{tpu_custom_call.1} parent=51 // pred_check
          %p390 = pneg %p134
        $region70: #{tpu_custom_call.1} parent=51 // pred_check_branch
          %392 = sbr.rel (%p390) target = $region72
        $region71: #{tpu_custom_call.1} parent=51 // pred_region
          %393 = dma.done [#allocation10], 32
        $region72: #{tpu_custom_call.1} parent=51 // pred_fallthru
          _
        // Predicated region
        $region73: #{tpu_custom_call.1} parent=51 // pred_check
          %p394 = pneg %p155
        $region74: #{tpu_custom_call.1} parent=51 // pred_check_branch
          %396 = sbr.rel (%p394) target = $region76
        $region75: #{tpu_custom_call.1} parent=51 // pred_region
          %397 = dma.done [#allocation13], 32
        $region76: #{tpu_custom_call.1} parent=51 // pred_fallthru
          _
        // Predicated region
        $region77: #{tpu_custom_call.1} parent=51 // pred_check
          %p398 = pneg %p176
        $region78: #{tpu_custom_call.1} parent=51 // pred_check_branch
          %400 = sbr.rel (%p398) target = $region80
        $region79: #{tpu_custom_call.1} parent=51 // pred_region
          %401 = dma.done [#allocation13], 32
        $region80: #{tpu_custom_call.1} parent=51 // pred_fallthru
          _
        %s402 = sand.u32 %s37, 1
        %s403 = scalar_lea.sflag [#allocation4], %s402
        %s404 = sand.u32 %s37, 1
        %s405 = smul.addr %s404, 256
        %s406 = scalar_lea.vmem [#allocation3], %s405
        %p407 = pneg %p50
        %p408 = pneg %p47
        %p409 = pneg %p71
        %p410 = pneg %p68
        %p411 = pneg %p92
        %p412 = pneg %p89
        %p413 = pneg %p113
        %p414 = pneg %p110
        %p415 = pneg %p134
        %p416 = pneg %p131
        %p417 = pneg %p155
        %p418 = pneg %p152
        %p419 = pneg %p176
        %p420 = pneg %p173
        %p421 = pneg %p197
        %p422 = pneg %p194
        %p423 = pneg %p223
        %p424 = pneg %p220
        %s425 = sand.u32 %s210, 1
        %s426 = scalar_lea.sflag [#allocation5], %s425
        %s427 = sand.u32 %s210, 1
        %s428 = smul.addr %s427, 128
        %s429 = scalar_lea.vmem [#allocation15], %s428
        %s430 = smul.u32 16, %s29
        %s431 = smul.u32 16, %s29
        %v432 = vld [vmem:[%s373] sm:$0xff]
        %v433 = vld [vmem:[%s373 + $0x8] sm:$0xff]
        %v434 = vld [vmem:[%s373 + $0x10] sm:$0xff]
        %v435 = vld [vmem:[%s373 + $0x18] sm:$0xff]
        %v436 = vld [vmem:[%s373 + $0x20] sm:$0xff]
        %v437 = vld [vmem:[%s373 + $0x28] sm:$0xff]
        %v438 = vld [vmem:[%s373 + $0x30] sm:$0xff]
        %v439 = vld [vmem:[%s373 + $0x38] sm:$0xff]
        %v440 = vld [vmem:[%s373 + $0x40] sm:$0xff]
        %v441 = vld [vmem:[%s373 + $0x48] sm:$0xff]
        %v442 = vld [vmem:[%s373 + $0x50] sm:$0xff]
        %v443 = vld [vmem:[%s373 + $0x58] sm:$0xff]
        %v444 = vld [vmem:[%s373 + $0x60] sm:$0xff]
        %v445 = vld [vmem:[%s373 + $0x68] sm:$0xff]
        %v446 = vld [vmem:[%s373 + $0x70] sm:$0xff]
        %v447 = vld [vmem:[%s373 + $0x78] sm:$0xff]
        %v448 = vld [vmem:[#allocation6] sm:$0xff]
        %v449 = vld [vmem:[#allocation6 + $0x8] sm:$0xff]
        %v450 = vld [vmem:[#allocation6 + $0x10] sm:$0xff]
        %v451 = vld [vmem:[#allocation6 + $0x18] sm:$0xff]
        %v452 = vld [vmem:[#allocation6 + $0x20] sm:$0xff]
        %v453 = vld [vmem:[#allocation6 + $0x28] sm:$0xff]
        %v454 = vld [vmem:[#allocation6 + $0x30] sm:$0xff]
        %v455 = vld [vmem:[#allocation6 + $0x38] sm:$0xff]
        %v456 = vld [vmem:[#allocation6 + $0x40] sm:$0xff]
        %v457 = vld [vmem:[#allocation6 + $0x48] sm:$0xff]
        %v458 = vld [vmem:[#allocation6 + $0x50] sm:$0xff]
        %v459 = vld [vmem:[#allocation6 + $0x58] sm:$0xff]
        %v460 = vld [vmem:[#allocation6 + $0x60] sm:$0xff]
        %v461 = vld [vmem:[#allocation6 + $0x68] sm:$0xff]
        %v462 = vld [vmem:[#allocation6 + $0x70] sm:$0xff]
        %v463 = vld [vmem:[#allocation6 + $0x78] sm:$0xff]
        %v464 = vld [vmem:[#allocation6 + $0x80] sm:$0xff]
        %v465 = vld [vmem:[#allocation6 + $0x88] sm:$0xff]
        %v466 = vld [vmem:[#allocation6 + $0x90] sm:$0xff]
        %v467 = vld [vmem:[#allocation6 + $0x98] sm:$0xff]
        %v468 = vld [vmem:[#allocation6 + $0xa0] sm:$0xff]
        %v469 = vld [vmem:[#allocation6 + $0xa8] sm:$0xff]
        %v470 = vld [vmem:[#allocation6 + $0xb0] sm:$0xff]
        %v471 = vld [vmem:[#allocation6 + $0xb8] sm:$0xff]
        %v472 = vld [vmem:[#allocation6 + $0xc0] sm:$0xff]
        %v473 = vld [vmem:[#allocation6 + $0xc8] sm:$0xff]
        %v474 = vld [vmem:[#allocation6 + $0xd0] sm:$0xff]
        %v475 = vld [vmem:[#allocation6 + $0xd8] sm:$0xff]
        %v476 = vld [vmem:[#allocation6 + $0xe0] sm:$0xff]
        %v477 = vld [vmem:[#allocation6 + $0xe8] sm:$0xff]
        %v478 = vld [vmem:[#allocation6 + $0xf0] sm:$0xff]
        %v479 = vld [vmem:[#allocation6 + $0xf8] sm:$0xff]
        %v480 = vld [vmem:[#allocation8] sm:$0x3]
        %v482 = vlaneseq
        %v483 = vshrl.u32 %v482, 7
        %v484 = vsub.s32 0, %v483
        %v485 = vrot.slane %v480, %v484
        %v486 = vlaneseq
        %v487 = vshrl.u32 %v486, 7
        %v488 = vsub.s32 1, %v487
        %v489 = vrot.slane %v480, %v488
        %v508 = vunpack.c.l.b16 %v432
        %v509 = vunpack.c.h.b16 %v432
        %v510 = vunpack.c.l.b16 %v433
        %v511 = vunpack.c.h.b16 %v433
        %v512 = vunpack.c.l.b16 %v434
        %v513 = vunpack.c.h.b16 %v434
        %v514 = vunpack.c.l.b16 %v435
        %v515 = vunpack.c.h.b16 %v435
        %v516 = vunpack.c.l.b16 %v436
        %v517 = vunpack.c.h.b16 %v436
        %v518 = vunpack.c.l.b16 %v437
        %v519 = vunpack.c.h.b16 %v437
        %v520 = vunpack.c.l.b16 %v438
        %v521 = vunpack.c.h.b16 %v438
        %v522 = vunpack.c.l.b16 %v439
        %v523 = vunpack.c.h.b16 %v439
        %v524 = vunpack.c.l.b16 %v440
        %v525 = vunpack.c.h.b16 %v440
        %v526 = vunpack.c.l.b16 %v441
        %v527 = vunpack.c.h.b16 %v441
        %v528 = vunpack.c.l.b16 %v442
        %v529 = vunpack.c.h.b16 %v442
        %v530 = vunpack.c.l.b16 %v443
        %v531 = vunpack.c.h.b16 %v443
        %v532 = vunpack.c.l.b16 %v444
        %v533 = vunpack.c.h.b16 %v444
        %v534 = vunpack.c.l.b16 %v445
        %v535 = vunpack.c.h.b16 %v445
        %v536 = vunpack.c.l.b16 %v446
        %v537 = vunpack.c.h.b16 %v446
        %v538 = vunpack.c.l.b16 %v447
        %v539 = vunpack.c.h.b16 %v447
        %v540 = vpack.c.b16 %v510, %v508
        %v541 = vpack.c.b16 %v511, %v509
        %v542 = vpack.c.b16 %v514, %v512
        %v543 = vpack.c.b16 %v515, %v513
        %v544 = vpack.c.b16 %v518, %v516
        %v545 = vpack.c.b16 %v519, %v517
        %v546 = vpack.c.b16 %v522, %v520
        %v547 = vpack.c.b16 %v523, %v521
        %v548 = vpack.c.b16 %v526, %v524
        %v549 = vpack.c.b16 %v527, %v525
        %v550 = vpack.c.b16 %v530, %v528
        %v551 = vpack.c.b16 %v531, %v529
        %v552 = vpack.c.b16 %v534, %v532
        %v553 = vpack.c.b16 %v535, %v533
        %v554 = vpack.c.b16 %v538, %v536
        %v555 = vpack.c.b16 %v539, %v537
        %v604 = vunpack.c.l.b16 %v448
        %v605 = vunpack.c.h.b16 %v448
        %v606 = vunpack.c.l.b16 %v449
        %v607 = vunpack.c.h.b16 %v449
        %v608 = vunpack.c.l.b16 %v450
        %v609 = vunpack.c.h.b16 %v450
        %v610 = vunpack.c.l.b16 %v451
        %v611 = vunpack.c.h.b16 %v451
        %v612 = vunpack.c.l.b16 %v452
        %v613 = vunpack.c.h.b16 %v452
        %v614 = vunpack.c.l.b16 %v453
        %v615 = vunpack.c.h.b16 %v453
        %v616 = vunpack.c.l.b16 %v454
        %v617 = vunpack.c.h.b16 %v454
        %v618 = vunpack.c.l.b16 %v455
        %v619 = vunpack.c.h.b16 %v455
        %v620 = vunpack.c.l.b16 %v456
        %v621 = vunpack.c.h.b16 %v456
        %v622 = vunpack.c.l.b16 %v457
        %v623 = vunpack.c.h.b16 %v457
        %v624 = vunpack.c.l.b16 %v458
        %v625 = vunpack.c.h.b16 %v458
        %v626 = vunpack.c.l.b16 %v459
        %v627 = vunpack.c.h.b16 %v459
        %v628 = vunpack.c.l.b16 %v460
        %v629 = vunpack.c.h.b16 %v460
        %v630 = vunpack.c.l.b16 %v461
        %v631 = vunpack.c.h.b16 %v461
        %v632 = vunpack.c.l.b16 %v462
        %v633 = vunpack.c.h.b16 %v462
        %v634 = vunpack.c.l.b16 %v463
        %v635 = vunpack.c.h.b16 %v463
        %v636 = vunpack.c.l.b16 %v464
        %v637 = vunpack.c.h.b16 %v464
        %v638 = vunpack.c.l.b16 %v465
        %v639 = vunpack.c.h.b16 %v465
        %v640 = vunpack.c.l.b16 %v466
        %v641 = vunpack.c.h.b16 %v466
        %v642 = vunpack.c.l.b16 %v467
        %v643 = vunpack.c.h.b16 %v467
        %v644 = vunpack.c.l.b16 %v468
        %v645 = vunpack.c.h.b16 %v468
        %v646 = vunpack.c.l.b16 %v469
        %v647 = vunpack.c.h.b16 %v469
        %v648 = vunpack.c.l.b16 %v470
        %v649 = vunpack.c.h.b16 %v470
        %v650 = vunpack.c.l.b16 %v471
        %v651 = vunpack.c.h.b16 %v471
        %v652 = vunpack.c.l.b16 %v472
        %v653 = vunpack.c.h.b16 %v472
        %v654 = vunpack.c.l.b16 %v473
        %v655 = vunpack.c.h.b16 %v473
        %v656 = vunpack.c.l.b16 %v474
        %v657 = vunpack.c.h.b16 %v474
        %v658 = vunpack.c.l.b16 %v475
        %v659 = vunpack.c.h.b16 %v475
        %v660 = vunpack.c.l.b16 %v476
        %v661 = vunpack.c.h.b16 %v476
        %v662 = vunpack.c.l.b16 %v477
        %v663 = vunpack.c.h.b16 %v477
        %v664 = vunpack.c.l.b16 %v478
        %v665 = vunpack.c.h.b16 %v478
        %v666 = vunpack.c.l.b16 %v479
        %v667 = vunpack.c.h.b16 %v479
        %v668 = vpack.c.b16 %v606, %v604
        %v669 = vpack.c.b16 %v607, %v605
        %v670 = vpack.c.b16 %v610, %v608
        %v671 = vpack.c.b16 %v611, %v609
        %v672 = vpack.c.b16 %v614, %v612
        %v673 = vpack.c.b16 %v615, %v613
        %v674 = vpack.c.b16 %v618, %v616
        %v675 = vpack.c.b16 %v619, %v617
        %v676 = vpack.c.b16 %v622, %v620
        %v677 = vpack.c.b16 %v623, %v621
        %v678 = vpack.c.b16 %v626, %v624
        %v679 = vpack.c.b16 %v627, %v625
        %v680 = vpack.c.b16 %v630, %v628
        %v681 = vpack.c.b16 %v631, %v629
        %v682 = vpack.c.b16 %v634, %v632
        %v683 = vpack.c.b16 %v635, %v633
        %v684 = vpack.c.b16 %v638, %v636
        %v685 = vpack.c.b16 %v639, %v637
        %v686 = vpack.c.b16 %v642, %v640
        %v687 = vpack.c.b16 %v643, %v641
        %v688 = vpack.c.b16 %v646, %v644
        %v689 = vpack.c.b16 %v647, %v645
        %v690 = vpack.c.b16 %v650, %v648
        %v691 = vpack.c.b16 %v651, %v649
        %v692 = vpack.c.b16 %v654, %v652
        %v693 = vpack.c.b16 %v655, %v653
        %v694 = vpack.c.b16 %v658, %v656
        %v695 = vpack.c.b16 %v659, %v657
        %v696 = vpack.c.b16 %v662, %v660
        %v697 = vpack.c.b16 %v663, %v661
        %v698 = vpack.c.b16 %v666, %v664
        %v699 = vpack.c.b16 %v667, %v665
        %732 = vmatprep.subr.bf16.mxu0 %v669
        %733 = vmatpush1.bf16.msra.mxu0 %v668
        %734 = vmatprep.subr.bf16.mxu0 %v671
        %735 = vmatpush1.bf16.msra.mxu0 %v670
        %736 = vmatprep.subr.bf16.mxu0 %v673
        %737 = vmatpush1.bf16.msra.mxu0 %v672
        %738 = vmatprep.subr.bf16.mxu0 %v675
        %739 = vmatpush1.bf16.msra.mxu0 %v674
        %740 = vmatprep.subr.bf16.mxu0 %v677
        %741 = vmatpush1.bf16.msra.mxu0 %v676
        %742 = vmatprep.subr.bf16.mxu0 %v679
        %743 = vmatpush1.bf16.msra.mxu0 %v678
        %744 = vmatprep.subr.bf16.mxu0 %v681
        %745 = vmatpush1.bf16.msra.mxu0 %v680
        %746 = vmatprep.subr.bf16.mxu0 %v683
        %747 = vmatpush1.bf16.msra.mxu0 %v682
        %748 = vmatprep.subr.bf16.mxu0 %v685
        %749 = vmatpush1.bf16.msra.mxu0 %v684
        %750 = vmatprep.subr.bf16.mxu0 %v687
        %751 = vmatpush1.bf16.msra.mxu0 %v686
        %752 = vmatprep.subr.bf16.mxu0 %v689
        %753 = vmatpush1.bf16.msra.mxu0 %v688
        %754 = vmatprep.subr.bf16.mxu0 %v691
        %755 = vmatpush1.bf16.msra.mxu0 %v690
        %756 = vmatprep.subr.bf16.mxu0 %v693
        %757 = vmatpush1.bf16.msra.mxu0 %v692
        %758 = vmatprep.subr.bf16.mxu0 %v695
        %759 = vmatpush1.bf16.msra.mxu0 %v694
        %760 = vmatprep.subr.bf16.mxu0 %v697
        %761 = vmatpush1.bf16.msra.mxu0 %v696
        %762 = vmatprep.subr.bf16.mxu0 %v699
        %763 = vmatpush1.bf16.msra.mxu0 %v698
        %764 = vmatprep.mubr.bf16.mxu0 %v541
        %765 = vmatmul.mubr.bf16.gmra.mrb[0].mxu0 %v540
        %v766 = vpop.f32.mrb[0].mxu0
        %v767 = vadd.f32 %v485, %v766
        %v768 = vpop.f32.mrb[0].mxu0
        %v769 = vadd.f32 %v489, %v768
        %v770 = vpop.f32.mrb[0].mxu0
        %v771 = vadd.f32 %v485, %v770
        %v772 = vpop.f32.mrb[0].mxu0
        %v773 = vadd.f32 %v489, %v772
        %774 = vmatprep.mubr.bf16.mxu0 %v543
        %775 = vmatmul.mubr.bf16.gmra.mrb[0].mxu0 %v542
        %v776 = vpop.f32.mrb[0].mxu0
        %v777 = vadd.f32 %v485, %v776
        %v778 = vpop.f32.mrb[0].mxu0
        %v779 = vadd.f32 %v489, %v778
        %v780 = vpop.f32.mrb[0].mxu0
        %v781 = vadd.f32 %v485, %v780
        %v782 = vpop.f32.mrb[0].mxu0
        %v783 = vadd.f32 %v489, %v782
        %784 = vmatprep.mubr.bf16.mxu0 %v545
        %785 = vmatmul.mubr.bf16.gmra.mrb[0].mxu0 %v544
        %v786 = vpop.f32.mrb[0].mxu0
        %v787 = vadd.f32 %v485, %v786
        %v788 = vpop.f32.mrb[0].mxu0
        %v789 = vadd.f32 %v489, %v788
        %v790 = vpop.f32.mrb[0].mxu0
        %v791 = vadd.f32 %v485, %v790
        %v792 = vpop.f32.mrb[0].mxu0
        %v793 = vadd.f32 %v489, %v792
        %794 = vmatprep.mubr.bf16.mxu0 %v547
        %795 = vmatmul.mubr.bf16.gmra.mrb[0].mxu0 %v546
        %v796 = vpop.f32.mrb[0].mxu0
        %v797 = vadd.f32 %v485, %v796
        %v798 = vpop.f32.mrb[0].mxu0
        %v799 = vadd.f32 %v489, %v798
        %v800 = vpop.f32.mrb[0].mxu0
        %v801 = vadd.f32 %v485, %v800
        %v802 = vpop.f32.mrb[0].mxu0
        %v803 = vadd.f32 %v489, %v802
        %804 = vmatprep.mubr.bf16.mxu0 %v549
        %805 = vmatmul.mubr.bf16.gmra.mrb[0].mxu0 %v548
        %v806 = vpop.f32.mrb[0].mxu0
        %v807 = vadd.f32 %v485, %v806
        %v808 = vpop.f32.mrb[0].mxu0
        %v809 = vadd.f32 %v489, %v808
        %v810 = vpop.f32.mrb[0].mxu0
        %v811 = vadd.f32 %v485, %v810
        %v812 = vpop.f32.mrb[0].mxu0
        %v813 = vadd.f32 %v489, %v812
        %814 = vmatprep.mubr.bf16.mxu0 %v551
        %815 = vmatmul.mubr.bf16.gmra.mrb[0].mxu0 %v550
        %v816 = vpop.f32.mrb[0].mxu0
        %v817 = vadd.f32 %v485, %v816
        %v818 = vpop.f32.mrb[0].mxu0
        %v819 = vadd.f32 %v489, %v818
        %v820 = vpop.f32.mrb[0].mxu0
        %v821 = vadd.f32 %v485, %v820
        %v822 = vpop.f32.mrb[0].mxu0
        %v823 = vadd.f32 %v489, %v822
        %824 = vmatprep.mubr.bf16.mxu0 %v553
        %825 = vmatmul.mubr.bf16.gmra.mrb[0].mxu0 %v552
        %v826 = vpop.f32.mrb[0].mxu0
        %v827 = vadd.f32 %v485, %v826
        %v828 = vpop.f32.mrb[0].mxu0
        %v829 = vadd.f32 %v489, %v828
        %v830 = vpop.f32.mrb[0].mxu0
        %v831 = vadd.f32 %v485, %v830
        %v832 = vpop.f32.mrb[0].mxu0
        %v833 = vadd.f32 %v489, %v832
        %834 = vmatprep.mubr.bf16.mxu0 %v555
        %835 = vmatmul.mubr.bf16.gmra.mrb[0].mxu0 %v554
        %v836 = vpop.f32.mrb[0].mxu0
        %v837 = vadd.f32 %v485, %v836
        %v838 = vpop.f32.mrb[0].mxu0
        %v839 = vadd.f32 %v489, %v838
        %v840 = vpop.f32.mrb[0].mxu0
        %v841 = vadd.f32 %v485, %v840
        %v842 = vpop.f32.mrb[0].mxu0
        %v843 = vadd.f32 %v489, %v842
        %844 = vdwg.mxu0
        %v845 = vmax.f32 %v767, 0.0
        %v846 = vmax.f32 %v769, 0.0
        %v847 = vmax.f32 %v771, 0.0
        %v848 = vmax.f32 %v773, 0.0
        %v849 = vmax.f32 %v777, 0.0
        %v850 = vmax.f32 %v779, 0.0
        %v851 = vmax.f32 %v781, 0.0
        %v852 = vmax.f32 %v783, 0.0
        %v853 = vmax.f32 %v787, 0.0
        %v854 = vmax.f32 %v789, 0.0
        %v855 = vmax.f32 %v791, 0.0
        %v856 = vmax.f32 %v793, 0.0
        %v857 = vmax.f32 %v797, 0.0
        %v858 = vmax.f32 %v799, 0.0
        %v859 = vmax.f32 %v801, 0.0
        %v860 = vmax.f32 %v803, 0.0
        %v861 = vmax.f32 %v807, 0.0
        %v862 = vmax.f32 %v809, 0.0
        %v863 = vmax.f32 %v811, 0.0
        %v864 = vmax.f32 %v813, 0.0
        %v865 = vmax.f32 %v817, 0.0
        %v866 = vmax.f32 %v819, 0.0
        %v867 = vmax.f32 %v821, 0.0
        %v868 = vmax.f32 %v823, 0.0
        %v869 = vmax.f32 %v827, 0.0
        %v870 = vmax.f32 %v829, 0.0
        %v871 = vmax.f32 %v831, 0.0
        %v872 = vmax.f32 %v833, 0.0
        %v873 = vmax.f32 %v837, 0.0
        %v874 = vmax.f32 %v839, 0.0
        %v875 = vmax.f32 %v841, 0.0
        %v876 = vmax.f32 %v843, 0.0
        %v877 = vld [vmem:[#allocation12] sm:$0x3]
        %v879 = vlaneseq
        %v880 = vshrl.u32 %v879, 7
        %v881 = vsub.s32 0, %v880
        %v882 = vrot.slane %v877, %v881
        %v883 = vlaneseq
        %v884 = vshrl.u32 %v883, 7
        %v885 = vsub.s32 1, %v884
        %v886 = vrot.slane %v877, %v885
        %v889 = vmul.f32 %v845, %v882
        %v890 = vmul.f32 %v846, %v886
        %v891 = vmul.f32 %v847, %v882
        %v892 = vmul.f32 %v848, %v886
        %v893 = vmul.f32 %v849, %v882
        %v894 = vmul.f32 %v850, %v886
        %v895 = vmul.f32 %v851, %v882
        %v896 = vmul.f32 %v852, %v886
        %v897 = vmul.f32 %v853, %v882
        %v898 = vmul.f32 %v854, %v886
        %v899 = vmul.f32 %v855, %v882
        %v900 = vmul.f32 %v856, %v886
        %v901 = vmul.f32 %v857, %v882
        %v902 = vmul.f32 %v858, %v886
        %v903 = vmul.f32 %v859, %v882
        %v904 = vmul.f32 %v860, %v886
        %v905 = vmul.f32 %v861, %v882
        %v906 = vmul.f32 %v862, %v886
        %v907 = vmul.f32 %v863, %v882
        %v908 = vmul.f32 %v864, %v886
        %v909 = vmul.f32 %v865, %v882
        %v910 = vmul.f32 %v866, %v886
        %v911 = vmul.f32 %v867, %v882
        %v912 = vmul.f32 %v868, %v886
        %v913 = vmul.f32 %v869, %v882
        %v914 = vmul.f32 %v870, %v886
        %v915 = vmul.f32 %v871, %v882
        %v916 = vmul.f32 %v872, %v886
        %v917 = vmul.f32 %v873, %v882
        %v918 = vmul.f32 %v874, %v886
        %v919 = vmul.f32 %v875, %v882
        %v920 = vmul.f32 %v876, %v886
        %v921 = vadd.f32 %v889, %v890
        %922 = vadd.xlane.f32.xlu0 %v921
        %v923 = vpop.xlane.xlu0 %922
        %v924 = vadd.f32 %v891, %v892
        %925 = vadd.xlane.f32.xlu0 %v924
        %v926 = vpop.xlane.xlu0 %925
        %v927 = vadd.f32 %v893, %v894
        %928 = vadd.xlane.f32.xlu0 %v927
        %v929 = vpop.xlane.xlu0 %928
        %v930 = vadd.f32 %v895, %v896
        %931 = vadd.xlane.f32.xlu0 %v930
        %v932 = vpop.xlane.xlu0 %931
        %v933 = vadd.f32 %v897, %v898
        %934 = vadd.xlane.f32.xlu0 %v933
        %v935 = vpop.xlane.xlu0 %934
        %v936 = vadd.f32 %v899, %v900
        %937 = vadd.xlane.f32.xlu0 %v936
        %v938 = vpop.xlane.xlu0 %937
        %v939 = vadd.f32 %v901, %v902
        %940 = vadd.xlane.f32.xlu0 %v939
        %v941 = vpop.xlane.xlu0 %940
        %v942 = vadd.f32 %v903, %v904
        %943 = vadd.xlane.f32.xlu0 %v942
        %v944 = vpop.xlane.xlu0 %943
        %v945 = vadd.f32 %v905, %v906
        %946 = vadd.xlane.f32.xlu0 %v945
        %v947 = vpop.xlane.xlu0 %946
        %v948 = vadd.f32 %v907, %v908
        %949 = vadd.xlane.f32.xlu0 %v948
        %v950 = vpop.xlane.xlu0 %949
        %v951 = vadd.f32 %v909, %v910
        %952 = vadd.xlane.f32.xlu0 %v951
        %v953 = vpop.xlane.xlu0 %952
        %v954 = vadd.f32 %v911, %v912
        %955 = vadd.xlane.f32.xlu0 %v954
        %v956 = vpop.xlane.xlu0 %955
        %v957 = vadd.f32 %v913, %v914
        %958 = vadd.xlane.f32.xlu0 %v957
        %v959 = vpop.xlane.xlu0 %958
        %v960 = vadd.f32 %v915, %v916
        %961 = vadd.xlane.f32.xlu0 %v960
        %v962 = vpop.xlane.xlu0 %961
        %v963 = vadd.f32 %v917, %v918
        %964 = vadd.xlane.f32.xlu0 %v963
        %v965 = vpop.xlane.xlu0 %964
        %v966 = vadd.f32 %v919, %v920
        %967 = vadd.xlane.f32.xlu0 %v966
        %v968 = vpop.xlane.xlu0 %967
        %s969 = scalar_lea.vmem %s373, 128 [#allocation3]
        %v970 = vld [vmem:[%s969] sm:$0xff]
        %v971 = vld [vmem:[%s969 + $0x8] sm:$0xff]
        %v972 = vld [vmem:[%s969 + $0x10] sm:$0xff]
        %v973 = vld [vmem:[%s969 + $0x18] sm:$0xff]
        %v974 = vld [vmem:[%s969 + $0x20] sm:$0xff]
        %v975 = vld [vmem:[%s969 + $0x28] sm:$0xff]
        %v976 = vld [vmem:[%s969 + $0x30] sm:$0xff]
        %v977 = vld [vmem:[%s969 + $0x38] sm:$0xff]
        %v978 = vld [vmem:[%s969 + $0x40] sm:$0xff]
        %v979 = vld [vmem:[%s969 + $0x48] sm:$0xff]
        %v980 = vld [vmem:[%s969 + $0x50] sm:$0xff]
        %v981 = vld [vmem:[%s969 + $0x58] sm:$0xff]
        %v982 = vld [vmem:[%s969 + $0x60] sm:$0xff]
        %v983 = vld [vmem:[%s969 + $0x68] sm:$0xff]
        %v984 = vld [vmem:[%s969 + $0x70] sm:$0xff]
        %v985 = vld [vmem:[%s969 + $0x78] sm:$0xff]
        %v986 = vld [vmem:[#allocation9] sm:$0xff]
        %v987 = vld [vmem:[#allocation9 + $0x8] sm:$0xff]
        %v988 = vld [vmem:[#allocation9 + $0x10] sm:$0xff]
        %v989 = vld [vmem:[#allocation9 + $0x18] sm:$0xff]
        %v990 = vld [vmem:[#allocation9 + $0x20] sm:$0xff]
        %v991 = vld [vmem:[#allocation9 + $0x28] sm:$0xff]
        %v992 = vld [vmem:[#allocation9 + $0x30] sm:$0xff]
        %v993 = vld [vmem:[#allocation9 + $0x38] sm:$0xff]
        %v994 = vld [vmem:[#allocation9 + $0x40] sm:$0xff]
        %v995 = vld [vmem:[#allocation9 + $0x48] sm:$0xff]
        %v996 = vld [vmem:[#allocation9 + $0x50] sm:$0xff]
        %v997 = vld [vmem:[#allocation9 + $0x58] sm:$0xff]
        %v998 = vld [vmem:[#allocation9 + $0x60] sm:$0xff]
        %v999 = vld [vmem:[#allocation9 + $0x68] sm:$0xff]
        %v1000 = vld [vmem:[#allocation9 + $0x70] sm:$0xff]
        %v1001 = vld [vmem:[#allocation9 + $0x78] sm:$0xff]
        %v1002 = vld [vmem:[#allocation9 + $0x80] sm:$0xff]
        %v1003 = vld [vmem:[#allocation9 + $0x88] sm:$0xff]
        %v1004 = vld [vmem:[#allocation9 + $0x90] sm:$0xff]
        %v1005 = vld [vmem:[#allocation9 + $0x98] sm:$0xff]
        %v1006 = vld [vmem:[#allocation9 + $0xa0] sm:$0xff]
        %v1007 = vld [vmem:[#allocation9 + $0xa8] sm:$0xff]
        %v1008 = vld [vmem:[#allocation9 + $0xb0] sm:$0xff]
        %v1009 = vld [vmem:[#allocation9 + $0xb8] sm:$0xff]
        %v1010 = vld [vmem:[#allocation9 + $0xc0] sm:$0xff]
        %v1011 = vld [vmem:[#allocation9 + $0xc8] sm:$0xff]
        %v1012 = vld [vmem:[#allocation9 + $0xd0] sm:$0xff]
        %v1013 = vld [vmem:[#allocation9 + $0xd8] sm:$0xff]
        %v1014 = vld [vmem:[#allocation9 + $0xe0] sm:$0xff]
        %v1015 = vld [vmem:[#allocation9 + $0xe8] sm:$0xff]
        %v1016 = vld [vmem:[#allocation9 + $0xf0] sm:$0xff]
        %v1017 = vld [vmem:[#allocation9 + $0xf8] sm:$0xff]
        %v1018 = vld [vmem:[#allocation11] sm:$0x3]
        %v1020 = vlaneseq
        %v1021 = vshrl.u32 %v1020, 7
        %v1022 = vsub.s32 0, %v1021
        %v1023 = vrot.slane %v1018, %v1022
        %v1024 = vlaneseq
        %v1025 = vshrl.u32 %v1024, 7
        %v1026 = vsub.s32 1, %v1025
        %v1027 = vrot.slane %v1018, %v1026
        %v1046 = vunpack.c.l.b16 %v970
        %v1047 = vunpack.c.h.b16 %v970
        %v1048 = vunpack.c.l.b16 %v971
        %v1049 = vunpack.c.h.b16 %v971
        %v1050 = vunpack.c.l.b16 %v972
        %v1051 = vunpack.c.h.b16 %v972
        %v1052 = vunpack.c.l.b16 %v973
        %v1053 = vunpack.c.h.b16 %v973
        %v1054 = vunpack.c.l.b16 %v974
        %v1055 = vunpack.c.h.b16 %v974
        %v1056 = vunpack.c.l.b16 %v975
        %v1057 = vunpack.c.h.b16 %v975
        %v1058 = vunpack.c.l.b16 %v976
        %v1059 = vunpack.c.h.b16 %v976
        %v1060 = vunpack.c.l.b16 %v977
        %v1061 = vunpack.c.h.b16 %v977
        %v1062 = vunpack.c.l.b16 %v978
        %v1063 = vunpack.c.h.b16 %v978
        %v1064 = vunpack.c.l.b16 %v979
        %v1065 = vunpack.c.h.b16 %v979
        %v1066 = vunpack.c.l.b16 %v980
        %v1067 = vunpack.c.h.b16 %v980
        %v1068 = vunpack.c.l.b16 %v981
        %v1069 = vunpack.c.h.b16 %v981
        %v1070 = vunpack.c.l.b16 %v982
        %v1071 = vunpack.c.h.b16 %v982
        %v1072 = vunpack.c.l.b16 %v983
        %v1073 = vunpack.c.h.b16 %v983
        %v1074 = vunpack.c.l.b16 %v984
        %v1075 = vunpack.c.h.b16 %v984
        %v1076 = vunpack.c.l.b16 %v985
        %v1077 = vunpack.c.h.b16 %v985
        %v1078 = vpack.c.b16 %v1048, %v1046
        %v1079 = vpack.c.b16 %v1049, %v1047
        %v1080 = vpack.c.b16 %v1052, %v1050
        %v1081 = vpack.c.b16 %v1053, %v1051
        %v1082 = vpack.c.b16 %v1056, %v1054
        %v1083 = vpack.c.b16 %v1057, %v1055
        %v1084 = vpack.c.b16 %v1060, %v1058
        %v1085 = vpack.c.b16 %v1061, %v1059
        %v1086 = vpack.c.b16 %v1064, %v1062
        %v1087 = vpack.c.b16 %v1065, %v1063
        %v1088 = vpack.c.b16 %v1068, %v1066
        %v1089 = vpack.c.b16 %v1069, %v1067
        %v1090 = vpack.c.b16 %v1072, %v1070
        %v1091 = vpack.c.b16 %v1073, %v1071
        %v1092 = vpack.c.b16 %v1076, %v1074
        %v1093 = vpack.c.b16 %v1077, %v1075
        %v1142 = vunpack.c.l.b16 %v986
        %v1143 = vunpack.c.h.b16 %v986
        %v1144 = vunpack.c.l.b16 %v987
        %v1145 = vunpack.c.h.b16 %v987
        %v1146 = vunpack.c.l.b16 %v988
        %v1147 = vunpack.c.h.b16 %v988
        %v1148 = vunpack.c.l.b16 %v989
        %v1149 = vunpack.c.h.b16 %v989
        %v1150 = vunpack.c.l.b16 %v990
        %v1151 = vunpack.c.h.b16 %v990
        %v1152 = vunpack.c.l.b16 %v991
        %v1153 = vunpack.c.h.b16 %v991
        %v1154 = vunpack.c.l.b16 %v992
        %v1155 = vunpack.c.h.b16 %v992
        %v1156 = vunpack.c.l.b16 %v993
        %v1157 = vunpack.c.h.b16 %v993
        %v1158 = vunpack.c.l.b16 %v994
        %v1159 = vunpack.c.h.b16 %v994
        %v1160 = vunpack.c.l.b16 %v995
        %v1161 = vunpack.c.h.b16 %v995
        %v1162 = vunpack.c.l.b16 %v996
        %v1163 = vunpack.c.h.b16 %v996
        %v1164 = vunpack.c.l.b16 %v997
        %v1165 = vunpack.c.h.b16 %v997
        %v1166 = vunpack.c.l.b16 %v998
        %v1167 = vunpack.c.h.b16 %v998
        %v1168 = vunpack.c.l.b16 %v999
        %v1169 = vunpack.c.h.b16 %v999
        %v1170 = vunpack.c.l.b16 %v1000
        %v1171 = vunpack.c.h.b16 %v1000
        %v1172 = vunpack.c.l.b16 %v1001
        %v1173 = vunpack.c.h.b16 %v1001
        %v1174 = vunpack.c.l.b16 %v1002
        %v1175 = vunpack.c.h.b16 %v1002
        %v1176 = vunpack.c.l.b16 %v1003
        %v1177 = vunpack.c.h.b16 %v1003
        %v1178 = vunpack.c.l.b16 %v1004
        %v1179 = vunpack.c.h.b16 %v1004
        %v1180 = vunpack.c.l.b16 %v1005
        %v1181 = vunpack.c.h.b16 %v1005
        %v1182 = vunpack.c.l.b16 %v1006
        %v1183 = vunpack.c.h.b16 %v1006
        %v1184 = vunpack.c.l.b16 %v1007
        %v1185 = vunpack.c.h.b16 %v1007
        %v1186 = vunpack.c.l.b16 %v1008
        %v1187 = vunpack.c.h.b16 %v1008
        %v1188 = vunpack.c.l.b16 %v1009
        %v1189 = vunpack.c.h.b16 %v1009
        %v1190 = vunpack.c.l.b16 %v1010
        %v1191 = vunpack.c.h.b16 %v1010
        %v1192 = vunpack.c.l.b16 %v1011
        %v1193 = vunpack.c.h.b16 %v1011
        %v1194 = vunpack.c.l.b16 %v1012
        %v1195 = vunpack.c.h.b16 %v1012
        %v1196 = vunpack.c.l.b16 %v1013
        %v1197 = vunpack.c.h.b16 %v1013
        %v1198 = vunpack.c.l.b16 %v1014
        %v1199 = vunpack.c.h.b16 %v1014
        %v1200 = vunpack.c.l.b16 %v1015
        %v1201 = vunpack.c.h.b16 %v1015
        %v1202 = vunpack.c.l.b16 %v1016
        %v1203 = vunpack.c.h.b16 %v1016
        %v1204 = vunpack.c.l.b16 %v1017
        %v1205 = vunpack.c.h.b16 %v1017
        %v1206 = vpack.c.b16 %v1144, %v1142
        %v1207 = vpack.c.b16 %v1145, %v1143
        %v1208 = vpack.c.b16 %v1148, %v1146
        %v1209 = vpack.c.b16 %v1149, %v1147
        %v1210 = vpack.c.b16 %v1152, %v1150
        %v1211 = vpack.c.b16 %v1153, %v1151
        %v1212 = vpack.c.b16 %v1156, %v1154
        %v1213 = vpack.c.b16 %v1157, %v1155
        %v1214 = vpack.c.b16 %v1160, %v1158
        %v1215 = vpack.c.b16 %v1161, %v1159
        %v1216 = vpack.c.b16 %v1164, %v1162
        %v1217 = vpack.c.b16 %v1165, %v1163
        %v1218 = vpack.c.b16 %v1168, %v1166
        %v1219 = vpack.c.b16 %v1169, %v1167
        %v1220 = vpack.c.b16 %v1172, %v1170
        %v1221 = vpack.c.b16 %v1173, %v1171
        %v1222 = vpack.c.b16 %v1176, %v1174
        %v1223 = vpack.c.b16 %v1177, %v1175
        %v1224 = vpack.c.b16 %v1180, %v1178
        %v1225 = vpack.c.b16 %v1181, %v1179
        %v1226 = vpack.c.b16 %v1184, %v1182
        %v1227 = vpack.c.b16 %v1185, %v1183
        %v1228 = vpack.c.b16 %v1188, %v1186
        %v1229 = vpack.c.b16 %v1189, %v1187
        %v1230 = vpack.c.b16 %v1192, %v1190
        %v1231 = vpack.c.b16 %v1193, %v1191
        %v1232 = vpack.c.b16 %v1196, %v1194
        %v1233 = vpack.c.b16 %v1197, %v1195
        %v1234 = vpack.c.b16 %v1200, %v1198
        %v1235 = vpack.c.b16 %v1201, %v1199
        %v1236 = vpack.c.b16 %v1204, %v1202
        %v1237 = vpack.c.b16 %v1205, %v1203
        %1270 = vmatprep.subr.bf16.mxu0 %v1207
        %1271 = vmatpush1.bf16.msra.mxu0 %v1206
        %1272 = vmatprep.subr.bf16.mxu0 %v1209
        %1273 = vmatpush1.bf16.msra.mxu0 %v1208
        %1274 = vmatprep.subr.bf16.mxu0 %v1211
        %1275 = vmatpush1.bf16.msra.mxu0 %v1210
        %1276 = vmatprep.subr.bf16.mxu0 %v1213
        %1277 = vmatpush1.bf16.msra.mxu0 %v1212
        %1278 = vmatprep.subr.bf16.mxu0 %v1215
        %1279 = vmatpush1.bf16.msra.mxu0 %v1214
        %1280 = vmatprep.subr.bf16.mxu0 %v1217
        %1281 = vmatpush1.bf16.msra.mxu0 %v1216
        %1282 = vmatprep.subr.bf16.mxu0 %v1219
        %1283 = vmatpush1.bf16.msra.mxu0 %v1218
        %1284 = vmatprep.subr.bf16.mxu0 %v1221
        %1285 = vmatpush1.bf16.msra.mxu0 %v1220
        %1286 = vmatprep.subr.bf16.mxu0 %v1223
        %1287 = vmatpush1.bf16.msra.mxu0 %v1222
        %1288 = vmatprep.subr.bf16.mxu0 %v1225
        %1289 = vmatpush1.bf16.msra.mxu0 %v1224
        %1290 = vmatprep.subr.bf16.mxu0 %v1227
        %1291 = vmatpush1.bf16.msra.mxu0 %v1226
        %1292 = vmatprep.subr.bf16.mxu0 %v1229
        %1293 = vmatpush1.bf16.msra.mxu0 %v1228
        %1294 = vmatprep.subr.bf16.mxu0 %v1231
        %1295 = vmatpush1.bf16.msra.mxu0 %v1230
        %1296 = vmatprep.subr.bf16.mxu0 %v1233
        %1297 = vmatpush1.bf16.msra.mxu0 %v1232
        %1298 = vmatprep.subr.bf16.mxu0 %v1235
        %1299 = vmatpush1.bf16.msra.mxu0 %v1234
        %1300 = vmatprep.subr.bf16.mxu0 %v1237
        %1301 = vmatpush1.bf16.msra.mxu0 %v1236
        %1302 = vmatprep.mubr.bf16.mxu0 %v1079
        %1303 = vmatmul.mubr.bf16.gmra.mrb[0].mxu0 %v1078
        %v1304 = vpop.f32.mrb[0].mxu0
        %v1305 = vadd.f32 %v1023, %v1304
        %v1306 = vpop.f32.mrb[0].mxu0
        %v1307 = vadd.f32 %v1027, %v1306
        %v1308 = vpop.f32.mrb[0].mxu0
        %v1309 = vadd.f32 %v1023, %v1308
        %v1310 = vpop.f32.mrb[0].mxu0
        %v1311 = vadd.f32 %v1027, %v1310
        %1312 = vmatprep.mubr.bf16.mxu0 %v1081
        %1313 = vmatmul.mubr.bf16.gmra.mrb[0].mxu0 %v1080
        %v1314 = vpop.f32.mrb[0].mxu0
        %v1315 = vadd.f32 %v1023, %v1314
        %v1316 = vpop.f32.mrb[0].mxu0
        %v1317 = vadd.f32 %v1027, %v1316
        %v1318 = vpop.f32.mrb[0].mxu0
        %v1319 = vadd.f32 %v1023, %v1318
        %v1320 = vpop.f32.mrb[0].mxu0
        %v1321 = vadd.f32 %v1027, %v1320
        %1322 = vmatprep.mubr.bf16.mxu0 %v1083
        %1323 = vmatmul.mubr.bf16.gmra.mrb[0].mxu0 %v1082
        %v1324 = vpop.f32.mrb[0].mxu0
        %v1325 = vadd.f32 %v1023, %v1324
        %v1326 = vpop.f32.mrb[0].mxu0
        %v1327 = vadd.f32 %v1027, %v1326
        %v1328 = vpop.f32.mrb[0].mxu0
        %v1329 = vadd.f32 %v1023, %v1328
        %v1330 = vpop.f32.mrb[0].mxu0
        %v1331 = vadd.f32 %v1027, %v1330
        %1332 = vmatprep.mubr.bf16.mxu0 %v1085
        %1333 = vmatmul.mubr.bf16.gmra.mrb[0].mxu0 %v1084
        %v1334 = vpop.f32.mrb[0].mxu0
        %v1335 = vadd.f32 %v1023, %v1334
        %v1336 = vpop.f32.mrb[0].mxu0
        %v1337 = vadd.f32 %v1027, %v1336
        %v1338 = vpop.f32.mrb[0].mxu0
        %v1339 = vadd.f32 %v1023, %v1338
        %v1340 = vpop.f32.mrb[0].mxu0
        %v1341 = vadd.f32 %v1027, %v1340
        %1342 = vmatprep.mubr.bf16.mxu0 %v1087
        %1343 = vmatmul.mubr.bf16.gmra.mrb[0].mxu0 %v1086
        %v1344 = vpop.f32.mrb[0].mxu0
        %v1345 = vadd.f32 %v1023, %v1344
        %v1346 = vpop.f32.mrb[0].mxu0
        %v1347 = vadd.f32 %v1027, %v1346
        %v1348 = vpop.f32.mrb[0].mxu0
        %v1349 = vadd.f32 %v1023, %v1348
        %v1350 = vpop.f32.mrb[0].mxu0
        %v1351 = vadd.f32 %v1027, %v1350
        %1352 = vmatprep.mubr.bf16.mxu0 %v1089
        %1353 = vmatmul.mubr.bf16.gmra.mrb[0].mxu0 %v1088
        %v1354 = vpop.f32.mrb[0].mxu0
        %v1355 = vadd.f32 %v1023, %v1354
        %v1356 = vpop.f32.mrb[0].mxu0
        %v1357 = vadd.f32 %v1027, %v1356
        %v1358 = vpop.f32.mrb[0].mxu0
        %v1359 = vadd.f32 %v1023, %v1358
        %v1360 = vpop.f32.mrb[0].mxu0
        %v1361 = vadd.f32 %v1027, %v1360
        %1362 = vmatprep.mubr.bf16.mxu0 %v1091
        %1363 = vmatmul.mubr.bf16.gmra.mrb[0].mxu0 %v1090
        %v1364 = vpop.f32.mrb[0].mxu0
        %v1365 = vadd.f32 %v1023, %v1364
        %v1366 = vpop.f32.mrb[0].mxu0
        %v1367 = vadd.f32 %v1027, %v1366
        %v1368 = vpop.f32.mrb[0].mxu0
        %v1369 = vadd.f32 %v1023, %v1368
        %v1370 = vpop.f32.mrb[0].mxu0
        %v1371 = vadd.f32 %v1027, %v1370
        %1372 = vmatprep.mubr.bf16.mxu0 %v1093
        %1373 = vmatmul.mubr.bf16.gmra.mrb[0].mxu0 %v1092
        %v1374 = vpop.f32.mrb[0].mxu0
        %v1375 = vadd.f32 %v1023, %v1374
        %v1376 = vpop.f32.mrb[0].mxu0
        %v1377 = vadd.f32 %v1027, %v1376
        %v1378 = vpop.f32.mrb[0].mxu0
        %v1379 = vadd.f32 %v1023, %v1378
        %v1380 = vpop.f32.mrb[0].mxu0
        %v1381 = vadd.f32 %v1027, %v1380
        %1382 = vdwg.mxu0
        %v1383 = vmax.f32 %v1305, 0.0
        %v1384 = vmax.f32 %v1307, 0.0
        %v1385 = vmax.f32 %v1309, 0.0
        %v1386 = vmax.f32 %v1311, 0.0
        %v1387 = vmax.f32 %v1315, 0.0
        %v1388 = vmax.f32 %v1317, 0.0
        %v1389 = vmax.f32 %v1319, 0.0
        %v1390 = vmax.f32 %v1321, 0.0
        %v1391 = vmax.f32 %v1325, 0.0
        %v1392 = vmax.f32 %v1327, 0.0
        %v1393 = vmax.f32 %v1329, 0.0
        %v1394 = vmax.f32 %v1331, 0.0
        %v1395 = vmax.f32 %v1335, 0.0
        %v1396 = vmax.f32 %v1337, 0.0
        %v1397 = vmax.f32 %v1339, 0.0
        %v1398 = vmax.f32 %v1341, 0.0
        %v1399 = vmax.f32 %v1345, 0.0
        %v1400 = vmax.f32 %v1347, 0.0
        %v1401 = vmax.f32 %v1349, 0.0
        %v1402 = vmax.f32 %v1351, 0.0
        %v1403 = vmax.f32 %v1355, 0.0
        %v1404 = vmax.f32 %v1357, 0.0
        %v1405 = vmax.f32 %v1359, 0.0
        %v1406 = vmax.f32 %v1361, 0.0
        %v1407 = vmax.f32 %v1365, 0.0
        %v1408 = vmax.f32 %v1367, 0.0
        %v1409 = vmax.f32 %v1369, 0.0
        %v1410 = vmax.f32 %v1371, 0.0
        %v1411 = vmax.f32 %v1375, 0.0
        %v1412 = vmax.f32 %v1377, 0.0
        %v1413 = vmax.f32 %v1379, 0.0
        %v1414 = vmax.f32 %v1381, 0.0
        %v1415 = vld [vmem:[#allocation14] sm:$0x3]
        %v1417 = vlaneseq
        %v1418 = vshrl.u32 %v1417, 7
        %v1419 = vsub.s32 0, %v1418
        %v1420 = vrot.slane %v1415, %v1419
        %v1421 = vlaneseq
        %v1422 = vshrl.u32 %v1421, 7
        %v1423 = vsub.s32 1, %v1422
        %v1424 = vrot.slane %v1415, %v1423
        %v1427 = vmul.f32 %v1383, %v1420
        %v1428 = vmul.f32 %v1384, %v1424
        %v1429 = vmul.f32 %v1385, %v1420
        %v1430 = vmul.f32 %v1386, %v1424
        %v1431 = vmul.f32 %v1387, %v1420
        %v1432 = vmul.f32 %v1388, %v1424
        %v1433 = vmul.f32 %v1389, %v1420
        %v1434 = vmul.f32 %v1390, %v1424
        %v1435 = vmul.f32 %v1391, %v1420
        %v1436 = vmul.f32 %v1392, %v1424
        %v1437 = vmul.f32 %v1393, %v1420
        %v1438 = vmul.f32 %v1394, %v1424
        %v1439 = vmul.f32 %v1395, %v1420
        %v1440 = vmul.f32 %v1396, %v1424
        %v1441 = vmul.f32 %v1397, %v1420
        %v1442 = vmul.f32 %v1398, %v1424
        %v1443 = vmul.f32 %v1399, %v1420
        %v1444 = vmul.f32 %v1400, %v1424
        %v1445 = vmul.f32 %v1401, %v1420
        %v1446 = vmul.f32 %v1402, %v1424
        %v1447 = vmul.f32 %v1403, %v1420
        %v1448 = vmul.f32 %v1404, %v1424
        %v1449 = vmul.f32 %v1405, %v1420
        %v1450 = vmul.f32 %v1406, %v1424
        %v1451 = vmul.f32 %v1407, %v1420
        %v1452 = vmul.f32 %v1408, %v1424
        %v1453 = vmul.f32 %v1409, %v1420
        %v1454 = vmul.f32 %v1410, %v1424
        %v1455 = vmul.f32 %v1411, %v1420
        %v1456 = vmul.f32 %v1412, %v1424
        %v1457 = vmul.f32 %v1413, %v1420
        %v1458 = vmul.f32 %v1414, %v1424
        %v1459 = vadd.f32 %v1427, %v1428
        %1460 = vadd.xlane.f32.xlu0 %v1459
        %v1461 = vpop.xlane.xlu0 %1460
        %v1462 = vadd.f32 %v1429, %v1430
        %1463 = vadd.xlane.f32.xlu0 %v1462
        %v1464 = vpop.xlane.xlu0 %1463
        %v1465 = vadd.f32 %v1431, %v1432
        %1466 = vadd.xlane.f32.xlu0 %v1465
        %v1467 = vpop.xlane.xlu0 %1466
        %v1468 = vadd.f32 %v1433, %v1434
        %1469 = vadd.xlane.f32.xlu0 %v1468
        %v1470 = vpop.xlane.xlu0 %1469
        %v1471 = vadd.f32 %v1435, %v1436
        %1472 = vadd.xlane.f32.xlu0 %v1471
        %v1473 = vpop.xlane.xlu0 %1472
        %v1474 = vadd.f32 %v1437, %v1438
        %1475 = vadd.xlane.f32.xlu0 %v1474
        %v1476 = vpop.xlane.xlu0 %1475
        %v1477 = vadd.f32 %v1439, %v1440
        %1478 = vadd.xlane.f32.xlu0 %v1477
        %v1479 = vpop.xlane.xlu0 %1478
        %v1480 = vadd.f32 %v1441, %v1442
        %1481 = vadd.xlane.f32.xlu0 %v1480
        %v1482 = vpop.xlane.xlu0 %1481
        %v1483 = vadd.f32 %v1443, %v1444
        %1484 = vadd.xlane.f32.xlu0 %v1483
        %v1485 = vpop.xlane.xlu0 %1484
        %v1486 = vadd.f32 %v1445, %v1446
        %1487 = vadd.xlane.f32.xlu0 %v1486
        %v1488 = vpop.xlane.xlu0 %1487
        %v1489 = vadd.f32 %v1447, %v1448
        %1490 = vadd.xlane.f32.xlu0 %v1489
        %v1491 = vpop.xlane.xlu0 %1490
        %v1492 = vadd.f32 %v1449, %v1450
        %1493 = vadd.xlane.f32.xlu0 %v1492
        %v1494 = vpop.xlane.xlu0 %1493
        %v1495 = vadd.f32 %v1451, %v1452
        %1496 = vadd.xlane.f32.xlu0 %v1495
        %v1497 = vpop.xlane.xlu0 %1496
        %v1498 = vadd.f32 %v1453, %v1454
        %1499 = vadd.xlane.f32.xlu0 %v1498
        %v1500 = vpop.xlane.xlu0 %1499
        %v1501 = vadd.f32 %v1455, %v1456
        %1502 = vadd.xlane.f32.xlu0 %v1501
        %v1503 = vpop.xlane.xlu0 %1502
        %v1504 = vadd.f32 %v1457, %v1458
        %1505 = vadd.xlane.f32.xlu0 %v1504
        %v1506 = vpop.xlane.xlu0 %1505
        %v1507 = vadd.f32 %v923, %v1461
        %v1508 = vadd.f32 %v926, %v1464
        %v1509 = vadd.f32 %v929, %v1467
        %v1510 = vadd.f32 %v932, %v1470
        %v1511 = vadd.f32 %v935, %v1473
        %v1512 = vadd.f32 %v938, %v1476
        %v1513 = vadd.f32 %v941, %v1479
        %v1514 = vadd.f32 %v944, %v1482
        %v1515 = vadd.f32 %v947, %v1485
        %v1516 = vadd.f32 %v950, %v1488
        %v1517 = vadd.f32 %v953, %v1491
        %v1518 = vadd.f32 %v956, %v1494
        %v1519 = vadd.f32 %v959, %v1497
        %v1520 = vadd.f32 %v962, %v1500
        %v1521 = vadd.f32 %v965, %v1503
        %v1522 = vadd.f32 %v968, %v1506
        %s1523 = sld [smem:[#allocation2]]
        %v1524 = vstv %s1523
        %v1525 = vadd.f32 %v1507, %v1524
        %v1526 = vadd.f32 %v1508, %v1524
        %v1527 = vadd.f32 %v1509, %v1524
        %v1528 = vadd.f32 %v1510, %v1524
        %v1529 = vadd.f32 %v1511, %v1524
        %v1530 = vadd.f32 %v1512, %v1524
        %v1531 = vadd.f32 %v1513, %v1524
        %v1532 = vadd.f32 %v1514, %v1524
        %v1533 = vadd.f32 %v1515, %v1524
        %v1534 = vadd.f32 %v1516, %v1524
        %v1535 = vadd.f32 %v1517, %v1524
        %v1536 = vadd.f32 %v1518, %v1524
        %v1537 = vadd.f32 %v1519, %v1524
        %v1538 = vadd.f32 %v1520, %v1524
        %v1539 = vadd.f32 %v1521, %v1524
        %v1540 = vadd.f32 %v1522, %v1524
        %v1541 = vmax.f32 %v1525, 0.0
        %v1542 = vmax.f32 %v1526, 0.0
        %v1543 = vmax.f32 %v1527, 0.0
        %v1544 = vmax.f32 %v1528, 0.0
        %v1545 = vmax.f32 %v1529, 0.0
        %v1546 = vmax.f32 %v1530, 0.0
        %v1547 = vmax.f32 %v1531, 0.0
        %v1548 = vmax.f32 %v1532, 0.0
        %v1549 = vmax.f32 %v1533, 0.0
        %v1550 = vmax.f32 %v1534, 0.0
        %v1551 = vmax.f32 %v1535, 0.0
        %v1552 = vmax.f32 %v1536, 0.0
        %v1553 = vmax.f32 %v1537, 0.0
        %v1554 = vmax.f32 %v1538, 0.0
        %v1555 = vmax.f32 %v1539, 0.0
        %v1556 = vmax.f32 %v1540, 0.0
        %vm1557 = vcmask 7168
        %1558 = vst.msk [vmem:[%s429] sm:$0xff] %vm1557, %v1541
        %1559 = vst.msk [vmem:[%s429 + $0x8] sm:$0xff] %vm1557, %v1542
        %1560 = vst.msk [vmem:[%s429 + $0x10] sm:$0xff] %vm1557, %v1543
        %1561 = vst.msk [vmem:[%s429 + $0x18] sm:$0xff] %vm1557, %v1544
        %1562 = vst.msk [vmem:[%s429 + $0x20] sm:$0xff] %vm1557, %v1545
        %1563 = vst.msk [vmem:[%s429 + $0x28] sm:$0xff] %vm1557, %v1546
        %1564 = vst.msk [vmem:[%s429 + $0x30] sm:$0xff] %vm1557, %v1547
        %1565 = vst.msk [vmem:[%s429 + $0x38] sm:$0xff] %vm1557, %v1548
        %1566 = vst.msk [vmem:[%s429 + $0x40] sm:$0xff] %vm1557, %v1549
        %1567 = vst.msk [vmem:[%s429 + $0x48] sm:$0xff] %vm1557, %v1550
        %1568 = vst.msk [vmem:[%s429 + $0x50] sm:$0xff] %vm1557, %v1551
        %1569 = vst.msk [vmem:[%s429 + $0x58] sm:$0xff] %vm1557, %v1552
        %1570 = vst.msk [vmem:[%s429 + $0x60] sm:$0xff] %vm1557, %v1553
        %1571 = vst.msk [vmem:[%s429 + $0x68] sm:$0xff] %vm1557, %v1554
        %1572 = vst.msk [vmem:[%s429 + $0x70] sm:$0xff] %vm1557, %v1555
        %1573 = vst.msk [vmem:[%s429 + $0x78] sm:$0xff] %vm1557, %v1556
        %s1574 = sand.u32 %s210, 1
        %s1575 = scalar_lea.sflag [#allocation5], %s1574
        %s1576 = sand.u32 %s210, 1
        %s1577 = smul.addr %s1576, 128
        %s1578 = scalar_lea.vmem [#allocation15], %s1577
        // Predicated region
        $region81: #{tpu_custom_call.1} parent=51 // pred_check
          %p1579 = pneg %p220
        $region82: #{tpu_custom_call.1} parent=51 // pred_check_branch
          %1581 = sbr.rel (%p1579) target = $region84
        $region83: #{tpu_custom_call.1} parent=51 // pred_region
          %s1582 = smul.u32 16, %s29
          %s1584 = ssub.s32 2048, 2048
          %1585 = vsyncadd %s1575, %s1584
          %s1586 = smul.addr %s1582, 128
          %s1587 = scalar_lea.hbm %s8, %s1586
          %s1588 = sshll.u32 %s1578, 4
          %s1589 = int_to_ptr.vmem [resolvable:$true] %s1588
          %1594 = dma.vmem_to_hbm [thread:$0]  %s1589, 2048, %s1587, %s1575, 128, 128, 8
        $region84: #{tpu_custom_call.1} parent=51 // pred_fallthru
          _
      $region52: #{tpu_custom_call.1} parent=5 // pred_fallthru
        _
      %p1595 = scmp.le.s32.totalorder 2, %s24
      // Predicated region
      $region85: #{tpu_custom_call.1} parent=5 // pred_check
        %p1596 = pneg %p1595
      $region86: #{tpu_custom_call.1} parent=5 // pred_check_branch
        %1598 = sbr.rel (%p1596) target = $region88
      $region87: #{tpu_custom_call.1} parent=5 // pred_region
        %s1599 = ssub.s32 %s24, 2
        // Predicated region
        $region89: #{tpu_custom_call.1} parent=87 // pred_check
          %p1600 = pneg %p226
        $region90: #{tpu_custom_call.1} parent=87 // pred_check_branch
          %1602 = sbr.rel (%p1600) target = $region92
        $region91: #{tpu_custom_call.1} parent=87 // pred_region
          %s1603 = sand.u32 %s211, 1
          %s1604 = scalar_lea.sflag [#allocation5], %s1603
          %s1605 = sand.u32 %s211, 1
          %s1606 = smul.addr %s1605, 128
          %s1607 = scalar_lea.vmem [#allocation15], %s1606
          %1608 = dma.done %s1604, 2048
        $region92: #{tpu_custom_call.1} parent=87 // pred_fallthru
          _
      $region88: #{tpu_custom_call.1} parent=5 // pred_fallthru
        _
    $region6: #{tpu_custom_call.1} parent=1 // loop_footer
      %s28 = sadd.s32 1, %s24
    $region7: #{tpu_custom_call.1} parent=1 // loop_footer_branch
      %23 = sbr.rel target = $region3
    $region8: #{tpu_custom_call.1} parent=1 // loop_exit
      _
    %1609 = vsyncpa [#allocation4], 1
    %s1610 = scalar_lea.sflag [#allocation4], 1
    %1611 = vsyncpa %s1610, 1
    %1612 = vsyncpa [#allocation7], 1
    %1613 = vsyncpa [#allocation10], 1
    %1614 = vsyncpa [#allocation13], 1
    %1615 = vsyncpa [#allocation5], 1
    %s1616 = scalar_lea.sflag [#allocation5], 1
    %1617 = vsyncpa %s1616, 1

// kernel: tpu_custom_call.1
$region0: #{tpu_custom_call.1}
  #allocation0 [shape = 'u32[]', space=smem, size = 0x4, offset = 0x4, fixed_abs, tag = 'smem constant byte address 0x4 - core index']
  #allocation1 [shape = 'u32[144,128]{1,0:T(1,128)}', space=vmem, size = 0x12000, scoped, tag = 'internal scratch']
  #allocation2 [shape = 'f32[1]{0:T(128)S(6)}', space=smem, size = 0x200, scoped, tag = 'scoped memory for tpu_custom_call.1']
  #allocation16 [shape = 's32[]', space=sflag, size = 0x4, offset = 0, fixed_abs, tag = 'sflag constant byte address 0x0 - dummy sync flag']
  %s0 = inlined_call_operand.hbm [shape: bf16[2,512,256], index: 0, kind: input, shape index: {}]
  %s1 = inlined_call_operand.hbm [shape: bf16[256,256], index: 1, kind: input, shape index: {}]
  %s2 = inlined_call_operand.hbm [shape: f32[1,256], index: 2, kind: input, shape index: {}]
  %s3 = inlined_call_operand.hbm [shape: bf16[256,256], index: 3, kind: input, shape index: {}]
  %s4 = inlined_call_operand.hbm [shape: f32[1,256], index: 4, kind: input, shape index: {}]
  %s5 = inlined_call_operand.hbm [shape: f32[1,256], index: 5, kind: input, shape index: {}]
  %s6 = inlined_call_operand.hbm [shape: f32[1,256], index: 6, kind: input, shape index: {}]
  %s7 = inlined_call_operand.<no memory space> [shape: f32[1], index: 7, kind: input, shape index: {}]
  %s8 = inlined_call_operand.hbm [shape: f32[512,1], index: 8, kind: output, shape index: {}]
  %s9 = sld [smem:[#allocation0]]
  $region93: #{tpu_custom_call.1} parent=0
    _
  %s11 = ssub.s32 1, %s9
  %s12 = scalar_select 0, %s11, %s9
  %13 = sst [smem:[#allocation2]] %s7
  $region1: #{tpu_custom_call.1} parent=0
    #allocation3 [shape = 'u8[262144]{0}', space=vmem, size = 0x40000, scoped, tag = 'input window, operand 0']
    #allocation4 [shape = 's32[2]{0}', space=sflag, size = 0x8, scoped, tag = 'scoped memory for tpu_custom_call.1']
    #allocation5 [shape = 's32[2]{0}', space=sflag, size = 0x8, scoped, tag = 'scoped memory for tpu_custom_call.1']
    #allocation6 [shape = 'u8[131072]{0}', space=vmem, size = 0x20000, scoped, tag = 'input window, operand 1, single buffered']
    #allocation7 [shape = 's32[1]{0}', space=sflag, size = 0x4, scoped, tag = 'scoped memory for tpu_custom_call.1']
    #allocation8 [shape = 'u8[1024]{0}', space=vmem, size = 0x400, scoped, tag = 'input window, operand 2, single buffered']
    #allocation9 [shape = 'u8[131072]{0}', space=vmem, size = 0x20000, scoped, tag = 'input window, operand 3, single buffered']
    #allocation10 [shape = 's32[1]{0}', space=sflag, size = 0x4, scoped, tag = 'scoped memory for tpu_custom_call.1']
    #allocation11 [shape = 'u8[1024]{0}', space=vmem, size = 0x400, scoped, tag = 'input window, operand 4, single buffered']
    #allocation12 [shape = 'u8[1024]{0}', space=vmem, size = 0x400, scoped, tag = 'input window, operand 5, single buffered']
    #allocation13 [shape = 's32[1]{0}', space=sflag, size = 0x4, scoped, tag = 'scoped memory for tpu_custom_call.1']
    #allocation14 [shape = 'u8[1024]{0}', space=vmem, size = 0x400, scoped, tag = 'input window, operand 6, single buffered']
    #allocation15 [shape = 'u8[131072]{0}', space=vmem, size = 0x20000, scoped, tag = 'output window, operand 0']
    %14 = vsyncpa [#allocation4], 0
    %s15 = scalar_lea.sflag [#allocation4], 1
    %16 = vsyncpa %s15, 0
    %17 = vsyncpa [#allocation7], 0
    %18 = vsyncpa [#allocation10], 0
    %19 = vsyncpa [#allocation13], 0
    %20 = vsyncpa [#allocation5], 0
    %s21 = scalar_lea.sflag [#allocation5], 1
    %22 = vsyncpa %s21, 0
    loop: start=0, step=1, limit=6
    $region2: #{tpu_custom_call.1} parent=1 // loop_pre_header
      _
    $region3: #{tpu_custom_call.1} parent=1 // loop_header
      %s24 = sphi 0, %s28
      %p25 = scmp.ge.s32.totalorder %s24, 6
      %s34 = sphi 0, %s36
      %s37 = sphi 0, %s34
      %s38 = sphi 0, %s37
      %s54 = sphi 0, %s38
      %s58 = sphi 0, %s58
      %s60 = sphi 0, %s58
      %s61 = sphi 0, %s60
      %s75 = sphi 0, %s61
      %s79 = sphi 0, %s79
      %s81 = sphi 0, %s79
      %s82 = sphi 0, %s81
      %s96 = sphi 0, %s82
      %s100 = sphi 0, %s100
      %s102 = sphi 0, %s100
      %s103 = sphi 0, %s102
      %s117 = sphi 0, %s103
      %s121 = sphi 0, %s121
      %s123 = sphi 0, %s121
      %s124 = sphi 0, %s123
      %s138 = sphi 0, %s124
      %s142 = sphi 0, %s142
      %s144 = sphi 0, %s142
      %s145 = sphi 0, %s144
      %s159 = sphi 0, %s145
      %s163 = sphi 0, %s163
      %s165 = sphi 0, %s163
      %s166 = sphi 0, %s165
      %s180 = sphi 0, %s166
      %s184 = sphi 0, %s184
      %s186 = sphi 0, %s184
      %s187 = sphi 0, %s186
      %s201 = sphi 0, %s187
      %s207 = sphi 0, %s209
      %s210 = sphi 0, %s207
      %s211 = sphi 0, %s210
      %s227 = sphi 0, %s211
    $region4: #{tpu_custom_call.1} parent=1 // loop_header_branch
      %27 = sbr.rel (%p25) target = $region8
    $region5: #{tpu_custom_call.1} parent=1 // loop_body
      %s29 = ssub.s32 %s24, 1
      %s30 = ssub.s32 %s24, 2
      %s31 = sadd.s32 %s24, 1
      %s32 = ssub.s32 %s24, %s31
      %p33 = scmp.eq.s32.totalorder %s32, 0
      %s35 = sadd.s32 %s34, 1
      %s36 = scalar_select %p33, %s34, %s35
      %p39 = pneg %p33
      %p40 = scmp.eq.s32.totalorder %s24, 3
      %p41 = por %p39, %p40
      %p42 = scmp.ne.s32.totalorder %s34, %s37
      %p43 = scmp.eq.s32.totalorder %s24, 0
      %p44 = por %p42, %p43
      %p45 = scmp.ne.s32.totalorder %s34, %s37
      %p46 = scmp.eq.s32.totalorder %s29, 3
      %p47 = por %p45, %p46
      %p48 = scmp.ne.s32.totalorder %s37, %s38
      %p49 = scmp.eq.s32.totalorder %s29, 0
      %p50 = por %p48, %p49
      %p51 = scmp.ne.s32.totalorder %s37, %s38
      %p52 = scmp.eq.s32.totalorder %s30, 3
      %p53 = por %p51, %p52
      %p55 = scmp.ne.s32.totalorder %s38, %s54
      %p56 = scmp.eq.s32.totalorder %s30, 0
      %p57 = por %p55, %p56
      %s59 = sadd.s32 %s58, 1
      %p62 = scmp.eq.s32.totalorder %s24, 3
      %p63 = scmp.ne.s32.totalorder %s58, %s60
      %p64 = scmp.eq.s32.totalorder %s24, 0
      %p65 = por %p63, %p64
      %p66 = scmp.ne.s32.totalorder %s58, %s60
      %p67 = scmp.eq.s32.totalorder %s29, 3
      %p68 = por %p66, %p67
      %p69 = scmp.ne.s32.totalorder %s60, %s61
      %p70 = scmp.eq.s32.totalorder %s29, 0
      %p71 = por %p69, %p70
      %p72 = scmp.ne.s32.totalorder %s60, %s61
      %p73 = scmp.eq.s32.totalorder %s30, 3
      %p74 = por %p72, %p73
      %p76 = scmp.ne.s32.totalorder %s61, %s75
      %p77 = scmp.eq.s32.totalorder %s30, 0
      %p78 = por %p76, %p77
      %s80 = sadd.s32 %s79, 1
      %p83 = scmp.eq.s32.totalorder %s24, 3
      %p84 = scmp.ne.s32.totalorder %s79, %s81
      %p85 = scmp.eq.s32.totalorder %s24, 0
      %p86 = por %p84, %p85
      %p87 = scmp.ne.s32.totalorder %s79, %s81
      %p88 = scmp.eq.s32.totalorder %s29, 3
      %p89 = por %p87, %p88
      %p90 = scmp.ne.s32.totalorder %s81, %s82
      %p91 = scmp.eq.s32.totalorder %s29, 0
      %p92 = por %p90, %p91
      %p93 = scmp.ne.s32.totalorder %s81, %s82
      %p94 = scmp.eq.s32.totalorder %s30, 3
      %p95 = por %p93, %p94
      %p97 = scmp.ne.s32.totalorder %s82, %s96
      %p98 = scmp.eq.s32.totalorder %s30, 0
      %p99 = por %p97, %p98
      %s101 = sadd.s32 %s100, 1
      %p104 = scmp.eq.s32.totalorder %s24, 3
      %p105 = scmp.ne.s32.totalorder %s100, %s102
      %p106 = scmp.eq.s32.totalorder %s24, 0
      %p107 = por %p105, %p106
      %p108 = scmp.ne.s32.totalorder %s100, %s102
      %p109 = scmp.eq.s32.totalorder %s29, 3
      %p110 = por %p108, %p109
      %p111 = scmp.ne.s32.totalorder %s102, %s103
      %p112 = scmp.eq.s32.totalorder %s29, 0
      %p113 = por %p111, %p112
      %p114 = scmp.ne.s32.totalorder %s102, %s103
      %p115 = scmp.eq.s32.totalorder %s30, 3
      %p116 = por %p114, %p115
      %p118 = scmp.ne.s32.totalorder %s103, %s117
      %p119 = scmp.eq.s32.totalorder %s30, 0
      %p120 = por %p118, %p119
      %s122 = sadd.s32 %s121, 1
      %p125 = scmp.eq.s32.totalorder %s24, 3
      %p126 = scmp.ne.s32.totalorder %s121, %s123
      %p127 = scmp.eq.s32.totalorder %s24, 0
      %p128 = por %p126, %p127
      %p129 = scmp.ne.s32.totalorder %s121, %s123
      %p130 = scmp.eq.s32.totalorder %s29, 3
      %p131 = por %p129, %p130
      %p132 = scmp.ne.s32.totalorder %s123, %s124
      %p133 = scmp.eq.s32.totalorder %s29, 0
      %p134 = por %p132, %p133
      %p135 = scmp.ne.s32.totalorder %s123, %s124
      %p136 = scmp.eq.s32.totalorder %s30, 3
      %p137 = por %p135, %p136
      %p139 = scmp.ne.s32.totalorder %s124, %s138
      %p140 = scmp.eq.s32.totalorder %s30, 0
      %p141 = por %p139, %p140
      %s143 = sadd.s32 %s142, 1
      %p146 = scmp.eq.s32.totalorder %s24, 3
      %p147 = scmp.ne.s32.totalorder %s142, %s144
      %p148 = scmp.eq.s32.totalorder %s24, 0
      %p149 = por %p147, %p148
      %p150 = scmp.ne.s32.totalorder %s142, %s144
      %p151 = scmp.eq.s32.totalorder %s29, 3
      %p152 = por %p150, %p151
      %p153 = scmp.ne.s32.totalorder %s144, %s145
      %p154 = scmp.eq.s32.totalorder %s29, 0
      %p155 = por %p153, %p154
      %p156 = scmp.ne.s32.totalorder %s144, %s145
      %p157 = scmp.eq.s32.totalorder %s30, 3
      %p158 = por %p156, %p157
      %p160 = scmp.ne.s32.totalorder %s145, %s159
      %p161 = scmp.eq.s32.totalorder %s30, 0
      %p162 = por %p160, %p161
      %s164 = sadd.s32 %s163, 1
      %p167 = scmp.eq.s32.totalorder %s24, 3
      %p168 = scmp.ne.s32.totalorder %s163, %s165
      %p169 = scmp.eq.s32.totalorder %s24, 0
      %p170 = por %p168, %p169
      %p171 = scmp.ne.s32.totalorder %s163, %s165
      %p172 = scmp.eq.s32.totalorder %s29, 3
      %p173 = por %p171, %p172
      %p174 = scmp.ne.s32.totalorder %s165, %s166
      %p175 = scmp.eq.s32.totalorder %s29, 0
      %p176 = por %p174, %p175
      %p177 = scmp.ne.s32.totalorder %s165, %s166
      %p178 = scmp.eq.s32.totalorder %s30, 3
      %p179 = por %p177, %p178
      %p181 = scmp.ne.s32.totalorder %s166, %s180
      %p182 = scmp.eq.s32.totalorder %s30, 0
      %p183 = por %p181, %p182
      %s185 = sadd.s32 %s184, 1
      %p188 = scmp.eq.s32.totalorder %s24, 3
      %p189 = scmp.ne.s32.totalorder %s184, %s186
      %p190 = scmp.eq.s32.totalorder %s24, 0
      %p191 = por %p189, %p190
      %p192 = scmp.ne.s32.totalorder %s184, %s186
      %p193 = scmp.eq.s32.totalorder %s29, 3
      %p194 = por %p192, %p193
      %p195 = scmp.ne.s32.totalorder %s186, %s187
      %p196 = scmp.eq.s32.totalorder %s29, 0
      %p197 = por %p195, %p196
      %p198 = scmp.ne.s32.totalorder %s186, %s187
      %p199 = scmp.eq.s32.totalorder %s30, 3
      %p200 = por %p198, %p199
      %p202 = scmp.ne.s32.totalorder %s187, %s201
      %p203 = scmp.eq.s32.totalorder %s30, 0
      %p204 = por %p202, %p203
      %s205 = ssub.s32 %s24, %s31
      %p206 = scmp.eq.s32.totalorder %s205, 0
      %s208 = sadd.s32 %s207, 1
      %s209 = scalar_select %p206, %s207, %s208
      %p212 = pneg %p206
      %p213 = scmp.eq.s32.totalorder %s24, 3
      %p214 = por %p212, %p213
      %p215 = scmp.ne.s32.totalorder %s207, %s210
      %p216 = scmp.eq.s32.totalorder %s24, 0
      %p217 = por %p215, %p216
      %p218 = scmp.ne.s32.totalorder %s207, %s210
      %p219 = scmp.eq.s32.totalorder %s29, 3
      %p220 = por %p218, %p219
      %p221 = scmp.ne.s32.totalorder %s210, %s211
      %p222 = scmp.eq.s32.totalorder %s29, 0
      %p223 = por %p221, %p222
      %p224 = scmp.ne.s32.totalorder %s210, %s211
      %p225 = scmp.eq.s32.totalorder %s30, 3
      %p226 = por %p224, %p225
      %p228 = scmp.ne.s32.totalorder %s211, %s227
      %p229 = scmp.eq.s32.totalorder %s30, 0
      %p230 = por %p228, %p229
      %p231 = scmp.le.s32.totalorder 1, %s24
      %p232 = scmp.lt.s32.totalorder %s24, 5
      %p233 = pnand %p231, %p232
      %p234 = pneg %p233
      // Predicated region
      $region9: #{tpu_custom_call.1} parent=5 // pred_check
        _
      $region10: #{tpu_custom_call.1} parent=5 // pred_check_branch
        %236 = sbr.rel (%p233) target = $region12
      $region11: #{tpu_custom_call.1} parent=5 // pred_region
        %s237 = ssub.s32 %s24, 1
        // Predicated region
        $region13: #{tpu_custom_call.1} parent=11 // pred_check
          %p238 = pneg %p71
        $region14: #{tpu_custom_call.1} parent=11 // pred_check_branch
          %240 = sbr.rel (%p238) target = $region16
        $region15: #{tpu_custom_call.1} parent=11 // pred_region
          %s242 = ssub.s32 4096, 4096
          %243 = vsyncadd [#allocation7], %s242
          %s244 = sshll.u32 [#allocation6], 4
          %s245 = int_to_ptr.vmem [resolvable:$true] %s244
          %250 = dma.hbm_to_vmem [thread:$0]  %s1, 4096, %s245, [#allocation7], 128, 128, 8
        $region16: #{tpu_custom_call.1} parent=11 // pred_fallthru
          _
        // Predicated region
        $region17: #{tpu_custom_call.1} parent=11 // pred_check
          %p251 = pneg %p92
        $region18: #{tpu_custom_call.1} parent=11 // pred_check_branch
          %253 = sbr.rel (%p251) target = $region20
        $region19: #{tpu_custom_call.1} parent=11 // pred_region
          %s255 = ssub.s32 32, 32
          %256 = vsyncadd [#allocation7], %s255
          %s258 = sshll.u32 [#allocation8], 4
          %s259 = int_to_ptr.vmem [resolvable:$true] %s258
          %261 = dma.hbm_to_vmem [thread:$0]  %s2, 32, %s259, [#allocation7]
        $region20: #{tpu_custom_call.1} parent=11 // pred_fallthru
          _
        // Predicated region
        $region21: #{tpu_custom_call.1} parent=11 // pred_check
          %p262 = pneg %p113
        $region22: #{tpu_custom_call.1} parent=11 // pred_check_branch
          %264 = sbr.rel (%p262) target = $region24
        $region23: #{tpu_custom_call.1} parent=11 // pred_region
          %s266 = ssub.s32 4096, 4096
          %267 = vsyncadd [#allocation10], %s266
          %s268 = sshll.u32 [#allocation9], 4
          %s269 = int_to_ptr.vmem [resolvable:$true] %s268
          %274 = dma.hbm_to_vmem [thread:$0]  %s3, 4096, %s269, [#allocation10], 128, 128, 8
        $region24: #{tpu_custom_call.1} parent=11 // pred_fallthru
          _
        // Predicated region
        $region25: #{tpu_custom_call.1} parent=11 // pred_check
          %p275 = pneg %p134
        $region26: #{tpu_custom_call.1} parent=11 // pred_check_branch
          %277 = sbr.rel (%p275) target = $region28
        $region27: #{tpu_custom_call.1} parent=11 // pred_region
          %s279 = ssub.s32 32, 32
          %280 = vsyncadd [#allocation10], %s279
          %s282 = sshll.u32 [#allocation11], 4
          %s283 = int_to_ptr.vmem [resolvable:$true] %s282
          %285 = dma.hbm_to_vmem [thread:$0]  %s4, 32, %s283, [#allocation10]
        $region28: #{tpu_custom_call.1} parent=11 // pred_fallthru
          _
        // Predicated region
        $region29: #{tpu_custom_call.1} parent=11 // pred_check
          %p286 = pneg %p155
        $region30: #{tpu_custom_call.1} parent=11 // pred_check_branch
          %288 = sbr.rel (%p286) target = $region32
        $region31: #{tpu_custom_call.1} parent=11 // pred_region
          %s290 = ssub.s32 32, 32
          %291 = vsyncadd [#allocation13], %s290
          %s293 = sshll.u32 [#allocation12], 4
          %s294 = int_to_ptr.vmem [resolvable:$true] %s293
          %296 = dma.hbm_to_vmem [thread:$0]  %s5, 32, %s294, [#allocation13]
        $region32: #{tpu_custom_call.1} parent=11 // pred_fallthru
          _
        // Predicated region
        $region33: #{tpu_custom_call.1} parent=11 // pred_check
          %p297 = pneg %p176
        $region34: #{tpu_custom_call.1} parent=11 // pred_check_branch
          %299 = sbr.rel (%p297) target = $region36
        $region35: #{tpu_custom_call.1} parent=11 // pred_region
          %s301 = ssub.s32 32, 32
          %302 = vsyncadd [#allocation13], %s301
          %s304 = sshll.u32 [#allocation14], 4
          %s305 = int_to_ptr.vmem [resolvable:$true] %s304
          %307 = dma.hbm_to_vmem [thread:$0]  %s6, 32, %s305, [#allocation13]
        $region36: #{tpu_custom_call.1} parent=11 // pred_fallthru
          _
        // Predicated region
        $region37: #{tpu_custom_call.1} parent=11 // pred_check
          %p308 = pneg %p197
        $region38: #{tpu_custom_call.1} parent=11 // pred_check_branch
          %310 = sbr.rel (%p308) target = $region40
        $region39: #{tpu_custom_call.1} parent=11 // pred_region
          _
        $region40: #{tpu_custom_call.1} parent=11 // pred_fallthru
          _
      $region12: #{tpu_custom_call.1} parent=5 // pred_fallthru
        _
      %p311 = scmp.lt.s32.totalorder %s24, 4
      // Predicated region
      $region41: #{tpu_custom_call.1} parent=5 // pred_check
        %p312 = pneg %p311
      $region42: #{tpu_custom_call.1} parent=5 // pred_check_branch
        %314 = sbr.rel (%p312) target = $region44
      $region43: #{tpu_custom_call.1} parent=5 // pred_region
        // Predicated region
        $region45: #{tpu_custom_call.1} parent=43 // pred_check
          %p315 = pneg %p44
        $region46: #{tpu_custom_call.1} parent=43 // pred_check_branch
          %317 = sbr.rel (%p315) target = $region48
        $region47: #{tpu_custom_call.1} parent=43 // pred_region
          #allocation17 [shape = 'u32[6]{0}', space=smem, size = 0x18, scoped, tag = 'DMA stride descriptor']
          %s318 = sand.u32 %s34, 1
          %s319 = scalar_lea.sflag [#allocation4], %s318
          %s320 = sand.u32 %s34, 1
          %s321 = smul.addr %s320, 256
          %s322 = scalar_lea.vmem [#allocation3], %s321
          %s323 = smul.u32 16, %s24
          %s325 = ssub.s32 4096, 4096
          %326 = vsyncadd %s319, %s325
          %s327 = smul.addr %s323, 2
          %s328 = smul.addr %s327, 64
          %s329 = scalar_lea.hbm %s0, %s328
          %s331 = sshll.u32 1, 14
          %s332 = sxor.u32 4294967295, %s331
          %s334 = sld [smem:[#allocation0]]
          %s335 = sadd.s32 2, %s334
          %s337 = sshll.u32 7, 26
          %s338 = sxor.u32 4294967295, %s337
          %s339 = sand.u32 0, %s338
          %s340 = sshll.u32 %s335, 26
          %s341 = sor.u32 %s339, %s340
          %s342 = sshll.u32 %s322, 4
          %s343 = int_to_ptr.vmem [resolvable:$true] %s342
          %349 = sst [smem:[#allocation17]] 8192
          %s350 = scalar_lea.smem [#allocation17], 1
          %351 = sst [smem:[%s350]] 2048
          %s352 = scalar_lea.smem [#allocation17], 2
          %353 = sst [smem:[%s352]] 16
          %s354 = scalar_lea.smem [#allocation17], 3
          %355 = sst [smem:[%s354]] 128
          %s356 = scalar_lea.smem [#allocation17], 4
          %357 = sst [smem:[%s356]] 128
          %s358 = scalar_lea.smem [#allocation17], 5
          %359 = sst [smem:[%s358]] 8
          %361 = dma.general %s329, 4096, %s343, %s319, [#allocation16], [#allocation17], %s341, 0
        $region48: #{tpu_custom_call.1} parent=43 // pred_fallthru
          _
      $region44: #{tpu_custom_call.1} parent=5 // pred_fallthru
        _
      %p362 = scmp.le.s32.totalorder 1, %s24
      %p363 = scmp.lt.s32.totalorder %s24, 5
      %p364 = pnand %p362, %p363
      %p365 = pneg %p364
      // Predicated region
      $region49: #{tpu_custom_call.1} parent=5 // pred_check
        _
      $region50: #{tpu_custom_call.1} parent=5 // pred_check_branch
        %367 = sbr.rel (%p364) target = $region52
      $region51: #{tpu_custom_call.1} parent=5 // pred_region
        %s368 = ssub.s32 %s24, 1
        %s369 = sand.u32 %s37, 1
        %s370 = scalar_lea.sflag [#allocation4], %s369
        %s371 = sand.u32 %s37, 1
        %s372 = smul.addr %s371, 256
        %s373 = scalar_lea.vmem [#allocation3], %s372
        // Predicated region
        $region53: #{tpu_custom_call.1} parent=51 // pred_check
          %p374 = pneg %p50
        $region54: #{tpu_custom_call.1} parent=51 // pred_check_branch
          %376 = sbr.rel (%p374) target = $region56
        $region55: #{tpu_custom_call.1} parent=51 // pred_region
          %377 = dma.done %s370, 4096
        $region56: #{tpu_custom_call.1} parent=51 // pred_fallthru
          _
        // Predicated region
        $region57: #{tpu_custom_call.1} parent=51 // pred_check
          %p378 = pneg %p71
        $region58: #{tpu_custom_call.1} parent=51 // pred_check_branch
          %380 = sbr.rel (%p378) target = $region60
        $region59: #{tpu_custom_call.1} parent=51 // pred_region
          %381 = dma.done [#allocation7], 4096
        $region60: #{tpu_custom_call.1} parent=51 // pred_fallthru
          _
        // Predicated region
        $region61: #{tpu_custom_call.1} parent=51 // pred_check
          %p382 = pneg %p92
        $region62: #{tpu_custom_call.1} parent=51 // pred_check_branch
          %384 = sbr.rel (%p382) target = $region64
        $region63: #{tpu_custom_call.1} parent=51 // pred_region
          %385 = dma.done [#allocation7], 32
        $region64: #{tpu_custom_call.1} parent=51 // pred_fallthru
          _
        // Predicated region
        $region65: #{tpu_custom_call.1} parent=51 // pred_check
          %p386 = pneg %p113
        $region66: #{tpu_custom_call.1} parent=51 // pred_check_branch
          %388 = sbr.rel (%p386) target = $region68
        $region67: #{tpu_custom_call.1} parent=51 // pred_region
          %389 = dma.done [#allocation10], 4096
        $region68: #{tpu_custom_call.1} parent=51 // pred_fallthru
          _
        // Predicated region
        $region69: #{tpu_custom_call.1} parent=51 // pred_check
          %p390 = pneg %p134
        $region70: #{tpu_custom_call.1} parent=51 // pred_check_branch
          %392 = sbr.rel (%p390) target = $region72
        $region71: #{tpu_custom_call.1} parent=51 // pred_region
          %393 = dma.done [#allocation10], 32
        $region72: #{tpu_custom_call.1} parent=51 // pred_fallthru
          _
        // Predicated region
        $region73: #{tpu_custom_call.1} parent=51 // pred_check
          %p394 = pneg %p155
        $region74: #{tpu_custom_call.1} parent=51 // pred_check_branch
          %396 = sbr.rel (%p394) target = $region76
        $region75: #{tpu_custom_call.1} parent=51 // pred_region
          %397 = dma.done [#allocation13], 32
        $region76: #{tpu_custom_call.1} parent=51 // pred_fallthru
          _
        // Predicated region
        $region77: #{tpu_custom_call.1} parent=51 // pred_check
          %p398 = pneg %p176
        $region78: #{tpu_custom_call.1} parent=51 // pred_check_branch
          %400 = sbr.rel (%p398) target = $region80
        $region79: #{tpu_custom_call.1} parent=51 // pred_region
          %401 = dma.done [#allocation13], 32
        $region80: #{tpu_custom_call.1} parent=51 // pred_fallthru
          _
        %s402 = sand.u32 %s37, 1
        %s403 = scalar_lea.sflag [#allocation4], %s402
        %s404 = sand.u32 %s37, 1
        %s405 = smul.addr %s404, 256
        %s406 = scalar_lea.vmem [#allocation3], %s405
        %p407 = pneg %p50
        %p408 = pneg %p47
        %p409 = pneg %p71
        %p410 = pneg %p68
        %p411 = pneg %p92
        %p412 = pneg %p89
        %p413 = pneg %p113
        %p414 = pneg %p110
        %p415 = pneg %p134
        %p416 = pneg %p131
        %p417 = pneg %p155
        %p418 = pneg %p152
        %p419 = pneg %p176
        %p420 = pneg %p173
        %p421 = pneg %p197
        %p422 = pneg %p194
        %p423 = pneg %p223
        %p424 = pneg %p220
        %s425 = sand.u32 %s210, 1
        %s426 = scalar_lea.sflag [#allocation5], %s425
        %s427 = sand.u32 %s210, 1
        %s428 = smul.addr %s427, 128
        %s429 = scalar_lea.vmem [#allocation15], %s428
        %s430 = smul.u32 16, %s29
        %s431 = smul.u32 16, %s29
        %v432 = vld [vmem:[%s373] sm:$0xff]
        %v433 = vld [vmem:[%s373 + $0x8] sm:$0xff]
        %v434 = vld [vmem:[%s373 + $0x10] sm:$0xff]
        %v435 = vld [vmem:[%s373 + $0x18] sm:$0xff]
        %v436 = vld [vmem:[%s373 + $0x20] sm:$0xff]
        %v437 = vld [vmem:[%s373 + $0x28] sm:$0xff]
        %v438 = vld [vmem:[%s373 + $0x30] sm:$0xff]
        %v439 = vld [vmem:[%s373 + $0x38] sm:$0xff]
        %v440 = vld [vmem:[%s373 + $0x40] sm:$0xff]
        %v441 = vld [vmem:[%s373 + $0x48] sm:$0xff]
        %v442 = vld [vmem:[%s373 + $0x50] sm:$0xff]
        %v443 = vld [vmem:[%s373 + $0x58] sm:$0xff]
        %v444 = vld [vmem:[%s373 + $0x60] sm:$0xff]
        %v445 = vld [vmem:[%s373 + $0x68] sm:$0xff]
        %v446 = vld [vmem:[%s373 + $0x70] sm:$0xff]
        %v447 = vld [vmem:[%s373 + $0x78] sm:$0xff]
        %v448 = vld [vmem:[#allocation6] sm:$0xff]
        %v449 = vld [vmem:[#allocation6 + $0x8] sm:$0xff]
        %v450 = vld [vmem:[#allocation6 + $0x10] sm:$0xff]
        %v451 = vld [vmem:[#allocation6 + $0x18] sm:$0xff]
        %v452 = vld [vmem:[#allocation6 + $0x20] sm:$0xff]
        %v453 = vld [vmem:[#allocation6 + $0x28] sm:$0xff]
        %v454 = vld [vmem:[#allocation6 + $0x30] sm:$0xff]
        %v455 = vld [vmem:[#allocation6 + $0x38] sm:$0xff]
        %v456 = vld [vmem:[#allocation6 + $0x40] sm:$0xff]
        %v457 = vld [vmem:[#allocation6 + $0x48] sm:$0xff]
        %v458 = vld [vmem:[#allocation6 + $0x50] sm:$0xff]
        %v459 = vld [vmem:[#allocation6 + $0x58] sm:$0xff]
        %v460 = vld [vmem:[#allocation6 + $0x60] sm:$0xff]
        %v461 = vld [vmem:[#allocation6 + $0x68] sm:$0xff]
        %v462 = vld [vmem:[#allocation6 + $0x70] sm:$0xff]
        %v463 = vld [vmem:[#allocation6 + $0x78] sm:$0xff]
        %v464 = vld [vmem:[#allocation6 + $0x80] sm:$0xff]
        %v465 = vld [vmem:[#allocation6 + $0x88] sm:$0xff]
        %v466 = vld [vmem:[#allocation6 + $0x90] sm:$0xff]
        %v467 = vld [vmem:[#allocation6 + $0x98] sm:$0xff]
        %v468 = vld [vmem:[#allocation6 + $0xa0] sm:$0xff]
        %v469 = vld [vmem:[#allocation6 + $0xa8] sm:$0xff]
        %v470 = vld [vmem:[#allocation6 + $0xb0] sm:$0xff]
        %v471 = vld [vmem:[#allocation6 + $0xb8] sm:$0xff]
        %v472 = vld [vmem:[#allocation6 + $0xc0] sm:$0xff]
        %v473 = vld [vmem:[#allocation6 + $0xc8] sm:$0xff]
        %v474 = vld [vmem:[#allocation6 + $0xd0] sm:$0xff]
        %v475 = vld [vmem:[#allocation6 + $0xd8] sm:$0xff]
        %v476 = vld [vmem:[#allocation6 + $0xe0] sm:$0xff]
        %v477 = vld [vmem:[#allocation6 + $0xe8] sm:$0xff]
        %v478 = vld [vmem:[#allocation6 + $0xf0] sm:$0xff]
        %v479 = vld [vmem:[#allocation6 + $0xf8] sm:$0xff]
        %v480 = vld [vmem:[#allocation8] sm:$0x3]
        %v482 = vlaneseq
        %v483 = vshrl.u32 %v482, 7
        %v484 = vsub.s32 0, %v483
        %v485 = vrot.slane %v480, %v484
        %v486 = vlaneseq
        %v487 = vshrl.u32 %v486, 7
        %v488 = vsub.s32 1, %v487
        %v489 = vrot.slane %v480, %v488
        %v508 = vunpack.c.l.b16 %v432
        %v509 = vunpack.c.h.b16 %v432
        %v510 = vunpack.c.l.b16 %v433
        %v511 = vunpack.c.h.b16 %v433
        %v512 = vunpack.c.l.b16 %v434
        %v513 = vunpack.c.h.b16 %v434
        %v514 = vunpack.c.l.b16 %v435
        %v515 = vunpack.c.h.b16 %v435
        %v516 = vunpack.c.l.b16 %v436
        %v517 = vunpack.c.h.b16 %v436
        %v518 = vunpack.c.l.b16 %v437
        %v519 = vunpack.c.h.b16 %v437
        %v520 = vunpack.c.l.b16 %v438
        %v521 = vunpack.c.h.b16 %v438
        %v522 = vunpack.c.l.b16 %v439
        %v523 = vunpack.c.h.b16 %v439
        %v524 = vunpack.c.l.b16 %v440
        %v525 = vunpack.c.h.b16 %v440
        %v526 = vunpack.c.l.b16 %v441
        %v527 = vunpack.c.h.b16 %v441
        %v528 = vunpack.c.l.b16 %v442
        %v529 = vunpack.c.h.b16 %v442
        %v530 = vunpack.c.l.b16 %v443
        %v531 = vunpack.c.h.b16 %v443
        %v532 = vunpack.c.l.b16 %v444
        %v533 = vunpack.c.h.b16 %v444
        %v534 = vunpack.c.l.b16 %v445
        %v535 = vunpack.c.h.b16 %v445
        %v536 = vunpack.c.l.b16 %v446
        %v537 = vunpack.c.h.b16 %v446
        %v538 = vunpack.c.l.b16 %v447
        %v539 = vunpack.c.h.b16 %v447
        %v540 = vpack.c.b16 %v510, %v508
        %v541 = vpack.c.b16 %v511, %v509
        %v542 = vpack.c.b16 %v514, %v512
        %v543 = vpack.c.b16 %v515, %v513
        %v544 = vpack.c.b16 %v518, %v516
        %v545 = vpack.c.b16 %v519, %v517
        %v546 = vpack.c.b16 %v522, %v520
        %v547 = vpack.c.b16 %v523, %v521
        %v548 = vpack.c.b16 %v526, %v524
        %v549 = vpack.c.b16 %v527, %v525
        %v550 = vpack.c.b16 %v530, %v528
        %v551 = vpack.c.b16 %v531, %v529
        %v552 = vpack.c.b16 %v534, %v532
        %v553 = vpack.c.b16 %v535, %v533
        %v554 = vpack.c.b16 %v538, %v536
        %v555 = vpack.c.b16 %v539, %v537
        %v604 = vunpack.c.l.b16 %v448
        %v605 = vunpack.c.h.b16 %v448
        %v606 = vunpack.c.l.b16 %v449
        %v607 = vunpack.c.h.b16 %v449
        %v608 = vunpack.c.l.b16 %v450
        %v609 = vunpack.c.h.b16 %v450
        %v610 = vunpack.c.l.b16 %v451
        %v611 = vunpack.c.h.b16 %v451
        %v612 = vunpack.c.l.b16 %v452
        %v613 = vunpack.c.h.b16 %v452
        %v614 = vunpack.c.l.b16 %v453
        %v615 = vunpack.c.h.b16 %v453
        %v616 = vunpack.c.l.b16 %v454
        %v617 = vunpack.c.h.b16 %v454
        %v618 = vunpack.c.l.b16 %v455
        %v619 = vunpack.c.h.b16 %v455
        %v620 = vunpack.c.l.b16 %v456
        %v621 = vunpack.c.h.b16 %v456
        %v622 = vunpack.c.l.b16 %v457
        %v623 = vunpack.c.h.b16 %v457
        %v624 = vunpack.c.l.b16 %v458
        %v625 = vunpack.c.h.b16 %v458
        %v626 = vunpack.c.l.b16 %v459
        %v627 = vunpack.c.h.b16 %v459
        %v628 = vunpack.c.l.b16 %v460
        %v629 = vunpack.c.h.b16 %v460
        %v630 = vunpack.c.l.b16 %v461
        %v631 = vunpack.c.h.b16 %v461
        %v632 = vunpack.c.l.b16 %v462
        %v633 = vunpack.c.h.b16 %v462
        %v634 = vunpack.c.l.b16 %v463
        %v635 = vunpack.c.h.b16 %v463
        %v636 = vunpack.c.l.b16 %v464
        %v637 = vunpack.c.h.b16 %v464
        %v638 = vunpack.c.l.b16 %v465
        %v639 = vunpack.c.h.b16 %v465
        %v640 = vunpack.c.l.b16 %v466
        %v641 = vunpack.c.h.b16 %v466
        %v642 = vunpack.c.l.b16 %v467
        %v643 = vunpack.c.h.b16 %v467
        %v644 = vunpack.c.l.b16 %v468
        %v645 = vunpack.c.h.b16 %v468
        %v646 = vunpack.c.l.b16 %v469
        %v647 = vunpack.c.h.b16 %v469
        %v648 = vunpack.c.l.b16 %v470
        %v649 = vunpack.c.h.b16 %v470
        %v650 = vunpack.c.l.b16 %v471
        %v651 = vunpack.c.h.b16 %v471
        %v652 = vunpack.c.l.b16 %v472
        %v653 = vunpack.c.h.b16 %v472
        %v654 = vunpack.c.l.b16 %v473
        %v655 = vunpack.c.h.b16 %v473
        %v656 = vunpack.c.l.b16 %v474
        %v657 = vunpack.c.h.b16 %v474
        %v658 = vunpack.c.l.b16 %v475
        %v659 = vunpack.c.h.b16 %v475
        %v660 = vunpack.c.l.b16 %v476
        %v661 = vunpack.c.h.b16 %v476
        %v662 = vunpack.c.l.b16 %v477
        %v663 = vunpack.c.h.b16 %v477
        %v664 = vunpack.c.l.b16 %v478
        %v665 = vunpack.c.h.b16 %v478
        %v666 = vunpack.c.l.b16 %v479
        %v667 = vunpack.c.h.b16 %v479
        %v668 = vpack.c.b16 %v606, %v604
        %v669 = vpack.c.b16 %v607, %v605
        %v670 = vpack.c.b16 %v610, %v608
        %v671 = vpack.c.b16 %v611, %v609
        %v672 = vpack.c.b16 %v614, %v612
        %v673 = vpack.c.b16 %v615, %v613
        %v674 = vpack.c.b16 %v618, %v616
        %v675 = vpack.c.b16 %v619, %v617
        %v676 = vpack.c.b16 %v622, %v620
        %v677 = vpack.c.b16 %v623, %v621
        %v678 = vpack.c.b16 %v626, %v624
        %v679 = vpack.c.b16 %v627, %v625
        %v680 = vpack.c.b16 %v630, %v628
        %v681 = vpack.c.b16 %v631, %v629
        %v682 = vpack.c.b16 %v634, %v632
        %v683 = vpack.c.b16 %v635, %v633
        %v684 = vpack.c.b16 %v638, %v636
        %v685 = vpack.c.b16 %v639, %v637
        %v686 = vpack.c.b16 %v642, %v640
        %v687 = vpack.c.b16 %v643, %v641
        %v688 = vpack.c.b16 %v646, %v644
        %v689 = vpack.c.b16 %v647, %v645
        %v690 = vpack.c.b16 %v650, %v648
        %v691 = vpack.c.b16 %v651, %v649
        %v692 = vpack.c.b16 %v654, %v652
        %v693 = vpack.c.b16 %v655, %v653
        %v694 = vpack.c.b16 %v658, %v656
        %v695 = vpack.c.b16 %v659, %v657
        %v696 = vpack.c.b16 %v662, %v660
        %v697 = vpack.c.b16 %v663, %v661
        %v698 = vpack.c.b16 %v666, %v664
        %v699 = vpack.c.b16 %v667, %v665
        %732 = vmatprep.subr.bf16.mxu0 %v669
        %733 = vmatpush1.bf16.msra.mxu0 %v668
        %734 = vmatprep.subr.bf16.mxu0 %v671
        %735 = vmatpush1.bf16.msra.mxu0 %v670
        %736 = vmatprep.subr.bf16.mxu0 %v673
        %737 = vmatpush1.bf16.msra.mxu0 %v672
        %738 = vmatprep.subr.bf16.mxu0 %v675
        %739 = vmatpush1.bf16.msra.mxu0 %v674
        %740 = vmatprep.subr.bf16.mxu0 %v677
        %741 = vmatpush1.bf16.msra.mxu0 %v676
        %742 = vmatprep.subr.bf16.mxu0 %v679
        %743 = vmatpush1.bf16.msra.mxu0 %v678
        %744 = vmatprep.subr.bf16.mxu0 %v681
        %745 = vmatpush1.bf16.msra.mxu0 %v680
        %746 = vmatprep.subr.bf16.mxu0 %v683
        %747 = vmatpush1.bf16.msra.mxu0 %v682
        %748 = vmatprep.subr.bf16.mxu0 %v685
        %749 = vmatpush1.bf16.msra.mxu0 %v684
        %750 = vmatprep.subr.bf16.mxu0 %v687
        %751 = vmatpush1.bf16.msra.mxu0 %v686
        %752 = vmatprep.subr.bf16.mxu0 %v689
        %753 = vmatpush1.bf16.msra.mxu0 %v688
        %754 = vmatprep.subr.bf16.mxu0 %v691
        %755 = vmatpush1.bf16.msra.mxu0 %v690
        %756 = vmatprep.subr.bf16.mxu0 %v693
        %757 = vmatpush1.bf16.msra.mxu0 %v692
        %758 = vmatprep.subr.bf16.mxu0 %v695
        %759 = vmatpush1.bf16.msra.mxu0 %v694
        %760 = vmatprep.subr.bf16.mxu0 %v697
        %761 = vmatpush1.bf16.msra.mxu0 %v696
        %762 = vmatprep.subr.bf16.mxu0 %v699
        %763 = vmatpush1.bf16.msra.mxu0 %v698
        %764 = vmatprep.mubr.bf16.mxu0 %v541
        %765 = vmatmul.mubr.bf16.gmra.mrb[0].mxu0 %v540
        %v766 = vpop.f32.mrb[0].mxu0
        %v767 = vadd.f32 %v485, %v766
        %v768 = vpop.f32.mrb[0].mxu0
        %v769 = vadd.f32 %v489, %v768
        %v770 = vpop.f32.mrb[0].mxu0
        %v771 = vadd.f32 %v485, %v770
        %v772 = vpop.f32.mrb[0].mxu0
        %v773 = vadd.f32 %v489, %v772
        %774 = vmatprep.mubr.bf16.mxu0 %v543
        %775 = vmatmul.mubr.bf16.gmra.mrb[0].mxu0 %v542
        %v776 = vpop.f32.mrb[0].mxu0
        %v777 = vadd.f32 %v485, %v776
        %v778 = vpop.f32.mrb[0].mxu0
        %v779 = vadd.f32 %v489, %v778
        %v780 = vpop.f32.mrb[0].mxu0
        %v781 = vadd.f32 %v485, %v780
        %v782 = vpop.f32.mrb[0].mxu0
        %v783 = vadd.f32 %v489, %v782
        %784 = vmatprep.mubr.bf16.mxu0 %v545
        %785 = vmatmul.mubr.bf16.gmra.mrb[0].mxu0 %v544
        %v786 = vpop.f32.mrb[0].mxu0
        %v787 = vadd.f32 %v485, %v786
        %v788 = vpop.f32.mrb[0].mxu0
        %v789 = vadd.f32 %v489, %v788
        %v790 = vpop.f32.mrb[0].mxu0
        %v791 = vadd.f32 %v485, %v790
        %v792 = vpop.f32.mrb[0].mxu0
        %v793 = vadd.f32 %v489, %v792
        %794 = vmatprep.mubr.bf16.mxu0 %v547
        %795 = vmatmul.mubr.bf16.gmra.mrb[0].mxu0 %v546
        %v796 = vpop.f32.mrb[0].mxu0
        %v797 = vadd.f32 %v485, %v796
        %v798 = vpop.f32.mrb[0].mxu0
        %v799 = vadd.f32 %v489, %v798
        %v800 = vpop.f32.mrb[0].mxu0
        %v801 = vadd.f32 %v485, %v800
        %v802 = vpop.f32.mrb[0].mxu0
        %v803 = vadd.f32 %v489, %v802
        %804 = vmatprep.mubr.bf16.mxu0 %v549
        %805 = vmatmul.mubr.bf16.gmra.mrb[0].mxu0 %v548
        %v806 = vpop.f32.mrb[0].mxu0
        %v807 = vadd.f32 %v485, %v806
        %v808 = vpop.f32.mrb[0].mxu0
        %v809 = vadd.f32 %v489, %v808
        %v810 = vpop.f32.mrb[0].mxu0
        %v811 = vadd.f32 %v485, %v810
        %v812 = vpop.f32.mrb[0].mxu0
        %v813 = vadd.f32 %v489, %v812
        %814 = vmatprep.mubr.bf16.mxu0 %v551
        %815 = vmatmul.mubr.bf16.gmra.mrb[0].mxu0 %v550
        %v816 = vpop.f32.mrb[0].mxu0
        %v817 = vadd.f32 %v485, %v816
        %v818 = vpop.f32.mrb[0].mxu0
        %v819 = vadd.f32 %v489, %v818
        %v820 = vpop.f32.mrb[0].mxu0
        %v821 = vadd.f32 %v485, %v820
        %v822 = vpop.f32.mrb[0].mxu0
        %v823 = vadd.f32 %v489, %v822
        %824 = vmatprep.mubr.bf16.mxu0 %v553
        %825 = vmatmul.mubr.bf16.gmra.mrb[0].mxu0 %v552
        %v826 = vpop.f32.mrb[0].mxu0
        %v827 = vadd.f32 %v485, %v826
        %v828 = vpop.f32.mrb[0].mxu0
        %v829 = vadd.f32 %v489, %v828
        %v830 = vpop.f32.mrb[0].mxu0
        %v831 = vadd.f32 %v485, %v830
        %v832 = vpop.f32.mrb[0].mxu0
        %v833 = vadd.f32 %v489, %v832
        %834 = vmatprep.mubr.bf16.mxu0 %v555
        %835 = vmatmul.mubr.bf16.gmra.mrb[0].mxu0 %v554
        %v836 = vpop.f32.mrb[0].mxu0
        %v837 = vadd.f32 %v485, %v836
        %v838 = vpop.f32.mrb[0].mxu0
        %v839 = vadd.f32 %v489, %v838
        %v840 = vpop.f32.mrb[0].mxu0
        %v841 = vadd.f32 %v485, %v840
        %v842 = vpop.f32.mrb[0].mxu0
        %v843 = vadd.f32 %v489, %v842
        %844 = vdwg.mxu0
        %v845 = vmax.f32 %v767, 0.0
        %v846 = vmax.f32 %v769, 0.0
        %v847 = vmax.f32 %v771, 0.0
        %v848 = vmax.f32 %v773, 0.0
        %v849 = vmax.f32 %v777, 0.0
        %v850 = vmax.f32 %v779, 0.0
        %v851 = vmax.f32 %v781, 0.0
        %v852 = vmax.f32 %v783, 0.0
        %v853 = vmax.f32 %v787, 0.0
        %v854 = vmax.f32 %v789, 0.0
        %v855 = vmax.f32 %v791, 0.0
        %v856 = vmax.f32 %v793, 0.0
        %v857 = vmax.f32 %v797, 0.0
        %v858 = vmax.f32 %v799, 0.0
        %v859 = vmax.f32 %v801, 0.0
        %v860 = vmax.f32 %v803, 0.0
        %v861 = vmax.f32 %v807, 0.0
        %v862 = vmax.f32 %v809, 0.0
        %v863 = vmax.f32 %v811, 0.0
        %v864 = vmax.f32 %v813, 0.0
        %v865 = vmax.f32 %v817, 0.0
        %v866 = vmax.f32 %v819, 0.0
        %v867 = vmax.f32 %v821, 0.0
        %v868 = vmax.f32 %v823, 0.0
        %v869 = vmax.f32 %v827, 0.0
        %v870 = vmax.f32 %v829, 0.0
        %v871 = vmax.f32 %v831, 0.0
        %v872 = vmax.f32 %v833, 0.0
        %v873 = vmax.f32 %v837, 0.0
        %v874 = vmax.f32 %v839, 0.0
        %v875 = vmax.f32 %v841, 0.0
        %v876 = vmax.f32 %v843, 0.0
        %v877 = vld [vmem:[#allocation12] sm:$0x3]
        %v879 = vlaneseq
        %v880 = vshrl.u32 %v879, 7
        %v881 = vsub.s32 0, %v880
        %v882 = vrot.slane %v877, %v881
        %v883 = vlaneseq
        %v884 = vshrl.u32 %v883, 7
        %v885 = vsub.s32 1, %v884
        %v886 = vrot.slane %v877, %v885
        %v889 = vmul.f32 %v845, %v882
        %v890 = vmul.f32 %v846, %v886
        %v891 = vmul.f32 %v847, %v882
        %v892 = vmul.f32 %v848, %v886
        %v893 = vmul.f32 %v849, %v882
        %v894 = vmul.f32 %v850, %v886
        %v895 = vmul.f32 %v851, %v882
        %v896 = vmul.f32 %v852, %v886
        %v897 = vmul.f32 %v853, %v882
        %v898 = vmul.f32 %v854, %v886
        %v899 = vmul.f32 %v855, %v882
        %v900 = vmul.f32 %v856, %v886
        %v901 = vmul.f32 %v857, %v882
        %v902 = vmul.f32 %v858, %v886
        %v903 = vmul.f32 %v859, %v882
        %v904 = vmul.f32 %v860, %v886
        %v905 = vmul.f32 %v861, %v882
        %v906 = vmul.f32 %v862, %v886
        %v907 = vmul.f32 %v863, %v882
        %v908 = vmul.f32 %v864, %v886
        %v909 = vmul.f32 %v865, %v882
        %v910 = vmul.f32 %v866, %v886
        %v911 = vmul.f32 %v867, %v882
        %v912 = vmul.f32 %v868, %v886
        %v913 = vmul.f32 %v869, %v882
        %v914 = vmul.f32 %v870, %v886
        %v915 = vmul.f32 %v871, %v882
        %v916 = vmul.f32 %v872, %v886
        %v917 = vmul.f32 %v873, %v882
        %v918 = vmul.f32 %v874, %v886
        %v919 = vmul.f32 %v875, %v882
        %v920 = vmul.f32 %v876, %v886
        %v921 = vadd.f32 %v889, %v890
        %922 = vadd.xlane.f32.xlu0 %v921
        %v923 = vpop.xlane.xlu0 %922
        %v924 = vadd.f32 %v891, %v892
        %925 = vadd.xlane.f32.xlu0 %v924
        %v926 = vpop.xlane.xlu0 %925
        %v927 = vadd.f32 %v893, %v894
        %928 = vadd.xlane.f32.xlu0 %v927
        %v929 = vpop.xlane.xlu0 %928
        %v930 = vadd.f32 %v895, %v896
        %931 = vadd.xlane.f32.xlu0 %v930
        %v932 = vpop.xlane.xlu0 %931
        %v933 = vadd.f32 %v897, %v898
        %934 = vadd.xlane.f32.xlu0 %v933
        %v935 = vpop.xlane.xlu0 %934
        %v936 = vadd.f32 %v899, %v900
        %937 = vadd.xlane.f32.xlu0 %v936
        %v938 = vpop.xlane.xlu0 %937
        %v939 = vadd.f32 %v901, %v902
        %940 = vadd.xlane.f32.xlu0 %v939
        %v941 = vpop.xlane.xlu0 %940
        %v942 = vadd.f32 %v903, %v904
        %943 = vadd.xlane.f32.xlu0 %v942
        %v944 = vpop.xlane.xlu0 %943
        %v945 = vadd.f32 %v905, %v906
        %946 = vadd.xlane.f32.xlu0 %v945
        %v947 = vpop.xlane.xlu0 %946
        %v948 = vadd.f32 %v907, %v908
        %949 = vadd.xlane.f32.xlu0 %v948
        %v950 = vpop.xlane.xlu0 %949
        %v951 = vadd.f32 %v909, %v910
        %952 = vadd.xlane.f32.xlu0 %v951
        %v953 = vpop.xlane.xlu0 %952
        %v954 = vadd.f32 %v911, %v912
        %955 = vadd.xlane.f32.xlu0 %v954
        %v956 = vpop.xlane.xlu0 %955
        %v957 = vadd.f32 %v913, %v914
        %958 = vadd.xlane.f32.xlu0 %v957
        %v959 = vpop.xlane.xlu0 %958
        %v960 = vadd.f32 %v915, %v916
        %961 = vadd.xlane.f32.xlu0 %v960
        %v962 = vpop.xlane.xlu0 %961
        %v963 = vadd.f32 %v917, %v918
        %964 = vadd.xlane.f32.xlu0 %v963
        %v965 = vpop.xlane.xlu0 %964
        %v966 = vadd.f32 %v919, %v920
        %967 = vadd.xlane.f32.xlu0 %v966
        %v968 = vpop.xlane.xlu0 %967
        %s969 = scalar_lea.vmem %s373, 128 [#allocation3]
        %v970 = vld [vmem:[%s969] sm:$0xff]
        %v971 = vld [vmem:[%s969 + $0x8] sm:$0xff]
        %v972 = vld [vmem:[%s969 + $0x10] sm:$0xff]
        %v973 = vld [vmem:[%s969 + $0x18] sm:$0xff]
        %v974 = vld [vmem:[%s969 + $0x20] sm:$0xff]
        %v975 = vld [vmem:[%s969 + $0x28] sm:$0xff]
        %v976 = vld [vmem:[%s969 + $0x30] sm:$0xff]
        %v977 = vld [vmem:[%s969 + $0x38] sm:$0xff]
        %v978 = vld [vmem:[%s969 + $0x40] sm:$0xff]
        %v979 = vld [vmem:[%s969 + $0x48] sm:$0xff]
        %v980 = vld [vmem:[%s969 + $0x50] sm:$0xff]
        %v981 = vld [vmem:[%s969 + $0x58] sm:$0xff]
        %v982 = vld [vmem:[%s969 + $0x60] sm:$0xff]
        %v983 = vld [vmem:[%s969 + $0x68] sm:$0xff]
        %v984 = vld [vmem:[%s969 + $0x70] sm:$0xff]
        %v985 = vld [vmem:[%s969 + $0x78] sm:$0xff]
        %v986 = vld [vmem:[#allocation9] sm:$0xff]
        %v987 = vld [vmem:[#allocation9 + $0x8] sm:$0xff]
        %v988 = vld [vmem:[#allocation9 + $0x10] sm:$0xff]
        %v989 = vld [vmem:[#allocation9 + $0x18] sm:$0xff]
        %v990 = vld [vmem:[#allocation9 + $0x20] sm:$0xff]
        %v991 = vld [vmem:[#allocation9 + $0x28] sm:$0xff]
        %v992 = vld [vmem:[#allocation9 + $0x30] sm:$0xff]
        %v993 = vld [vmem:[#allocation9 + $0x38] sm:$0xff]
        %v994 = vld [vmem:[#allocation9 + $0x40] sm:$0xff]
        %v995 = vld [vmem:[#allocation9 + $0x48] sm:$0xff]
        %v996 = vld [vmem:[#allocation9 + $0x50] sm:$0xff]
        %v997 = vld [vmem:[#allocation9 + $0x58] sm:$0xff]
        %v998 = vld [vmem:[#allocation9 + $0x60] sm:$0xff]
        %v999 = vld [vmem:[#allocation9 + $0x68] sm:$0xff]
        %v1000 = vld [vmem:[#allocation9 + $0x70] sm:$0xff]
        %v1001 = vld [vmem:[#allocation9 + $0x78] sm:$0xff]
        %v1002 = vld [vmem:[#allocation9 + $0x80] sm:$0xff]
        %v1003 = vld [vmem:[#allocation9 + $0x88] sm:$0xff]
        %v1004 = vld [vmem:[#allocation9 + $0x90] sm:$0xff]
        %v1005 = vld [vmem:[#allocation9 + $0x98] sm:$0xff]
        %v1006 = vld [vmem:[#allocation9 + $0xa0] sm:$0xff]
        %v1007 = vld [vmem:[#allocation9 + $0xa8] sm:$0xff]
        %v1008 = vld [vmem:[#allocation9 + $0xb0] sm:$0xff]
        %v1009 = vld [vmem:[#allocation9 + $0xb8] sm:$0xff]
        %v1010 = vld [vmem:[#allocation9 + $0xc0] sm:$0xff]
        %v1011 = vld [vmem:[#allocation9 + $0xc8] sm:$0xff]
        %v1012 = vld [vmem:[#allocation9 + $0xd0] sm:$0xff]
        %v1013 = vld [vmem:[#allocation9 + $0xd8] sm:$0xff]
        %v1014 = vld [vmem:[#allocation9 + $0xe0] sm:$0xff]
        %v1015 = vld [vmem:[#allocation9 + $0xe8] sm:$0xff]
        %v1016 = vld [vmem:[#allocation9 + $0xf0] sm:$0xff]
        %v1017 = vld [vmem:[#allocation9 + $0xf8] sm:$0xff]
        %v1018 = vld [vmem:[#allocation11] sm:$0x3]
        %v1020 = vlaneseq
        %v1021 = vshrl.u32 %v1020, 7
        %v1022 = vsub.s32 0, %v1021
        %v1023 = vrot.slane %v1018, %v1022
        %v1024 = vlaneseq
        %v1025 = vshrl.u32 %v1024, 7
        %v1026 = vsub.s32 1, %v1025
        %v1027 = vrot.slane %v1018, %v1026
        %v1046 = vunpack.c.l.b16 %v970
        %v1047 = vunpack.c.h.b16 %v970
        %v1048 = vunpack.c.l.b16 %v971
        %v1049 = vunpack.c.h.b16 %v971
        %v1050 = vunpack.c.l.b16 %v972
        %v1051 = vunpack.c.h.b16 %v972
        %v1052 = vunpack.c.l.b16 %v973
        %v1053 = vunpack.c.h.b16 %v973
        %v1054 = vunpack.c.l.b16 %v974
        %v1055 = vunpack.c.h.b16 %v974
        %v1056 = vunpack.c.l.b16 %v975
        %v1057 = vunpack.c.h.b16 %v975
        %v1058 = vunpack.c.l.b16 %v976
        %v1059 = vunpack.c.h.b16 %v976
        %v1060 = vunpack.c.l.b16 %v977
        %v1061 = vunpack.c.h.b16 %v977
        %v1062 = vunpack.c.l.b16 %v978
        %v1063 = vunpack.c.h.b16 %v978
        %v1064 = vunpack.c.l.b16 %v979
        %v1065 = vunpack.c.h.b16 %v979
        %v1066 = vunpack.c.l.b16 %v980
        %v1067 = vunpack.c.h.b16 %v980
        %v1068 = vunpack.c.l.b16 %v981
        %v1069 = vunpack.c.h.b16 %v981
        %v1070 = vunpack.c.l.b16 %v982
        %v1071 = vunpack.c.h.b16 %v982
        %v1072 = vunpack.c.l.b16 %v983
        %v1073 = vunpack.c.h.b16 %v983
        %v1074 = vunpack.c.l.b16 %v984
        %v1075 = vunpack.c.h.b16 %v984
        %v1076 = vunpack.c.l.b16 %v985
        %v1077 = vunpack.c.h.b16 %v985
        %v1078 = vpack.c.b16 %v1048, %v1046
        %v1079 = vpack.c.b16 %v1049, %v1047
        %v1080 = vpack.c.b16 %v1052, %v1050
        %v1081 = vpack.c.b16 %v1053, %v1051
        %v1082 = vpack.c.b16 %v1056, %v1054
        %v1083 = vpack.c.b16 %v1057, %v1055
        %v1084 = vpack.c.b16 %v1060, %v1058
        %v1085 = vpack.c.b16 %v1061, %v1059
        %v1086 = vpack.c.b16 %v1064, %v1062
        %v1087 = vpack.c.b16 %v1065, %v1063
        %v1088 = vpack.c.b16 %v1068, %v1066
        %v1089 = vpack.c.b16 %v1069, %v1067
        %v1090 = vpack.c.b16 %v1072, %v1070
        %v1091 = vpack.c.b16 %v1073, %v1071
        %v1092 = vpack.c.b16 %v1076, %v1074
        %v1093 = vpack.c.b16 %v1077, %v1075
        %v1142 = vunpack.c.l.b16 %v986
        %v1143 = vunpack.c.h.b16 %v986
        %v1144 = vunpack.c.l.b16 %v987
        %v1145 = vunpack.c.h.b16 %v987
        %v1146 = vunpack.c.l.b16 %v988
        %v1147 = vunpack.c.h.b16 %v988
        %v1148 = vunpack.c.l.b16 %v989
        %v1149 = vunpack.c.h.b16 %v989
        %v1150 = vunpack.c.l.b16 %v990
        %v1151 = vunpack.c.h.b16 %v990
        %v1152 = vunpack.c.l.b16 %v991
        %v1153 = vunpack.c.h.b16 %v991
        %v1154 = vunpack.c.l.b16 %v992
        %v1155 = vunpack.c.h.b16 %v992
        %v1156 = vunpack.c.l.b16 %v993
        %v1157 = vunpack.c.h.b16 %v993
        %v1158 = vunpack.c.l.b16 %v994
        %v1159 = vunpack.c.h.b16 %v994
        %v1160 = vunpack.c.l.b16 %v995
        %v1161 = vunpack.c.h.b16 %v995
        %v1162 = vunpack.c.l.b16 %v996
        %v1163 = vunpack.c.h.b16 %v996
        %v1164 = vunpack.c.l.b16 %v997
        %v1165 = vunpack.c.h.b16 %v997
        %v1166 = vunpack.c.l.b16 %v998
        %v1167 = vunpack.c.h.b16 %v998
        %v1168 = vunpack.c.l.b16 %v999
        %v1169 = vunpack.c.h.b16 %v999
        %v1170 = vunpack.c.l.b16 %v1000
        %v1171 = vunpack.c.h.b16 %v1000
        %v1172 = vunpack.c.l.b16 %v1001
        %v1173 = vunpack.c.h.b16 %v1001
        %v1174 = vunpack.c.l.b16 %v1002
        %v1175 = vunpack.c.h.b16 %v1002
        %v1176 = vunpack.c.l.b16 %v1003
        %v1177 = vunpack.c.h.b16 %v1003
        %v1178 = vunpack.c.l.b16 %v1004
        %v1179 = vunpack.c.h.b16 %v1004
        %v1180 = vunpack.c.l.b16 %v1005
        %v1181 = vunpack.c.h.b16 %v1005
        %v1182 = vunpack.c.l.b16 %v1006
        %v1183 = vunpack.c.h.b16 %v1006
        %v1184 = vunpack.c.l.b16 %v1007
        %v1185 = vunpack.c.h.b16 %v1007
        %v1186 = vunpack.c.l.b16 %v1008
        %v1187 = vunpack.c.h.b16 %v1008
        %v1188 = vunpack.c.l.b16 %v1009
        %v1189 = vunpack.c.h.b16 %v1009
        %v1190 = vunpack.c.l.b16 %v1010
        %v1191 = vunpack.c.h.b16 %v1010
        %v1192 = vunpack.c.l.b16 %v1011
        %v1193 = vunpack.c.h.b16 %v1011
        %v1194 = vunpack.c.l.b16 %v1012
        %v1195 = vunpack.c.h.b16 %v1012
        %v1196 = vunpack.c.l.b16 %v1013
        %v1197 = vunpack.c.h.b16 %v1013
        %v1198 = vunpack.c.l.b16 %v1014
        %v1199 = vunpack.c.h.b16 %v1014
        %v1200 = vunpack.c.l.b16 %v1015
        %v1201 = vunpack.c.h.b16 %v1015
        %v1202 = vunpack.c.l.b16 %v1016
        %v1203 = vunpack.c.h.b16 %v1016
        %v1204 = vunpack.c.l.b16 %v1017
        %v1205 = vunpack.c.h.b16 %v1017
        %v1206 = vpack.c.b16 %v1144, %v1142
        %v1207 = vpack.c.b16 %v1145, %v1143
        %v1208 = vpack.c.b16 %v1148, %v1146
        %v1209 = vpack.c.b16 %v1149, %v1147
        %v1210 = vpack.c.b16 %v1152, %v1150
        %v1211 = vpack.c.b16 %v1153, %v1151
        %v1212 = vpack.c.b16 %v1156, %v1154
        %v1213 = vpack.c.b16 %v1157, %v1155
        %v1214 = vpack.c.b16 %v1160, %v1158
        %v1215 = vpack.c.b16 %v1161, %v1159
        %v1216 = vpack.c.b16 %v1164, %v1162
        %v1217 = vpack.c.b16 %v1165, %v1163
        %v1218 = vpack.c.b16 %v1168, %v1166
        %v1219 = vpack.c.b16 %v1169, %v1167
        %v1220 = vpack.c.b16 %v1172, %v1170
        %v1221 = vpack.c.b16 %v1173, %v1171
        %v1222 = vpack.c.b16 %v1176, %v1174
        %v1223 = vpack.c.b16 %v1177, %v1175
        %v1224 = vpack.c.b16 %v1180, %v1178
        %v1225 = vpack.c.b16 %v1181, %v1179
        %v1226 = vpack.c.b16 %v1184, %v1182
        %v1227 = vpack.c.b16 %v1185, %v1183
        %v1228 = vpack.c.b16 %v1188, %v1186
        %v1229 = vpack.c.b16 %v1189, %v1187
        %v1230 = vpack.c.b16 %v1192, %v1190
        %v1231 = vpack.c.b16 %v1193, %v1191
        %v1232 = vpack.c.b16 %v1196, %v1194
        %v1233 = vpack.c.b16 %v1197, %v1195
        %v1234 = vpack.c.b16 %v1200, %v1198
        %v1235 = vpack.c.b16 %v1201, %v1199
        %v1236 = vpack.c.b16 %v1204, %v1202
        %v1237 = vpack.c.b16 %v1205, %v1203
        %1270 = vmatprep.subr.bf16.mxu0 %v1207
        %1271 = vmatpush1.bf16.msra.mxu0 %v1206
        %1272 = vmatprep.subr.bf16.mxu0 %v1209
        %1273 = vmatpush1.bf16.msra.mxu0 %v1208
        %1274 = vmatprep.subr.bf16.mxu0 %v1211
        %1275 = vmatpush1.bf16.msra.mxu0 %v1210
        %1276 = vmatprep.subr.bf16.mxu0 %v1213
        %1277 = vmatpush1.bf16.msra.mxu0 %v1212
        %1278 = vmatprep.subr.bf16.mxu0 %v1215
        %1279 = vmatpush1.bf16.msra.mxu0 %v1214
        %1280 = vmatprep.subr.bf16.mxu0 %v1217
        %1281 = vmatpush1.bf16.msra.mxu0 %v1216
        %1282 = vmatprep.subr.bf16.mxu0 %v1219
        %1283 = vmatpush1.bf16.msra.mxu0 %v1218
        %1284 = vmatprep.subr.bf16.mxu0 %v1221
        %1285 = vmatpush1.bf16.msra.mxu0 %v1220
        %1286 = vmatprep.subr.bf16.mxu0 %v1223
        %1287 = vmatpush1.bf16.msra.mxu0 %v1222
        %1288 = vmatprep.subr.bf16.mxu0 %v1225
        %1289 = vmatpush1.bf16.msra.mxu0 %v1224
        %1290 = vmatprep.subr.bf16.mxu0 %v1227
        %1291 = vmatpush1.bf16.msra.mxu0 %v1226
        %1292 = vmatprep.subr.bf16.mxu0 %v1229
        %1293 = vmatpush1.bf16.msra.mxu0 %v1228
        %1294 = vmatprep.subr.bf16.mxu0 %v1231
        %1295 = vmatpush1.bf16.msra.mxu0 %v1230
        %1296 = vmatprep.subr.bf16.mxu0 %v1233
        %1297 = vmatpush1.bf16.msra.mxu0 %v1232
        %1298 = vmatprep.subr.bf16.mxu0 %v1235
        %1299 = vmatpush1.bf16.msra.mxu0 %v1234
        %1300 = vmatprep.subr.bf16.mxu0 %v1237
        %1301 = vmatpush1.bf16.msra.mxu0 %v1236
        %1302 = vmatprep.mubr.bf16.mxu0 %v1079
        %1303 = vmatmul.mubr.bf16.gmra.mrb[0].mxu0 %v1078
        %v1304 = vpop.f32.mrb[0].mxu0
        %v1305 = vadd.f32 %v1023, %v1304
        %v1306 = vpop.f32.mrb[0].mxu0
        %v1307 = vadd.f32 %v1027, %v1306
        %v1308 = vpop.f32.mrb[0].mxu0
        %v1309 = vadd.f32 %v1023, %v1308
        %v1310 = vpop.f32.mrb[0].mxu0
        %v1311 = vadd.f32 %v1027, %v1310
        %1312 = vmatprep.mubr.bf16.mxu0 %v1081
        %1313 = vmatmul.mubr.bf16.gmra.mrb[0].mxu0 %v1080
        %v1314 = vpop.f32.mrb[0].mxu0
        %v1315 = vadd.f32 %v1023, %v1314
        %v1316 = vpop.f32.mrb[0].mxu0
        %v1317 = vadd.f32 %v1027, %v1316
        %v1318 = vpop.f32.mrb[0].mxu0
        %v1319 = vadd.f32 %v1023, %v1318
        %v1320 = vpop.f32.mrb[0].mxu0
        %v1321 = vadd.f32 %v1027, %v1320
        %1322 = vmatprep.mubr.bf16.mxu0 %v1083
        %1323 = vmatmul.mubr.bf16.gmra.mrb[0].mxu0 %v1082
        %v1324 = vpop.f32.mrb[0].mxu0
        %v1325 = vadd.f32 %v1023, %v1324
        %v1326 = vpop.f32.mrb[0].mxu0
        %v1327 = vadd.f32 %v1027, %v1326
        %v1328 = vpop.f32.mrb[0].mxu0
        %v1329 = vadd.f32 %v1023, %v1328
        %v1330 = vpop.f32.mrb[0].mxu0
        %v1331 = vadd.f32 %v1027, %v1330
        %1332 = vmatprep.mubr.bf16.mxu0 %v1085
        %1333 = vmatmul.mubr.bf16.gmra.mrb[0].mxu0 %v1084
        %v1334 = vpop.f32.mrb[0].mxu0
        %v1335 = vadd.f32 %v1023, %v1334
        %v1336 = vpop.f32.mrb[0].mxu0
        %v1337 = vadd.f32 %v1027, %v1336
        %v1338 = vpop.f32.mrb[0].mxu0
        %v1339 = vadd.f32 %v1023, %v1338
        %v1340 = vpop.f32.mrb[0].mxu0
        %v1341 = vadd.f32 %v1027, %v1340
        %1342 = vmatprep.mubr.bf16.mxu0 %v1087
        %1343 = vmatmul.mubr.bf16.gmra.mrb[0].mxu0 %v1086
        %v1344 = vpop.f32.mrb[0].mxu0
        %v1345 = vadd.f32 %v1023, %v1344
        %v1346 = vpop.f32.mrb[0].mxu0
        %v1347 = vadd.f32 %v1027, %v1346
        %v1348 = vpop.f32.mrb[0].mxu0
        %v1349 = vadd.f32 %v1023, %v1348
        %v1350 = vpop.f32.mrb[0].mxu0
        %v1351 = vadd.f32 %v1027, %v1350
        %1352 = vmatprep.mubr.bf16.mxu0 %v1089
        %1353 = vmatmul.mubr.bf16.gmra.mrb[0].mxu0 %v1088
        %v1354 = vpop.f32.mrb[0].mxu0
        %v1355 = vadd.f32 %v1023, %v1354
        %v1356 = vpop.f32.mrb[0].mxu0
        %v1357 = vadd.f32 %v1027, %v1356
        %v1358 = vpop.f32.mrb[0].mxu0
        %v1359 = vadd.f32 %v1023, %v1358
        %v1360 = vpop.f32.mrb[0].mxu0
        %v1361 = vadd.f32 %v1027, %v1360
        %1362 = vmatprep.mubr.bf16.mxu0 %v1091
        %1363 = vmatmul.mubr.bf16.gmra.mrb[0].mxu0 %v1090
        %v1364 = vpop.f32.mrb[0].mxu0
        %v1365 = vadd.f32 %v1023, %v1364
        %v1366 = vpop.f32.mrb[0].mxu0
        %v1367 = vadd.f32 %v1027, %v1366
        %v1368 = vpop.f32.mrb[0].mxu0
        %v1369 = vadd.f32 %v1023, %v1368
        %v1370 = vpop.f32.mrb[0].mxu0
        %v1371 = vadd.f32 %v1027, %v1370
        %1372 = vmatprep.mubr.bf16.mxu0 %v1093
        %1373 = vmatmul.mubr.bf16.gmra.mrb[0].mxu0 %v1092
        %v1374 = vpop.f32.mrb[0].mxu0
        %v1375 = vadd.f32 %v1023, %v1374
        %v1376 = vpop.f32.mrb[0].mxu0
        %v1377 = vadd.f32 %v1027, %v1376
        %v1378 = vpop.f32.mrb[0].mxu0
        %v1379 = vadd.f32 %v1023, %v1378
        %v1380 = vpop.f32.mrb[0].mxu0
        %v1381 = vadd.f32 %v1027, %v1380
        %1382 = vdwg.mxu0
        %v1383 = vmax.f32 %v1305, 0.0
        %v1384 = vmax.f32 %v1307, 0.0
        %v1385 = vmax.f32 %v1309, 0.0
        %v1386 = vmax.f32 %v1311, 0.0
        %v1387 = vmax.f32 %v1315, 0.0
        %v1388 = vmax.f32 %v1317, 0.0
        %v1389 = vmax.f32 %v1319, 0.0
        %v1390 = vmax.f32 %v1321, 0.0
        %v1391 = vmax.f32 %v1325, 0.0
        %v1392 = vmax.f32 %v1327, 0.0
        %v1393 = vmax.f32 %v1329, 0.0
        %v1394 = vmax.f32 %v1331, 0.0
        %v1395 = vmax.f32 %v1335, 0.0
        %v1396 = vmax.f32 %v1337, 0.0
        %v1397 = vmax.f32 %v1339, 0.0
        %v1398 = vmax.f32 %v1341, 0.0
        %v1399 = vmax.f32 %v1345, 0.0
        %v1400 = vmax.f32 %v1347, 0.0
        %v1401 = vmax.f32 %v1349, 0.0
        %v1402 = vmax.f32 %v1351, 0.0
        %v1403 = vmax.f32 %v1355, 0.0
        %v1404 = vmax.f32 %v1357, 0.0
        %v1405 = vmax.f32 %v1359, 0.0
        %v1406 = vmax.f32 %v1361, 0.0
        %v1407 = vmax.f32 %v1365, 0.0
        %v1408 = vmax.f32 %v1367, 0.0
        %v1409 = vmax.f32 %v1369, 0.0
        %v1410 = vmax.f32 %v1371, 0.0
        %v1411 = vmax.f32 %v1375, 0.0
        %v1412 = vmax.f32 %v1377, 0.0
        %v1413 = vmax.f32 %v1379, 0.0
        %v1414 = vmax.f32 %v1381, 0.0
        %v1415 = vld [vmem:[#allocation14] sm:$0x3]
        %v1417 = vlaneseq
        %v1418 = vshrl.u32 %v1417, 7
        %v1419 = vsub.s32 0, %v1418
        %v1420 = vrot.slane %v1415, %v1419
        %v1421 = vlaneseq
        %v1422 = vshrl.u32 %v1421, 7
        %v1423 = vsub.s32 1, %v1422
        %v1424 = vrot.slane %v1415, %v1423
        %v1427 = vmul.f32 %v1383, %v1420
        %v1428 = vmul.f32 %v1384, %v1424
        %v1429 = vmul.f32 %v1385, %v1420
        %v1430 = vmul.f32 %v1386, %v1424
        %v1431 = vmul.f32 %v1387, %v1420
        %v1432 = vmul.f32 %v1388, %v1424
        %v1433 = vmul.f32 %v1389, %v1420
        %v1434 = vmul.f32 %v1390, %v1424
        %v1435 = vmul.f32 %v1391, %v1420
        %v1436 = vmul.f32 %v1392, %v1424
        %v1437 = vmul.f32 %v1393, %v1420
        %v1438 = vmul.f32 %v1394, %v1424
        %v1439 = vmul.f32 %v1395, %v1420
        %v1440 = vmul.f32 %v1396, %v1424
        %v1441 = vmul.f32 %v1397, %v1420
        %v1442 = vmul.f32 %v1398, %v1424
        %v1443 = vmul.f32 %v1399, %v1420
        %v1444 = vmul.f32 %v1400, %v1424
        %v1445 = vmul.f32 %v1401, %v1420
        %v1446 = vmul.f32 %v1402, %v1424
        %v1447 = vmul.f32 %v1403, %v1420
        %v1448 = vmul.f32 %v1404, %v1424
        %v1449 = vmul.f32 %v1405, %v1420
        %v1450 = vmul.f32 %v1406, %v1424
        %v1451 = vmul.f32 %v1407, %v1420
        %v1452 = vmul.f32 %v1408, %v1424
        %v1453 = vmul.f32 %v1409, %v1420
        %v1454 = vmul.f32 %v1410, %v1424
        %v1455 = vmul.f32 %v1411, %v1420
        %v1456 = vmul.f32 %v1412, %v1424
        %v1457 = vmul.f32 %v1413, %v1420
        %v1458 = vmul.f32 %v1414, %v1424
        %v1459 = vadd.f32 %v1427, %v1428
        %1460 = vadd.xlane.f32.xlu0 %v1459
        %v1461 = vpop.xlane.xlu0 %1460
        %v1462 = vadd.f32 %v1429, %v1430
        %1463 = vadd.xlane.f32.xlu0 %v1462
        %v1464 = vpop.xlane.xlu0 %1463
        %v1465 = vadd.f32 %v1431, %v1432
        %1466 = vadd.xlane.f32.xlu0 %v1465
        %v1467 = vpop.xlane.xlu0 %1466
        %v1468 = vadd.f32 %v1433, %v1434
        %1469 = vadd.xlane.f32.xlu0 %v1468
        %v1470 = vpop.xlane.xlu0 %1469
        %v1471 = vadd.f32 %v1435, %v1436
        %1472 = vadd.xlane.f32.xlu0 %v1471
        %v1473 = vpop.xlane.xlu0 %1472
        %v1474 = vadd.f32 %v1437, %v1438
        %1475 = vadd.xlane.f32.xlu0 %v1474
        %v1476 = vpop.xlane.xlu0 %1475
        %v1477 = vadd.f32 %v1439, %v1440
        %1478 = vadd.xlane.f32.xlu0 %v1477
        %v1479 = vpop.xlane.xlu0 %1478
        %v1480 = vadd.f32 %v1441, %v1442
        %1481 = vadd.xlane.f32.xlu0 %v1480
        %v1482 = vpop.xlane.xlu0 %1481
        %v1483 = vadd.f32 %v1443, %v1444
        %1484 = vadd.xlane.f32.xlu0 %v1483
        %v1485 = vpop.xlane.xlu0 %1484
        %v1486 = vadd.f32 %v1445, %v1446
        %1487 = vadd.xlane.f32.xlu0 %v1486
        %v1488 = vpop.xlane.xlu0 %1487
        %v1489 = vadd.f32 %v1447, %v1448
        %1490 = vadd.xlane.f32.xlu0 %v1489
        %v1491 = vpop.xlane.xlu0 %1490
        %v1492 = vadd.f32 %v1449, %v1450
        %1493 = vadd.xlane.f32.xlu0 %v1492
        %v1494 = vpop.xlane.xlu0 %1493
        %v1495 = vadd.f32 %v1451, %v1452
        %1496 = vadd.xlane.f32.xlu0 %v1495
        %v1497 = vpop.xlane.xlu0 %1496
        %v1498 = vadd.f32 %v1453, %v1454
        %1499 = vadd.xlane.f32.xlu0 %v1498
        %v1500 = vpop.xlane.xlu0 %1499
        %v1501 = vadd.f32 %v1455, %v1456
        %1502 = vadd.xlane.f32.xlu0 %v1501
        %v1503 = vpop.xlane.xlu0 %1502
        %v1504 = vadd.f32 %v1457, %v1458
        %1505 = vadd.xlane.f32.xlu0 %v1504
        %v1506 = vpop.xlane.xlu0 %1505
        %v1507 = vadd.f32 %v923, %v1461
        %v1508 = vadd.f32 %v926, %v1464
        %v1509 = vadd.f32 %v929, %v1467
        %v1510 = vadd.f32 %v932, %v1470
        %v1511 = vadd.f32 %v935, %v1473
        %v1512 = vadd.f32 %v938, %v1476
        %v1513 = vadd.f32 %v941, %v1479
        %v1514 = vadd.f32 %v944, %v1482
        %v1515 = vadd.f32 %v947, %v1485
        %v1516 = vadd.f32 %v950, %v1488
        %v1517 = vadd.f32 %v953, %v1491
        %v1518 = vadd.f32 %v956, %v1494
        %v1519 = vadd.f32 %v959, %v1497
        %v1520 = vadd.f32 %v962, %v1500
        %v1521 = vadd.f32 %v965, %v1503
        %v1522 = vadd.f32 %v968, %v1506
        %s1523 = sld [smem:[#allocation2]]
        %v1524 = vstv %s1523
        %v1525 = vadd.f32 %v1507, %v1524
        %v1526 = vadd.f32 %v1508, %v1524
        %v1527 = vadd.f32 %v1509, %v1524
        %v1528 = vadd.f32 %v1510, %v1524
        %v1529 = vadd.f32 %v1511, %v1524
        %v1530 = vadd.f32 %v1512, %v1524
        %v1531 = vadd.f32 %v1513, %v1524
        %v1532 = vadd.f32 %v1514, %v1524
        %v1533 = vadd.f32 %v1515, %v1524
        %v1534 = vadd.f32 %v1516, %v1524
        %v1535 = vadd.f32 %v1517, %v1524
        %v1536 = vadd.f32 %v1518, %v1524
        %v1537 = vadd.f32 %v1519, %v1524
        %v1538 = vadd.f32 %v1520, %v1524
        %v1539 = vadd.f32 %v1521, %v1524
        %v1540 = vadd.f32 %v1522, %v1524
        %v1541 = vmax.f32 %v1525, 0.0
        %v1542 = vmax.f32 %v1526, 0.0
        %v1543 = vmax.f32 %v1527, 0.0
        %v1544 = vmax.f32 %v1528, 0.0
        %v1545 = vmax.f32 %v1529, 0.0
        %v1546 = vmax.f32 %v1530, 0.0
        %v1547 = vmax.f32 %v1531, 0.0
        %v1548 = vmax.f32 %v1532, 0.0
        %v1549 = vmax.f32 %v1533, 0.0
        %v1550 = vmax.f32 %v1534, 0.0
        %v1551 = vmax.f32 %v1535, 0.0
        %v1552 = vmax.f32 %v1536, 0.0
        %v1553 = vmax.f32 %v1537, 0.0
        %v1554 = vmax.f32 %v1538, 0.0
        %v1555 = vmax.f32 %v1539, 0.0
        %v1556 = vmax.f32 %v1540, 0.0
        %vm1557 = vcmask 7168
        %1558 = vst.msk [vmem:[%s429] sm:$0xff] %vm1557, %v1541
        %1559 = vst.msk [vmem:[%s429 + $0x8] sm:$0xff] %vm1557, %v1542
        %1560 = vst.msk [vmem:[%s429 + $0x10] sm:$0xff] %vm1557, %v1543
        %1561 = vst.msk [vmem:[%s429 + $0x18] sm:$0xff] %vm1557, %v1544
        %1562 = vst.msk [vmem:[%s429 + $0x20] sm:$0xff] %vm1557, %v1545
        %1563 = vst.msk [vmem:[%s429 + $0x28] sm:$0xff] %vm1557, %v1546
        %1564 = vst.msk [vmem:[%s429 + $0x30] sm:$0xff] %vm1557, %v1547
        %1565 = vst.msk [vmem:[%s429 + $0x38] sm:$0xff] %vm1557, %v1548
        %1566 = vst.msk [vmem:[%s429 + $0x40] sm:$0xff] %vm1557, %v1549
        %1567 = vst.msk [vmem:[%s429 + $0x48] sm:$0xff] %vm1557, %v1550
        %1568 = vst.msk [vmem:[%s429 + $0x50] sm:$0xff] %vm1557, %v1551
        %1569 = vst.msk [vmem:[%s429 + $0x58] sm:$0xff] %vm1557, %v1552
        %1570 = vst.msk [vmem:[%s429 + $0x60] sm:$0xff] %vm1557, %v1553
        %1571 = vst.msk [vmem:[%s429 + $0x68] sm:$0xff] %vm1557, %v1554
        %1572 = vst.msk [vmem:[%s429 + $0x70] sm:$0xff] %vm1557, %v1555
        %1573 = vst.msk [vmem:[%s429 + $0x78] sm:$0xff] %vm1557, %v1556
        %s1574 = sand.u32 %s210, 1
        %s1575 = scalar_lea.sflag [#allocation5], %s1574
        %s1576 = sand.u32 %s210, 1
        %s1577 = smul.addr %s1576, 128
        %s1578 = scalar_lea.vmem [#allocation15], %s1577
        // Predicated region
        $region81: #{tpu_custom_call.1} parent=51 // pred_check
          %p1579 = pneg %p220
        $region82: #{tpu_custom_call.1} parent=51 // pred_check_branch
          %1581 = sbr.rel (%p1579) target = $region84
        $region83: #{tpu_custom_call.1} parent=51 // pred_region
          %s1582 = smul.u32 16, %s29
          %s1584 = ssub.s32 2048, 2048
          %1585 = vsyncadd %s1575, %s1584
          %s1586 = smul.addr %s1582, 128
          %s1587 = scalar_lea.hbm %s8, %s1586
          %s1588 = sshll.u32 %s1578, 4
          %s1589 = int_to_ptr.vmem [resolvable:$true] %s1588
          %1594 = dma.vmem_to_hbm [thread:$0]  %s1589, 2048, %s1587, %s1575, 128, 128, 8
        $region84: #{tpu_custom_call.1} parent=51 // pred_fallthru
          _
      $region52: #{tpu_custom_call.1} parent=5 // pred_fallthru
        _
      %p1595 = scmp.le.s32.totalorder 2, %s24
      // Predicated region
      $region85: #{tpu_custom_call.1} parent=5 // pred_check
        %p1596 = pneg %p1595
      $region86: #{tpu_custom_call.1} parent=5 // pred_check_branch
        %1598 = sbr.rel (%p1596) target = $region88
      $region87: #{tpu_custom_call.1} parent=5 // pred_region
        %s1599 = ssub.s32 %s24, 2
        // Predicated region
        $region89: #{tpu_custom_call.1} parent=87 // pred_check
          %p1600 = pneg %p226
        $region90: #{tpu_custom_call.1} parent=87 // pred_check_branch
          %1602 = sbr.rel (%p1600) target = $region92
        $region91: #{tpu_custom_call.1} parent=87 // pred_region
          %s1603 = sand.u32 %s211, 1
          %s1604 = scalar_lea.sflag [#allocation5], %s1603
          %s1605 = sand.u32 %s211, 1
          %s1606 = smul.addr %s1605, 128
          %s1607 = scalar_lea.vmem [#allocation15], %s1606
          %1608 = dma.done %s1604, 2048
        $region92: #{tpu_custom_call.1} parent=87 // pred_fallthru
          _
      $region88: #{tpu_custom_call.1} parent=5 // pred_fallthru
        _
    $region6: #{tpu_custom_call.1} parent=1 // loop_footer
      %s28 = sadd.s32 1, %s24
    $region7: #{tpu_custom_call.1} parent=1 // loop_footer_branch
      %23 = sbr.rel target = $region3
    $region8: #{tpu_custom_call.1} parent=1 // loop_exit
      _
    %1609 = vsyncpa [#allocation4], 1
    %s1610 = scalar_lea.sflag [#allocation4], 1
    %1611 = vsyncpa %s1610, 1
    %1612 = vsyncpa [#allocation7], 1
    %1613 = vsyncpa [#allocation10], 1
    %1614 = vsyncpa [#allocation13], 1
    %1615 = vsyncpa [#allocation5], 1
    %s1616 = scalar_lea.sflag [#allocation5], 1
    %1617 = vsyncpa %s1616, 1

</llo_original>
